<compile_context>
chip_gen: v6e
topology: v6e:2x2x1
jax: 0.10.0
libtpu: 0.0.40
codegen_flags: <defaults>
</compile_context>

<pallas_src>
import functools

import jax
import jax.numpy as jnp
from jax import lax
from jax.experimental import pallas as pl
from jax.experimental.pallas import tpu as pltpu


def _round_up(v, m):
    return ((v + m - 1) // m) * m


def _conv_tile(a_ref, b_ref, w_ref, slab_ref, *, tm, wp):
    """3x3 conv for one tile of TM output rows (padded-flat row layout).

    a_ref:    [TM, C_in]            bf16  xf rows [t*TM, (t+1)*TM)
    b_ref:    [HALO_PAD, C_in]      bf16  xf rows [(t+1)*TM, (t+1)*TM + HALO_PAD)
    w_ref:    [9*C_in, C_PAD]       bf16  tap-major packed weights
    slab_ref: [TM + HALO_PAD, C_in] f32   VMEM scratch
    returns   [TM, C_PAD] f32
    """
    halo_pad = b_ref.shape[0]
    # Assemble the halo'd slab with two aligned full-block stores (f32 slab keeps
    # the later sublane-offset slices free of sub-32-bit packing complications).
    slab_ref[0:tm, :] = a_ref[...].astype(jnp.float32)
    slab_ref[tm:tm + halo_pad, :] = b_ref[...].astype(jnp.float32)
    # Pack the 9 taps along the contraction axis -> ONE MXU matmul with
    # K = 9*C_in instead of nine K=C_in matmuls + eight [TM, C_PAD] f32 adds.
    taps = [slab_ref[dh * wp + dw: dh * wp + dw + tm, :]
            for dh in range(3) for dw in range(3)]
    lhs = jnp.concatenate(taps, axis=1).astype(jnp.bfloat16)      # [TM, 9*C_in]
    return jnp.dot(lhs, w_ref[...], preferred_element_type=jnp.float32)


def _stats_kernel(a_ref, b_ref, w_ref, mask_ref, part_ref, slab_ref, *, tm, wp):
    y = _conv_tile(a_ref, b_ref, w_ref, slab_ref, tm=tm, wp=wp)
    mask = mask_ref[...]                              # [TM, 1]: 1.0 on real output pixels
    ym = y * mask
    s1 = jnp.sum(ym, axis=0, keepdims=True)           # [1, C_PAD]  sum(y)
    s2 = jnp.sum(ym * y, axis=0, keepdims=True)        # [1, C_PAD]  sum(y^2)
    part_ref[...] = jnp.concatenate([s1, s2], axis=0)[None]


def _apply_kernel(a_ref, b_ref, w_ref, shift_ref, o_ref, slab_ref, *, tm, wp):
    # BN scale is pre-folded into w_ref, so the epilogue is a single add + ReLU.
    y = _conv_tile(a_ref, b_ref, w_ref, slab_ref, tm=tm, wp=wp)
    o_ref[...] = jnp.maximum(y + shift_ref[...], 0.0).astype(o_ref.dtype)


def conv_block_forward(x, conv_w, conv_b, gamma, beta, *, eps=1e-5, tm=1024):
    """x: [N, C_in, H, W] (NCHW). Returns [N, C_out, H, W] (NCHW), f32."""
    del conv_b  # exactly cancelled by training-mode BN: (y+b) - mean(y+b) == y - mean(y)
    n, c_in, h, w = x.shape
    c_out = conv_w.shape[0]
    assert conv_w.shape == (c_out, c_in, 3, 3), "module defaults: 3x3, stride 1, pad 1"

    hp, wp = h + 2, w + 2
    halo = 2 * wp + 2                     # 3x3 taps span flat offsets [0, 2*wp+2]
    halo_pad = _round_up(halo, 8)         # sublane-aligned halo block
    c_pad = _round_up(c_out, 128)         # lane-dense output channels

    mp = n * hp * wp                      # output rows in padded-flat coordinates
    # Row tile: multiple of halo_pad (exact halo-block indexing + (8,128) tiling),
    # large enough to amortize the ~0.35us grid-step overhead, but clamped so tiny
    # problems still split into >= 2 useful tiles for the megacore axis.
    tm_req = max(tm, halo_pad)
    tm = _round_up(min(tm_req, max(halo_pad, pl.cdiv(mp, 2))), halo_pad)
    t_tiles = _round_up(pl.cdiv(mp, tm), 2)   # even -> splits across 2 TCs on v7x
    out_rows = t_tiles * tm
    xf_rows = out_rows + tm                   # spare rows so halo blocks stay in range
    front = wp + 1                            # xf row j  <->  padded-flat row (j - front)

    # --- XLA-side layout prep: single pass over the input, no HBM im2col ---
    x_nhwc = jnp.transpose(x, (0, 2, 3, 1)).astype(jnp.float32)
    x_pad = jnp.pad(x_nhwc, ((0, 0), (1, 1), (1, 1), (0, 0)))
    xf = jnp.pad(x_pad.reshape(mp, c_in),
                 ((front, xf_rows - front - mp), (0, 0))).astype(jnp.bfloat16)

    # Tap-major packed weights [9*C_in, C_PAD]: conv becomes ONE matmul per tile.
    wk = jnp.transpose(conv_w.astype(jnp.float32), (2, 3, 1, 0)).reshape(9 * c_in, c_out)
    wk = jnp.pad(wk, ((0, 0), (0, c_pad - c_out)))
    wk1 = wk.astype(jnp.bfloat16)

    # Validity mask over padded-flat output rows (only real pixels enter BN stats).
    mask = jnp.zeros((n, hp, wp), jnp.float32).at[:, 1:h + 1, 1:w + 1].set(1.0)
    mask = jnp.pad(mask.reshape(mp, 1), ((0, out_rows - mp), (0, 0)))

    a_spec = pl.BlockSpec((tm, c_in), lambda t: (t, 0))
    # Halo block: only halo_pad rows (not a full TM neighbour block) -> xf is read
    # ~1x per pass instead of ~2x, and halo double-buffer VMEM is tiny.
    b_spec = pl.BlockSpec((halo_pad, c_in), lambda t: ((t + 1) * (tm // halo_pad), 0))
    w_spec = pl.BlockSpec((9 * c_in, c_pad), lambda t: (0, 0))   # resident weights
    cparams = pltpu.CompilerParams(
        dimension_semantics=("parallel",),      # row tiles split across TCs on v7x
        vmem_limit_bytes=32 * 1024 * 1024,      # comfortably under v7x's 64 MiB VMEM
    )
    scratch = [pltpu.VMEM((tm + halo_pad, c_in), jnp.float32)]

    # --- pass 1: conv + per-tile sum / sum-of-squares (y never leaves VMEM) ---
    partials = pl.pallas_call(
        functools.partial(_stats_kernel, tm=tm, wp=wp),
        out_shape=jax.ShapeDtypeStruct((t_tiles, 2, c_pad), jnp.float32),
        grid=(t_tiles,),
        in_specs=[a_spec, b_spec, w_spec, pl.BlockSpec((tm, 1), lambda t: (t, 0))],
        out_specs=pl.BlockSpec((1, 2, c_pad), lambda t: (t, 0, 0)),
        scratch_shapes=scratch,
        compiler_params=cparams,
    )(xf, xf, wk1, mask)

    # --- tiny XLA reduction: fold BN (training-mode batch stats) into the weights ---
    # NOTE: var = E[y^2] - E[y]^2 in f32 with a non-negativity guard; adequate here.
    # TODO(synk): switch to Welford-style (count, mean, M2) partial merging if
    # |mean| >> std becomes a concern for very deep/shifted activations.
    sums = jnp.sum(partials, axis=0)                         # [2, C_PAD]
    count = float(n * h * w)
    mean = sums[0] / count
    var = jnp.maximum(sums[1] / count - mean * mean, 0.0)
    gamma_p = jnp.pad(gamma.astype(jnp.float32), (0, c_pad - c_out))
    beta_p = jnp.pad(beta.astype(jnp.float32), (0, c_pad - c_out))
    scale = gamma_p * lax.rsqrt(var + eps)
    shift = (beta_p - mean * scale)[None, :]                 # [1, C_PAD]
    wk2 = (wk * scale[None, :]).astype(jnp.bfloat16)         # scale folded into weights

    # --- pass 2: recompute conv tile (cheap at C_in=4), fused add + ReLU,
    #             lane-dense (unmasked) stores of the padded-channel slab ---
    y_out = pl.pallas_call(
        functools.partial(_apply_kernel, tm=tm, wp=wp),
        out_shape=jax.ShapeDtypeStruct((out_rows, c_pad), jnp.float32),
        grid=(t_tiles,),
        in_specs=[a_spec, b_spec, w_spec, pl.BlockSpec((1, c_pad), lambda t: (0, 0))],
        out_specs=pl.BlockSpec((tm, c_pad), lambda t: (t, 0)),
        scratch_shapes=scratch,
        compiler_params=cparams,
    )(xf, xf, wk2, shift)

    # padded-flat [out_rows, C_PAD] -> NCHW (drop border rows / padded channels).
    # TODO(synk): a channels-last consumer could take y_out (ideally in bf16)
    # directly and skip this slice + transpose round-trip of the output.
    y = y_out[:mp].reshape(n, hp, wp, c_pad)[:, 1:h + 1, 1:w + 1, :c_out]
    return jnp.transpose(y, (0, 3, 1, 2))


def _reference(x, conv_w, conv_b, gamma, beta, eps=1e-5):
    y = lax.conv_general_dilated(
        x, conv_w, window_strides=(1, 1), padding=((1, 1), (1, 1)),
        dimension_numbers=("NCHW", "OIHW", "NCHW"))
    y = y + conv_b[None, :, None, None]
    mean = jnp.mean(y, axis=(0, 2, 3), keepdims=True)
    var = jnp.mean((y - mean) ** 2, axis=(0, 2, 3), keepdims=True)
    y = (y - mean) * lax.rsqrt(var + eps)
    return jnp.maximum(gamma[None, :, None, None] * y + beta[None, :, None, None], 0.0)


if __name__ == "__main__":
    key = jax.random.PRNGKey(0)
    k_x, k_w, k_b, k_g, k_be = jax.random.split(key, 5)

    N, C_IN, C_OUT, H, W = 2, 4, 8, 16, 16
    x = jax.random.normal(k_x, (N, C_IN, H, W), dtype=jnp.float32)
    conv_w = 0.1 * jax.random.normal(k_w, (C_OUT, C_IN, 3, 3), dtype=jnp.float32)
    conv_b = 0.1 * jax.random.normal(k_b, (C_OUT,), dtype=jnp.float32)
    gamma = 1.0 + 0.1 * jax.random.normal(k_g, (C_OUT,), dtype=jnp.float32)
    beta = 0.1 * jax.random.normal(k_be, (C_OUT,), dtype=jnp.float32)

    fwd = jax.jit(conv_block_forward)
    out = jax.block_until_ready(fwd(x, conv_w, conv_b, gamma, beta))
    assert out.shape == (N, C_OUT, H, W)

    # Sanity check vs f32 reference (loose tolerance: conv runs in bf16 on the MXU,
    # an intentional precision trade).
    ref = _reference(x, conv_w, conv_b, gamma, beta)
    max_err = float(jnp.max(jnp.abs(out - ref)))
    assert max_err < 7.5e-2, f"max abs error vs reference: {max_err}"
    print("KERNEL_OK")
</pallas_src>

<mosaic_0001>
module attributes {stable_mosaic.version = 11 : i64} {
  func.func @_stats_kernel(%arg0: i32, %arg1: memref<360x4xbf16, #tpu.memory_space<vmem>>, %arg2: memref<40x4xbf16, #tpu.memory_space<vmem>>, %arg3: memref<36x128xbf16, #tpu.memory_space<vmem>>, %arg4: memref<360x1xf32, #tpu.memory_space<vmem>>, %arg5: memref<1x2x128xf32, #tpu.memory_space<vmem>>, %arg6: memref<400x4xf32, #tpu.memory_space<vmem>>) attributes {dimension_semantics = [#tpu.dimension_semantics<parallel>], iteration_bounds = array<i64: 2>, scalar_prefetch = 0 : i64, scratch_operands = 1 : i64, tpu.core_type = #tpu.core_type<tc>, window_params = [{transform_indices = @transform_0, window_bounds = array<i64: 360, 4>}, {transform_indices = @transform_1, window_bounds = array<i64: 40, 4>}, {pipeline_mode = #tpu.pipeline_mode<synchronous>, transform_indices = @transform_2, window_bounds = array<i64: 36, 128>}, {transform_indices = @transform_3, window_bounds = array<i64: 360, 1>}, {transform_indices = @transform_4, window_bounds = array<i64: 1, 2, 128>}]} {
    %c0 = arith.constant 0 : index
    %c0_0 = arith.constant 0 : index
    %0 = vector.load %arg1[%c0, %c0_0] : memref<360x4xbf16, #tpu.memory_space<vmem>>, vector<360x4xbf16>
    %1 = arith.extf %0 : vector<360x4xbf16> to vector<360x4xf32>
    %c0_1 = arith.constant 0 : index
    %c0_2 = arith.constant 0 : index
    %2 = vector.load %arg6[%c0_1, %c0_2] : memref<400x4xf32, #tpu.memory_space<vmem>>, vector<360x4xf32>
    tpu.vector_store %arg6[%c0_1, %c0_2], %1 {strides = array<i32>} : memref<400x4xf32, #tpu.memory_space<vmem>>, vector<360x4xf32>,
    %c0_3 = arith.constant 0 : index
    %c0_4 = arith.constant 0 : index
    %3 = vector.load %arg2[%c0_3, %c0_4] : memref<40x4xbf16, #tpu.memory_space<vmem>>, vector<40x4xbf16>
    %4 = arith.extf %3 : vector<40x4xbf16> to vector<40x4xf32>
    %c360 = arith.constant 360 : index
    %c0_5 = arith.constant 0 : index
    %5 = vector.load %arg6[%c360, %c0_5] : memref<400x4xf32, #tpu.memory_space<vmem>>, vector<40x4xf32>
    tpu.vector_store %arg6[%c360, %c0_5], %4 {strides = array<i32>} : memref<400x4xf32, #tpu.memory_space<vmem>>, vector<40x4xf32>,
    %c0_6 = arith.constant 0 : index
    %c0_7 = arith.constant 0 : index
    %6 = vector.load %arg6[%c0_6, %c0_7] : memref<400x4xf32, #tpu.memory_space<vmem>>, vector<360x4xf32>
    %c1 = arith.constant 1 : index
    %c0_8 = arith.constant 0 : index
    %7 = vector.load %arg6[%c1, %c0_8] : memref<400x4xf32, #tpu.memory_space<vmem>>, vector<360x4xf32>
    %c2 = arith.constant 2 : index
    %c0_9 = arith.constant 0 : index
    %8 = vector.load %arg6[%c2, %c0_9] : memref<400x4xf32, #tpu.memory_space<vmem>>, vector<360x4xf32>
    %c18 = arith.constant 18 : index
    %c0_10 = arith.constant 0 : index
    %9 = vector.load %arg6[%c18, %c0_10] : memref<400x4xf32, #tpu.memory_space<vmem>>, vector<360x4xf32>
    %c19 = arith.constant 19 : index
    %c0_11 = arith.constant 0 : index
    %10 = vector.load %arg6[%c19, %c0_11] : memref<400x4xf32, #tpu.memory_space<vmem>>, vector<360x4xf32>
    %c20 = arith.constant 20 : index
    %c0_12 = arith.constant 0 : index
    %11 = vector.load %arg6[%c20, %c0_12] : memref<400x4xf32, #tpu.memory_space<vmem>>, vector<360x4xf32>
    %c36 = arith.constant 36 : index
    %c0_13 = arith.constant 0 : index
    %12 = vector.load %arg6[%c36, %c0_13] : memref<400x4xf32, #tpu.memory_space<vmem>>, vector<360x4xf32>
    %c37 = arith.constant 37 : index
    %c0_14 = arith.constant 0 : index
    %13 = vector.load %arg6[%c37, %c0_14] : memref<400x4xf32, #tpu.memory_space<vmem>>, vector<360x4xf32>
    %c38 = arith.constant 38 : index
    %c0_15 = arith.constant 0 : index
    %14 = vector.load %arg6[%c38, %c0_15] : memref<400x4xf32, #tpu.memory_space<vmem>>, vector<360x4xf32>
    %15 = tpu.concatenate %6, %7, %8, %9, %10, %11, %12, %13, %14 in 1 : vector<360x4xf32>, vector<360x4xf32>, vector<360x4xf32>, vector<360x4xf32>, vector<360x4xf32>, vector<360x4xf32>, vector<360x4xf32>, vector<360x4xf32>, vector<360x4xf32> -> vector<360x36xf32>
    %16 = arith.truncf %15 : vector<360x36xf32> to vector<360x36xbf16>
    %c0_16 = arith.constant 0 : index
    %c0_17 = arith.constant 0 : index
    %17 = vector.load %arg3[%c0_16, %c0_17] : memref<36x128xbf16, #tpu.memory_space<vmem>>, vector<36x128xbf16>
    %cst = arith.constant dense<0.000000e+00> : vector<360x128xf32>
    %18 = tpu.matmul %16, %17, %cst {dimension_numbers = #tpu.dot_dimension_numbers<[1], [0], [0], [1], [0, 0, 1, 1], [], []>} : vector<360x36xbf16>, vector<36x128xbf16>, vector<360x128xf32> -> vector<360x128xf32>
    %c0_18 = arith.constant 0 : index
    %c0_19 = arith.constant 0 : index
    %19 = vector.load %arg4[%c0_18, %c0_19] : memref<360x1xf32, #tpu.memory_space<vmem>>, vector<360x1xf32>
    %20 = vector.broadcast %19 : vector<360x1xf32> to vector<360x128xf32>
    %21 = arith.mulf %18, %20 : vector<360x128xf32>
    %cst_20 = arith.constant dense<0.000000e+00> : vector<128xf32>
    %22 = vector.multi_reduction <add>, %21, %cst_20 [0] : vector<360x128xf32> to vector<128xf32>
    %23 = vector.shape_cast %22 : vector<128xf32> to vector<1x128xf32>
    %24 = arith.mulf %21, %18 : vector<360x128xf32>
    %cst_21 = arith.constant dense<0.000000e+00> : vector<128xf32>
    %25 = vector.multi_reduction <add>, %24, %cst_21 [0] : vector<360x128xf32> to vector<128xf32>
    %26 = vector.shape_cast %25 : vector<128xf32> to vector<1x128xf32>
    %27 = tpu.concatenate %23, %26 in 0 : vector<1x128xf32>, vector<1x128xf32> -> vector<2x128xf32>
    %28 = vector.shape_cast %27 : vector<2x128xf32> to vector<1x2x128xf32>
    %c0_22 = arith.constant 0 : index
    %c0_23 = arith.constant 0 : index
    %c0_24 = arith.constant 0 : index
    %29 = vector.load %arg5[%c0_22, %c0_23, %c0_24] : memref<1x2x128xf32, #tpu.memory_space<vmem>>, vector<1x2x128xf32>
    tpu.vector_store %arg5[%c0_22, %c0_23, %c0_24], %28 {strides = array<i32>} : memref<1x2x128xf32, #tpu.memory_space<vmem>>, vector<1x2x128xf32>,
    return
  }
  func.func @transform_0(%arg0: i32) -> (i32, i32) {
    %c0_i32 = arith.constant 0 : i32
    %c0_i32_0 = arith.constant 0 : i32
    return %arg0, %c0_i32 : i32, i32
  }
  func.func @transform_1(%arg0: i32) -> (i32, i32) {
    %c1_i32 = arith.constant 1 : i32
    %0 = arith.addi %arg0, %c1_i32 : i32
    %c9_i32 = arith.constant 9 : i32
    %1 = arith.muli %0, %c9_i32 : i32
    %c0_i32 = arith.constant 0 : i32
    %c0_i32_0 = arith.constant 0 : i32
    return %1, %c0_i32 : i32, i32
  }
  func.func @transform_2(%arg0: i32) -> (i32, i32) {
    %c0_i32 = arith.constant 0 : i32
    %c0_i32_0 = arith.constant 0 : i32
    %c0_i32_1 = arith.constant 0 : i32
    return %c0_i32, %c0_i32_0 : i32, i32
  }
  func.func @transform_3(%arg0: i32) -> (i32, i32) {
    %c0_i32 = arith.constant 0 : i32
    %c0_i32_0 = arith.constant 0 : i32
    return %arg0, %c0_i32 : i32, i32
  }
  func.func @transform_4(%arg0: i32) -> (i32, i32, i32) {
    %c0_i32 = arith.constant 0 : i32
    %c0_i32_0 = arith.constant 0 : i32
    %c0_i32_1 = arith.constant 0 : i32
    return %arg0, %c0_i32, %c0_i32_0 : i32, i32, i32
  }
}

module attributes {stable_mosaic.version = 11 : i64} {
  func.func @_apply_kernel(%arg0: i32, %arg1: memref<360x4xbf16, #tpu.memory_space<vmem>>, %arg2: memref<40x4xbf16, #tpu.memory_space<vmem>>, %arg3: memref<36x128xbf16, #tpu.memory_space<vmem>>, %arg4: memref<1x128xf32, #tpu.memory_space<vmem>>, %arg5: memref<360x128xf32, #tpu.memory_space<vmem>>, %arg6: memref<400x4xf32, #tpu.memory_space<vmem>>) attributes {dimension_semantics = [#tpu.dimension_semantics<parallel>], iteration_bounds = array<i64: 2>, scalar_prefetch = 0 : i64, scratch_operands = 1 : i64, tpu.core_type = #tpu.core_type<tc>, window_params = [{transform_indices = @transform_0, window_bounds = array<i64: 360, 4>}, {transform_indices = @transform_1, window_bounds = array<i64: 40, 4>}, {pipeline_mode = #tpu.pipeline_mode<synchronous>, transform_indices = @transform_2, window_bounds = array<i64: 36, 128>}, {pipeline_mode = #tpu.pipeline_mode<synchronous>, transform_indices = @transform_3, window_bounds = array<i64: 1, 128>}, {transform_indices = @transform_4, window_bounds = array<i64: 360, 128>}]} {
    %c0 = arith.constant 0 : index
    %c0_0 = arith.constant 0 : index
    %0 = vector.load %arg1[%c0, %c0_0] : memref<360x4xbf16, #tpu.memory_space<vmem>>, vector<360x4xbf16>
    %1 = arith.extf %0 : vector<360x4xbf16> to vector<360x4xf32>
    %c0_1 = arith.constant 0 : index
    %c0_2 = arith.constant 0 : index
    %2 = vector.load %arg6[%c0_1, %c0_2] : memref<400x4xf32, #tpu.memory_space<vmem>>, vector<360x4xf32>
    tpu.vector_store %arg6[%c0_1, %c0_2], %1 {strides = array<i32>} : memref<400x4xf32, #tpu.memory_space<vmem>>, vector<360x4xf32>,
    %c0_3 = arith.constant 0 : index
    %c0_4 = arith.constant 0 : index
    %3 = vector.load %arg2[%c0_3, %c0_4] : memref<40x4xbf16, #tpu.memory_space<vmem>>, vector<40x4xbf16>
    %4 = arith.extf %3 : vector<40x4xbf16> to vector<40x4xf32>
    %c360 = arith.constant 360 : index
    %c0_5 = arith.constant 0 : index
    %5 = vector.load %arg6[%c360, %c0_5] : memref<400x4xf32, #tpu.memory_space<vmem>>, vector<40x4xf32>
    tpu.vector_store %arg6[%c360, %c0_5], %4 {strides = array<i32>} : memref<400x4xf32, #tpu.memory_space<vmem>>, vector<40x4xf32>,
    %c0_6 = arith.constant 0 : index
    %c0_7 = arith.constant 0 : index
    %6 = vector.load %arg6[%c0_6, %c0_7] : memref<400x4xf32, #tpu.memory_space<vmem>>, vector<360x4xf32>
    %c1 = arith.constant 1 : index
    %c0_8 = arith.constant 0 : index
    %7 = vector.load %arg6[%c1, %c0_8] : memref<400x4xf32, #tpu.memory_space<vmem>>, vector<360x4xf32>
    %c2 = arith.constant 2 : index
    %c0_9 = arith.constant 0 : index
    %8 = vector.load %arg6[%c2, %c0_9] : memref<400x4xf32, #tpu.memory_space<vmem>>, vector<360x4xf32>
    %c18 = arith.constant 18 : index
    %c0_10 = arith.constant 0 : index
    %9 = vector.load %arg6[%c18, %c0_10] : memref<400x4xf32, #tpu.memory_space<vmem>>, vector<360x4xf32>
    %c19 = arith.constant 19 : index
    %c0_11 = arith.constant 0 : index
    %10 = vector.load %arg6[%c19, %c0_11] : memref<400x4xf32, #tpu.memory_space<vmem>>, vector<360x4xf32>
    %c20 = arith.constant 20 : index
    %c0_12 = arith.constant 0 : index
    %11 = vector.load %arg6[%c20, %c0_12] : memref<400x4xf32, #tpu.memory_space<vmem>>, vector<360x4xf32>
    %c36 = arith.constant 36 : index
    %c0_13 = arith.constant 0 : index
    %12 = vector.load %arg6[%c36, %c0_13] : memref<400x4xf32, #tpu.memory_space<vmem>>, vector<360x4xf32>
    %c37 = arith.constant 37 : index
    %c0_14 = arith.constant 0 : index
    %13 = vector.load %arg6[%c37, %c0_14] : memref<400x4xf32, #tpu.memory_space<vmem>>, vector<360x4xf32>
    %c38 = arith.constant 38 : index
    %c0_15 = arith.constant 0 : index
    %14 = vector.load %arg6[%c38, %c0_15] : memref<400x4xf32, #tpu.memory_space<vmem>>, vector<360x4xf32>
    %15 = tpu.concatenate %6, %7, %8, %9, %10, %11, %12, %13, %14 in 1 : vector<360x4xf32>, vector<360x4xf32>, vector<360x4xf32>, vector<360x4xf32>, vector<360x4xf32>, vector<360x4xf32>, vector<360x4xf32>, vector<360x4xf32>, vector<360x4xf32> -> vector<360x36xf32>
    %16 = arith.truncf %15 : vector<360x36xf32> to vector<360x36xbf16>
    %c0_16 = arith.constant 0 : index
    %c0_17 = arith.constant 0 : index
    %17 = vector.load %arg3[%c0_16, %c0_17] : memref<36x128xbf16, #tpu.memory_space<vmem>>, vector<36x128xbf16>
    %cst = arith.constant dense<0.000000e+00> : vector<360x128xf32>
    %18 = tpu.matmul %16, %17, %cst {dimension_numbers = #tpu.dot_dimension_numbers<[1], [0], [0], [1], [0, 0, 1, 1], [], []>} : vector<360x36xbf16>, vector<36x128xbf16>, vector<360x128xf32> -> vector<360x128xf32>
    %c0_18 = arith.constant 0 : index
    %c0_19 = arith.constant 0 : index
    %19 = vector.load %arg4[%c0_18, %c0_19] : memref<1x128xf32, #tpu.memory_space<vmem>>, vector<1x128xf32>
    %20 = vector.broadcast %19 : vector<1x128xf32> to vector<360x128xf32>
    %21 = arith.addf %18, %20 : vector<360x128xf32>
    %cst_20 = arith.constant 0.000000e+00 : f32
    %22 = vector.broadcast %cst_20 : f32 to vector<360x128xf32>
    %23 = arith.maximumf %21, %22 : vector<360x128xf32>
    %c0_21 = arith.constant 0 : index
    %c0_22 = arith.constant 0 : index
    %24 = vector.load %arg5[%c0_21, %c0_22] : memref<360x128xf32, #tpu.memory_space<vmem>>, vector<360x128xf32>
    tpu.vector_store %arg5[%c0_21, %c0_22], %23 {strides = array<i32>} : memref<360x128xf32, #tpu.memory_space<vmem>>, vector<360x128xf32>,
    return
  }
  func.func @transform_0(%arg0: i32) -> (i32, i32) {
    %c0_i32 = arith.constant 0 : i32
    %c0_i32_0 = arith.constant 0 : i32
    return %arg0, %c0_i32 : i32, i32
  }
  func.func @transform_1(%arg0: i32) -> (i32, i32) {
    %c1_i32 = arith.constant 1 : i32
    %0 = arith.addi %arg0, %c1_i32 : i32
    %c9_i32 = arith.constant 9 : i32
    %1 = arith.muli %0, %c9_i32 : i32
    %c0_i32 = arith.constant 0 : i32
    %c0_i32_0 = arith.constant 0 : i32
    return %1, %c0_i32 : i32, i32
  }
  func.func @transform_2(%arg0: i32) -> (i32, i32) {
    %c0_i32 = arith.constant 0 : i32
    %c0_i32_0 = arith.constant 0 : i32
    %c0_i32_1 = arith.constant 0 : i32
    return %c0_i32, %c0_i32_0 : i32, i32
  }
  func.func @transform_3(%arg0: i32) -> (i32, i32) {
    %c0_i32 = arith.constant 0 : i32
    %c0_i32_0 = arith.constant 0 : i32
    %c0_i32_1 = arith.constant 0 : i32
    return %c0_i32, %c0_i32_0 : i32, i32
  }
  func.func @transform_4(%arg0: i32) -> (i32, i32) {
    %c0_i32 = arith.constant 0 : i32
    %c0_i32_0 = arith.constant 0 : i32
    return %arg0, %c0_i32 : i32, i32
  }
}

</mosaic_0001>

<llo_original>
// kernel: conv_block_forward.3
$region0: #{conv_block_forward.3}
  #allocation0 [shape = 'u32[]', space=smem, size = 0x4, offset = 0x4, fixed_abs, tag = 'smem constant byte address 0x4 - core index']
  #allocation1 [shape = 'u32[144,128]{1,0:T(1,128)}', space=vmem, size = 0x12000, scoped, tag = 'internal scratch']
  #allocation2 [shape = 'f32[400,4]{1,0:T(8,128)}', space=vmem, size = 0x32000, scoped, tag = 'scratch operand']
  %s0 = inlined_call_operand.vmem [shape: bf16[1080,4], index: 0, kind: input, shape index: {}, may-alias: {0,1}]
  %s1 = inlined_call_operand.vmem [shape: bf16[1080,4], index: 1, kind: input, shape index: {}, may-alias: {0,1}]
  %s2 = inlined_call_operand.vmem [shape: bf16[36,128], index: 2, kind: input, shape index: {}]
  %s3 = inlined_call_operand.vmem [shape: f32[1,128], index: 3, kind: input, shape index: {}]
  %s4 = inlined_call_operand.vmem [shape: f32[720,128], index: 4, kind: output, shape index: {}]
  %s5 = sld [smem:[#allocation0]]
  $region49: #{conv_block_forward.3} parent=0
    _
  %s7 = ssub.s32 1, %s5
  %s8 = scalar_select 0, %s7, %s5
  loop: start=0, step=1, limit=4
  $region2: #{conv_block_forward.3} parent=0 // loop_pre_header
    _
  $region3: #{conv_block_forward.3} parent=0 // loop_header
    %s10 = sphi 0, %s14
    %p11 = scmp.ge.s32.totalorder %s10, 4
    %s20 = sphi 0, %s22
    %s23 = sphi 0, %s20
    %s24 = sphi 0, %s23
    %s40 = sphi 0, %s24
    %s50 = sphi 0, %s52
    %s53 = sphi 0, %s50
    %s54 = sphi 0, %s53
    %s70 = sphi 0, %s54
    %s74 = sphi 0, %s74
    %s76 = sphi 0, %s74
    %s77 = sphi 0, %s76
    %s91 = sphi 0, %s77
    %s95 = sphi 0, %s95
    %s97 = sphi 0, %s95
    %s98 = sphi 0, %s97
    %s112 = sphi 0, %s98
    %s118 = sphi 0, %s120
    %s121 = sphi 0, %s118
    %s122 = sphi 0, %s121
    %s138 = sphi 0, %s122
  $region4: #{conv_block_forward.3} parent=0 // loop_header_branch
    %13 = sbr.rel (%p11) target = $region8
  $region5: #{conv_block_forward.3} parent=0 // loop_body
    %s15 = ssub.s32 %s10, 1
    %s16 = ssub.s32 %s10, 2
    %s17 = sadd.s32 %s10, 1
    %s18 = ssub.s32 %s10, %s17
    %p19 = scmp.eq.s32.totalorder %s18, 0
    %s21 = sadd.s32 %s20, 1
    %s22 = scalar_select %p19, %s20, %s21
    %p25 = pneg %p19
    %p26 = scmp.eq.s32.totalorder %s10, 1
    %p27 = por %p25, %p26
    %p28 = scmp.ne.s32.totalorder %s20, %s23
    %p29 = scmp.eq.s32.totalorder %s10, 0
    %p30 = por %p28, %p29
    %p31 = scmp.ne.s32.totalorder %s20, %s23
    %p32 = scmp.eq.s32.totalorder %s15, 1
    %p33 = por %p31, %p32
    %p34 = scmp.ne.s32.totalorder %s23, %s24
    %p35 = scmp.eq.s32.totalorder %s15, 0
    %p36 = por %p34, %p35
    %p37 = scmp.ne.s32.totalorder %s23, %s24
    %p38 = scmp.eq.s32.totalorder %s16, 1
    %p39 = por %p37, %p38
    %p41 = scmp.ne.s32.totalorder %s24, %s40
    %p42 = scmp.eq.s32.totalorder %s16, 0
    %p43 = por %p41, %p42
    %s44 = sadd.s32 %s10, 1
    %s45 = smul.u32 %s44, 9
    %s46 = sadd.s32 %s17, 1
    %s47 = smul.u32 %s46, 9
    %s48 = ssub.s32 %s45, %s47
    %p49 = scmp.eq.s32.totalorder %s48, 0
    %s51 = sadd.s32 %s50, 1
    %s52 = scalar_select %p49, %s50, %s51
    %p55 = pneg %p49
    %p56 = scmp.eq.s32.totalorder %s10, 1
    %p57 = por %p55, %p56
    %p58 = scmp.ne.s32.totalorder %s50, %s53
    %p59 = scmp.eq.s32.totalorder %s10, 0
    %p60 = por %p58, %p59
    %p61 = scmp.ne.s32.totalorder %s50, %s53
    %p62 = scmp.eq.s32.totalorder %s15, 1
    %p63 = por %p61, %p62
    %p64 = scmp.ne.s32.totalorder %s53, %s54
    %p65 = scmp.eq.s32.totalorder %s15, 0
    %p66 = por %p64, %p65
    %p67 = scmp.ne.s32.totalorder %s53, %s54
    %p68 = scmp.eq.s32.totalorder %s16, 1
    %p69 = por %p67, %p68
    %p71 = scmp.ne.s32.totalorder %s54, %s70
    %p72 = scmp.eq.s32.totalorder %s16, 0
    %p73 = por %p71, %p72
    %s75 = sadd.s32 %s74, 1
    %p78 = scmp.eq.s32.totalorder %s10, 1
    %p79 = scmp.ne.s32.totalorder %s74, %s76
    %p80 = scmp.eq.s32.totalorder %s10, 0
    %p81 = por %p79, %p80
    %p82 = scmp.ne.s32.totalorder %s74, %s76
    %p83 = scmp.eq.s32.totalorder %s15, 1
    %p84 = por %p82, %p83
    %p85 = scmp.ne.s32.totalorder %s76, %s77
    %p86 = scmp.eq.s32.totalorder %s15, 0
    %p87 = por %p85, %p86
    %p88 = scmp.ne.s32.totalorder %s76, %s77
    %p89 = scmp.eq.s32.totalorder %s16, 1
    %p90 = por %p88, %p89
    %p92 = scmp.ne.s32.totalorder %s77, %s91
    %p93 = scmp.eq.s32.totalorder %s16, 0
    %p94 = por %p92, %p93
    %s96 = sadd.s32 %s95, 1
    %p99 = scmp.eq.s32.totalorder %s10, 1
    %p100 = scmp.ne.s32.totalorder %s95, %s97
    %p101 = scmp.eq.s32.totalorder %s10, 0
    %p102 = por %p100, %p101
    %p103 = scmp.ne.s32.totalorder %s95, %s97
    %p104 = scmp.eq.s32.totalorder %s15, 1
    %p105 = por %p103, %p104
    %p106 = scmp.ne.s32.totalorder %s97, %s98
    %p107 = scmp.eq.s32.totalorder %s15, 0
    %p108 = por %p106, %p107
    %p109 = scmp.ne.s32.totalorder %s97, %s98
    %p110 = scmp.eq.s32.totalorder %s16, 1
    %p111 = por %p109, %p110
    %p113 = scmp.ne.s32.totalorder %s98, %s112
    %p114 = scmp.eq.s32.totalorder %s16, 0
    %p115 = por %p113, %p114
    %s116 = ssub.s32 %s10, %s17
    %p117 = scmp.eq.s32.totalorder %s116, 0
    %s119 = sadd.s32 %s118, 1
    %s120 = scalar_select %p117, %s118, %s119
    %p123 = pneg %p117
    %p124 = scmp.eq.s32.totalorder %s10, 1
    %p125 = por %p123, %p124
    %p126 = scmp.ne.s32.totalorder %s118, %s121
    %p127 = scmp.eq.s32.totalorder %s10, 0
    %p128 = por %p126, %p127
    %p129 = scmp.ne.s32.totalorder %s118, %s121
    %p130 = scmp.eq.s32.totalorder %s15, 1
    %p131 = por %p129, %p130
    %p132 = scmp.ne.s32.totalorder %s121, %s122
    %p133 = scmp.eq.s32.totalorder %s15, 0
    %p134 = por %p132, %p133
    %p135 = scmp.ne.s32.totalorder %s121, %s122
    %p136 = scmp.eq.s32.totalorder %s16, 1
    %p137 = por %p135, %p136
    %p139 = scmp.ne.s32.totalorder %s122, %s138
    %p140 = scmp.eq.s32.totalorder %s16, 0
    %p141 = por %p139, %p140
    %p142 = scmp.le.s32.totalorder 1, %s10
    %p143 = scmp.lt.s32.totalorder %s10, 3
    %p144 = pnand %p142, %p143
    %p145 = pneg %p144
    // Predicated region
    $region9: #{conv_block_forward.3} parent=5 // pred_check
      _
    $region10: #{conv_block_forward.3} parent=5 // pred_check_branch
      %147 = sbr.rel (%p144) target = $region12
    $region11: #{conv_block_forward.3} parent=5 // pred_region
      %s148 = ssub.s32 %s10, 1
      // Predicated region
      $region13: #{conv_block_forward.3} parent=11 // pred_check
        %p149 = pneg %p87
      $region14: #{conv_block_forward.3} parent=11 // pred_check_branch
        %151 = sbr.rel (%p149) target = $region16
      $region15: #{conv_block_forward.3} parent=11 // pred_region
        _
      $region16: #{conv_block_forward.3} parent=11 // pred_fallthru
        _
      // Predicated region
      $region17: #{conv_block_forward.3} parent=11 // pred_check
        %p152 = pneg %p108
      $region18: #{conv_block_forward.3} parent=11 // pred_check_branch
        %154 = sbr.rel (%p152) target = $region20
      $region19: #{conv_block_forward.3} parent=11 // pred_region
        _
      $region20: #{conv_block_forward.3} parent=11 // pred_fallthru
        _
    $region12: #{conv_block_forward.3} parent=5 // pred_fallthru
      _
    %p155 = scmp.lt.s32.totalorder %s10, 2
    // Predicated region
    $region21: #{conv_block_forward.3} parent=5 // pred_check
      %p156 = pneg %p155
    $region22: #{conv_block_forward.3} parent=5 // pred_check_branch
      %158 = sbr.rel (%p156) target = $region24
    $region23: #{conv_block_forward.3} parent=5 // pred_region
      // Predicated region
      $region25: #{conv_block_forward.3} parent=23 // pred_check
        %p159 = pneg %p30
      $region26: #{conv_block_forward.3} parent=23 // pred_check_branch
        %161 = sbr.rel (%p159) target = $region28
      $region27: #{conv_block_forward.3} parent=23 // pred_region
        %s162 = smul.u32 45, %s10
        %p163 = scmp.lt.s32.totalorder %s162, 134
        %s164 = scalar_select %p163, %s162, 134
        %s165 = smul.addr %s164, 4
        %s166 = scalar_lea.vmem %s0, %s165
        %s167 = smul.u32 45, %s10
      $region28: #{conv_block_forward.3} parent=23 // pred_fallthru
        _
      // Predicated region
      $region29: #{conv_block_forward.3} parent=23 // pred_check
        %p168 = pneg %p60
      $region30: #{conv_block_forward.3} parent=23 // pred_check_branch
        %170 = sbr.rel (%p168) target = $region32
      $region31: #{conv_block_forward.3} parent=23 // pred_region
        %s171 = sadd.s32 %s10, 1
        %s172 = smul.u32 %s171, 9
        %s173 = smul.u32 5, %s172
        %p174 = scmp.lt.s32.totalorder %s173, 134
        %s175 = scalar_select %p174, %s173, 134
        %s176 = smul.addr %s175, 4
        %s177 = scalar_lea.vmem %s1, %s176
        %s178 = sadd.s32 %s10, 1
        %s179 = smul.u32 %s178, 9
        %s180 = smul.u32 5, %s179
      $region32: #{conv_block_forward.3} parent=23 // pred_fallthru
        _
    $region24: #{conv_block_forward.3} parent=5 // pred_fallthru
      _
    %p181 = scmp.le.s32.totalorder 1, %s10
    %p182 = scmp.lt.s32.totalorder %s10, 3
    %p183 = pnand %p181, %p182
    %p184 = pneg %p183
    // Predicated region
    $region33: #{conv_block_forward.3} parent=5 // pred_check
      _
    $region34: #{conv_block_forward.3} parent=5 // pred_check_branch
      %186 = sbr.rel (%p183) target = $region36
    $region35: #{conv_block_forward.3} parent=5 // pred_region
      %s187 = ssub.s32 %s10, 1
      %s188 = smul.u32 45, %s15
      %p189 = scmp.lt.s32.totalorder %s188, 134
      %s190 = scalar_select %p189, %s188, 134
      %s191 = smul.addr %s190, 4
      %s192 = scalar_lea.vmem %s0, %s191
      %p193 = pneg %p36
      %p194 = pneg %p33
      %s195 = sadd.s32 %s15, 1
      %s196 = smul.u32 %s195, 9
      %s197 = smul.u32 5, %s196
      %p198 = scmp.lt.s32.totalorder %s197, 134
      %s199 = scalar_select %p198, %s197, 134
      %s200 = smul.addr %s199, 4
      %s201 = scalar_lea.vmem %s1, %s200
      %p202 = pneg %p66
      %p203 = pneg %p63
      %p204 = pneg %p87
      %p205 = pneg %p84
      %p206 = pneg %p108
      %p207 = pneg %p105
      %p208 = pneg %p134
      %p209 = pneg %p131
      %s210 = smul.u32 45, %s15
      %p211 = scmp.lt.s32.totalorder %s210, 89
      %s212 = scalar_select %p211, %s210, 89
      %s213 = smul.addr %s212, 8
      %s214 = scalar_lea.vmem %s4, %s213
      %s215 = smul.u32 45, %s15
      %p216 = scmp.lt.s32.totalorder %s215, 134
      %s217 = scalar_select %p216, %s215, 134
      %s218 = smul.addr %s217, 4
      %s219 = scalar_lea.vmem %s0, %s218
      %s220 = smul.u32 45, %s15
      %s221 = sadd.s32 %s15, 1
      %s222 = smul.u32 %s221, 9
      %s223 = smul.u32 5, %s222
      %p224 = scmp.lt.s32.totalorder %s223, 134
      %s225 = scalar_select %p224, %s223, 134
      %s226 = smul.addr %s225, 4
      %s227 = scalar_lea.vmem %s1, %s226
      %s228 = sadd.s32 %s15, 1
      %s229 = smul.u32 %s228, 9
      %s230 = smul.u32 5, %s229
      %s231 = smul.u32 45, %s15
      %p232 = scmp.lt.s32.totalorder %s231, 89
      %s233 = scalar_select %p232, %s231, 89
      %s234 = smul.addr %s233, 8
      %s235 = scalar_lea.vmem %s4, %s234
      %s236 = smul.u32 45, %s15
      %v238 = vld [vmem:[%s219] sm:$0xf]
      %v239 = vld [vmem:[%s219 + $0x4] sm:$0xf]
      %v240 = vld [vmem:[%s219 + $0x8] sm:$0xf]
      %v241 = vld [vmem:[%s219 + $0xc] sm:$0xf]
      %v242 = vld [vmem:[%s219 + $0x10] sm:$0xf]
      %v243 = vld [vmem:[%s219 + $0x14] sm:$0xf]
      %v244 = vld [vmem:[%s219 + $0x18] sm:$0xf]
      %v245 = vld [vmem:[%s219 + $0x1c] sm:$0xf]
      %v246 = vld [vmem:[%s219 + $0x20] sm:$0xf]
      %v247 = vld [vmem:[%s219 + $0x24] sm:$0xf]
      %v248 = vld [vmem:[%s219 + $0x28] sm:$0xf]
      %v249 = vld [vmem:[%s219 + $0x2c] sm:$0xf]
      %v250 = vld [vmem:[%s219 + $0x30] sm:$0xf]
      %v251 = vld [vmem:[%s219 + $0x34] sm:$0xf]
      %v252 = vld [vmem:[%s219 + $0x38] sm:$0xf]
      %v253 = vld [vmem:[%s219 + $0x3c] sm:$0xf]
      %v254 = vld [vmem:[%s219 + $0x40] sm:$0xf]
      %v255 = vld [vmem:[%s219 + $0x44] sm:$0xf]
      %v256 = vld [vmem:[%s219 + $0x48] sm:$0xf]
      %v257 = vld [vmem:[%s219 + $0x4c] sm:$0xf]
      %v258 = vld [vmem:[%s219 + $0x50] sm:$0xf]
      %v259 = vld [vmem:[%s219 + $0x54] sm:$0xf]
      %v260 = vld [vmem:[%s219 + $0x58] sm:$0xf]
      %v261 = vld [vmem:[%s219 + $0x5c] sm:$0xf]
      %v262 = vld [vmem:[%s219 + $0x60] sm:$0xf]
      %v263 = vld [vmem:[%s219 + $0x64] sm:$0xf]
      %v264 = vld [vmem:[%s219 + $0x68] sm:$0xf]
      %v265 = vld [vmem:[%s219 + $0x6c] sm:$0xf]
      %v266 = vld [vmem:[%s219 + $0x70] sm:$0xf]
      %v267 = vld [vmem:[%s219 + $0x74] sm:$0xf]
      %v268 = vld [vmem:[%s219 + $0x78] sm:$0xf]
      %v269 = vld [vmem:[%s219 + $0x7c] sm:$0xf]
      %v270 = vld [vmem:[%s219 + $0x80] sm:$0xf]
      %v271 = vld [vmem:[%s219 + $0x84] sm:$0xf]
      %v272 = vld [vmem:[%s219 + $0x88] sm:$0xf]
      %v273 = vld [vmem:[%s219 + $0x8c] sm:$0xf]
      %v274 = vld [vmem:[%s219 + $0x90] sm:$0xf]
      %v275 = vld [vmem:[%s219 + $0x94] sm:$0xf]
      %v276 = vld [vmem:[%s219 + $0x98] sm:$0xf]
      %v277 = vld [vmem:[%s219 + $0x9c] sm:$0xf]
      %v278 = vld [vmem:[%s219 + $0xa0] sm:$0xf]
      %v279 = vld [vmem:[%s219 + $0xa4] sm:$0xf]
      %v280 = vld [vmem:[%s219 + $0xa8] sm:$0xf]
      %v281 = vld [vmem:[%s219 + $0xac] sm:$0xf]
      %v282 = vld [vmem:[%s219 + $0xb0] sm:$0xf]
      %v283 = vunpack.c.l.bf16 %v238
      %v284 = vunpack.c.l.bf16 %v239
      %v285 = vunpack.c.l.bf16 %v240
      %v286 = vunpack.c.l.bf16 %v241
      %v287 = vunpack.c.l.bf16 %v242
      %v288 = vunpack.c.l.bf16 %v243
      %v289 = vunpack.c.l.bf16 %v244
      %v290 = vunpack.c.l.bf16 %v245
      %v291 = vunpack.c.l.bf16 %v246
      %v292 = vunpack.c.l.bf16 %v247
      %v293 = vunpack.c.l.bf16 %v248
      %v294 = vunpack.c.l.bf16 %v249
      %v295 = vunpack.c.l.bf16 %v250
      %v296 = vunpack.c.l.bf16 %v251
      %v297 = vunpack.c.l.bf16 %v252
      %v298 = vunpack.c.l.bf16 %v253
      %v299 = vunpack.c.l.bf16 %v254
      %v300 = vunpack.c.l.bf16 %v255
      %v301 = vunpack.c.l.bf16 %v256
      %v302 = vunpack.c.l.bf16 %v257
      %v303 = vunpack.c.l.bf16 %v258
      %v304 = vunpack.c.l.bf16 %v259
      %v305 = vunpack.c.l.bf16 %v260
      %v306 = vunpack.c.l.bf16 %v261
      %v307 = vunpack.c.l.bf16 %v262
      %v308 = vunpack.c.l.bf16 %v263
      %v309 = vunpack.c.l.bf16 %v264
      %v310 = vunpack.c.l.bf16 %v265
      %v311 = vunpack.c.l.bf16 %v266
      %v312 = vunpack.c.l.bf16 %v267
      %v313 = vunpack.c.l.bf16 %v268
      %v314 = vunpack.c.l.bf16 %v269
      %v315 = vunpack.c.l.bf16 %v270
      %v316 = vunpack.c.l.bf16 %v271
      %v317 = vunpack.c.l.bf16 %v272
      %v318 = vunpack.c.l.bf16 %v273
      %v319 = vunpack.c.l.bf16 %v274
      %v320 = vunpack.c.l.bf16 %v275
      %v321 = vunpack.c.l.bf16 %v276
      %v322 = vunpack.c.l.bf16 %v277
      %v323 = vunpack.c.l.bf16 %v278
      %v324 = vunpack.c.l.bf16 %v279
      %v325 = vunpack.c.l.bf16 %v280
      %v326 = vunpack.c.l.bf16 %v281
      %v327 = vunpack.c.l.bf16 %v282
      %vm328 = vcmask 31744
      %329 = vst.msk [vmem:[#allocation2] sm:$0xff] %vm328, %v283
      %330 = vst.msk [vmem:[#allocation2 + $0x8] sm:$0xff] %vm328, %v284
      %331 = vst.msk [vmem:[#allocation2 + $0x10] sm:$0xff] %vm328, %v285
      %332 = vst.msk [vmem:[#allocation2 + $0x18] sm:$0xff] %vm328, %v286
      %333 = vst.msk [vmem:[#allocation2 + $0x20] sm:$0xff] %vm328, %v287
      %334 = vst.msk [vmem:[#allocation2 + $0x28] sm:$0xff] %vm328, %v288
      %335 = vst.msk [vmem:[#allocation2 + $0x30] sm:$0xff] %vm328, %v289
      %336 = vst.msk [vmem:[#allocation2 + $0x38] sm:$0xff] %vm328, %v290
      %337 = vst.msk [vmem:[#allocation2 + $0x40] sm:$0xff] %vm328, %v291
      %338 = vst.msk [vmem:[#allocation2 + $0x48] sm:$0xff] %vm328, %v292
      %339 = vst.msk [vmem:[#allocation2 + $0x50] sm:$0xff] %vm328, %v293
      %340 = vst.msk [vmem:[#allocation2 + $0x58] sm:$0xff] %vm328, %v294
      %341 = vst.msk [vmem:[#allocation2 + $0x60] sm:$0xff] %vm328, %v295
      %342 = vst.msk [vmem:[#allocation2 + $0x68] sm:$0xff] %vm328, %v296
      %343 = vst.msk [vmem:[#allocation2 + $0x70] sm:$0xff] %vm328, %v297
      %344 = vst.msk [vmem:[#allocation2 + $0x78] sm:$0xff] %vm328, %v298
      %345 = vst.msk [vmem:[#allocation2 + $0x80] sm:$0xff] %vm328, %v299
      %346 = vst.msk [vmem:[#allocation2 + $0x88] sm:$0xff] %vm328, %v300
      %347 = vst.msk [vmem:[#allocation2 + $0x90] sm:$0xff] %vm328, %v301
      %348 = vst.msk [vmem:[#allocation2 + $0x98] sm:$0xff] %vm328, %v302
      %349 = vst.msk [vmem:[#allocation2 + $0xa0] sm:$0xff] %vm328, %v303
      %350 = vst.msk [vmem:[#allocation2 + $0xa8] sm:$0xff] %vm328, %v304
      %351 = vst.msk [vmem:[#allocation2 + $0xb0] sm:$0xff] %vm328, %v305
      %352 = vst.msk [vmem:[#allocation2 + $0xb8] sm:$0xff] %vm328, %v306
      %353 = vst.msk [vmem:[#allocation2 + $0xc0] sm:$0xff] %vm328, %v307
      %354 = vst.msk [vmem:[#allocation2 + $0xc8] sm:$0xff] %vm328, %v308
      %355 = vst.msk [vmem:[#allocation2 + $0xd0] sm:$0xff] %vm328, %v309
      %356 = vst.msk [vmem:[#allocation2 + $0xd8] sm:$0xff] %vm328, %v310
      %357 = vst.msk [vmem:[#allocation2 + $0xe0] sm:$0xff] %vm328, %v311
      %358 = vst.msk [vmem:[#allocation2 + $0xe8] sm:$0xff] %vm328, %v312
      %359 = vst.msk [vmem:[#allocation2 + $0xf0] sm:$0xff] %vm328, %v313
      %360 = vst.msk [vmem:[#allocation2 + $0xf8] sm:$0xff] %vm328, %v314
      %361 = vst.msk [vmem:[#allocation2 + $0x100] sm:$0xff] %vm328, %v315
      %362 = vst.msk [vmem:[#allocation2 + $0x108] sm:$0xff] %vm328, %v316
      %363 = vst.msk [vmem:[#allocation2 + $0x110] sm:$0xff] %vm328, %v317
      %364 = vst.msk [vmem:[#allocation2 + $0x118] sm:$0xff] %vm328, %v318
      %365 = vst.msk [vmem:[#allocation2 + $0x120] sm:$0xff] %vm328, %v319
      %366 = vst.msk [vmem:[#allocation2 + $0x128] sm:$0xff] %vm328, %v320
      %367 = vst.msk [vmem:[#allocation2 + $0x130] sm:$0xff] %vm328, %v321
      %368 = vst.msk [vmem:[#allocation2 + $0x138] sm:$0xff] %vm328, %v322
      %369 = vst.msk [vmem:[#allocation2 + $0x140] sm:$0xff] %vm328, %v323
      %370 = vst.msk [vmem:[#allocation2 + $0x148] sm:$0xff] %vm328, %v324
      %371 = vst.msk [vmem:[#allocation2 + $0x150] sm:$0xff] %vm328, %v325
      %372 = vst.msk [vmem:[#allocation2 + $0x158] sm:$0xff] %vm328, %v326
      %373 = vst.msk [vmem:[#allocation2 + $0x160] sm:$0xff] %vm328, %v327
      %v374 = vld [vmem:[%s227] sm:$0xf]
      %v375 = vld [vmem:[%s227 + $0x4] sm:$0xf]
      %v376 = vld [vmem:[%s227 + $0x8] sm:$0xf]
      %v377 = vld [vmem:[%s227 + $0xc] sm:$0xf]
      %v378 = vld [vmem:[%s227 + $0x10] sm:$0xf]
      %v379 = vunpack.c.l.bf16 %v374
      %v380 = vunpack.c.l.bf16 %v375
      %v381 = vunpack.c.l.bf16 %v376
      %v382 = vunpack.c.l.bf16 %v377
      %v383 = vunpack.c.l.bf16 %v378
      %384 = vst.msk [vmem:[#allocation2 + $0x168] sm:$0xff] %vm328, %v379
      %385 = vst.msk [vmem:[#allocation2 + $0x170] sm:$0xff] %vm328, %v380
      %386 = vst.msk [vmem:[#allocation2 + $0x178] sm:$0xff] %vm328, %v381
      %387 = vst.msk [vmem:[#allocation2 + $0x180] sm:$0xff] %vm328, %v382
      %388 = vst.msk [vmem:[#allocation2 + $0x188] sm:$0xff] %vm328, %v383
      %v389 = vld [vmem:[#allocation2] sm:$0xff]
      %v390 = vld [vmem:[#allocation2 + $0x8] sm:$0xff]
      %v391 = vld [vmem:[#allocation2 + $0x10] sm:$0xff]
      %v392 = vld [vmem:[#allocation2 + $0x18] sm:$0xff]
      %v393 = vld [vmem:[#allocation2 + $0x20] sm:$0xff]
      %v394 = vld [vmem:[#allocation2 + $0x28] sm:$0xff]
      %v395 = vld [vmem:[#allocation2 + $0x30] sm:$0xff]
      %v396 = vld [vmem:[#allocation2 + $0x38] sm:$0xff]
      %v397 = vld [vmem:[#allocation2 + $0x40] sm:$0xff]
      %v398 = vld [vmem:[#allocation2 + $0x48] sm:$0xff]
      %v399 = vld [vmem:[#allocation2 + $0x50] sm:$0xff]
      %v400 = vld [vmem:[#allocation2 + $0x58] sm:$0xff]
      %v401 = vld [vmem:[#allocation2 + $0x60] sm:$0xff]
      %v402 = vld [vmem:[#allocation2 + $0x68] sm:$0xff]
      %v403 = vld [vmem:[#allocation2 + $0x70] sm:$0xff]
      %v404 = vld [vmem:[#allocation2 + $0x78] sm:$0xff]
      %v405 = vld [vmem:[#allocation2 + $0x80] sm:$0xff]
      %v406 = vld [vmem:[#allocation2 + $0x88] sm:$0xff]
      %v407 = vld [vmem:[#allocation2 + $0x90] sm:$0xff]
      %v408 = vld [vmem:[#allocation2 + $0x98] sm:$0xff]
      %v409 = vld [vmem:[#allocation2 + $0xa0] sm:$0xff]
      %v410 = vld [vmem:[#allocation2 + $0xa8] sm:$0xff]
      %v411 = vld [vmem:[#allocation2 + $0xb0] sm:$0xff]
      %v412 = vld [vmem:[#allocation2 + $0xb8] sm:$0xff]
      %v413 = vld [vmem:[#allocation2 + $0xc0] sm:$0xff]
      %v414 = vld [vmem:[#allocation2 + $0xc8] sm:$0xff]
      %v415 = vld [vmem:[#allocation2 + $0xd0] sm:$0xff]
      %v416 = vld [vmem:[#allocation2 + $0xd8] sm:$0xff]
      %v417 = vld [vmem:[#allocation2 + $0xe0] sm:$0xff]
      %v418 = vld [vmem:[#allocation2 + $0xe8] sm:$0xff]
      %v419 = vld [vmem:[#allocation2 + $0xf0] sm:$0xff]
      %v420 = vld [vmem:[#allocation2 + $0xf8] sm:$0xff]
      %v421 = vld [vmem:[#allocation2 + $0x100] sm:$0xff]
      %v422 = vld [vmem:[#allocation2 + $0x108] sm:$0xff]
      %v423 = vld [vmem:[#allocation2 + $0x110] sm:$0xff]
      %v424 = vld [vmem:[#allocation2 + $0x118] sm:$0xff]
      %v425 = vld [vmem:[#allocation2 + $0x120] sm:$0xff]
      %v426 = vld [vmem:[#allocation2 + $0x128] sm:$0xff]
      %v427 = vld [vmem:[#allocation2 + $0x130] sm:$0xff]
      %v428 = vld [vmem:[#allocation2 + $0x138] sm:$0xff]
      %v429 = vld [vmem:[#allocation2 + $0x140] sm:$0xff]
      %v430 = vld [vmem:[#allocation2 + $0x148] sm:$0xff]
      %v431 = vld [vmem:[#allocation2 + $0x150] sm:$0xff]
      %v432 = vld [vmem:[#allocation2 + $0x158] sm:$0xff]
      %v433 = vld [vmem:[#allocation2 + $0x160] sm:$0xff]
      %v434 = vld [vmem:[#allocation2 + $0x1] sm:$0xff]
      %v435 = vld [vmem:[#allocation2 + $0x9] sm:$0xff]
      %v436 = vld [vmem:[#allocation2 + $0x11] sm:$0xff]
      %v437 = vld [vmem:[#allocation2 + $0x19] sm:$0xff]
      %v438 = vld [vmem:[#allocation2 + $0x21] sm:$0xff]
      %v439 = vld [vmem:[#allocation2 + $0x29] sm:$0xff]
      %v440 = vld [vmem:[#allocation2 + $0x31] sm:$0xff]
      %v441 = vld [vmem:[#allocation2 + $0x39] sm:$0xff]
      %v442 = vld [vmem:[#allocation2 + $0x41] sm:$0xff]
      %v443 = vld [vmem:[#allocation2 + $0x49] sm:$0xff]
      %v444 = vld [vmem:[#allocation2 + $0x51] sm:$0xff]
      %v445 = vld [vmem:[#allocation2 + $0x59] sm:$0xff]
      %v446 = vld [vmem:[#allocation2 + $0x61] sm:$0xff]
      %v447 = vld [vmem:[#allocation2 + $0x69] sm:$0xff]
      %v448 = vld [vmem:[#allocation2 + $0x71] sm:$0xff]
      %v449 = vld [vmem:[#allocation2 + $0x79] sm:$0xff]
      %v450 = vld [vmem:[#allocation2 + $0x81] sm:$0xff]
      %v451 = vld [vmem:[#allocation2 + $0x89] sm:$0xff]
      %v452 = vld [vmem:[#allocation2 + $0x91] sm:$0xff]
      %v453 = vld [vmem:[#allocation2 + $0x99] sm:$0xff]
      %v454 = vld [vmem:[#allocation2 + $0xa1] sm:$0xff]
      %v455 = vld [vmem:[#allocation2 + $0xa9] sm:$0xff]
      %v456 = vld [vmem:[#allocation2 + $0xb1] sm:$0xff]
      %v457 = vld [vmem:[#allocation2 + $0xb9] sm:$0xff]
      %v458 = vld [vmem:[#allocation2 + $0xc1] sm:$0xff]
      %v459 = vld [vmem:[#allocation2 + $0xc9] sm:$0xff]
      %v460 = vld [vmem:[#allocation2 + $0xd1] sm:$0xff]
      %v461 = vld [vmem:[#allocation2 + $0xd9] sm:$0xff]
      %v462 = vld [vmem:[#allocation2 + $0xe1] sm:$0xff]
      %v463 = vld [vmem:[#allocation2 + $0xe9] sm:$0xff]
      %v464 = vld [vmem:[#allocation2 + $0xf1] sm:$0xff]
      %v465 = vld [vmem:[#allocation2 + $0xf9] sm:$0xff]
      %v466 = vld [vmem:[#allocation2 + $0x101] sm:$0xff]
      %v467 = vld [vmem:[#allocation2 + $0x109] sm:$0xff]
      %v468 = vld [vmem:[#allocation2 + $0x111] sm:$0xff]
      %v469 = vld [vmem:[#allocation2 + $0x119] sm:$0xff]
      %v470 = vld [vmem:[#allocation2 + $0x121] sm:$0xff]
      %v471 = vld [vmem:[#allocation2 + $0x129] sm:$0xff]
      %v472 = vld [vmem:[#allocation2 + $0x131] sm:$0xff]
      %v473 = vld [vmem:[#allocation2 + $0x139] sm:$0xff]
      %v474 = vld [vmem:[#allocation2 + $0x141] sm:$0xff]
      %v475 = vld [vmem:[#allocation2 + $0x149] sm:$0xff]
      %v476 = vld [vmem:[#allocation2 + $0x151] sm:$0xff]
      %v477 = vld [vmem:[#allocation2 + $0x159] sm:$0xff]
      %v478 = vld [vmem:[#allocation2 + $0x161] sm:$0xff]
      %v479 = vld [vmem:[#allocation2 + $0x2] sm:$0xff]
      %v480 = vld [vmem:[#allocation2 + $0xa] sm:$0xff]
      %v481 = vld [vmem:[#allocation2 + $0x12] sm:$0xff]
      %v482 = vld [vmem:[#allocation2 + $0x1a] sm:$0xff]
      %v483 = vld [vmem:[#allocation2 + $0x22] sm:$0xff]
      %v484 = vld [vmem:[#allocation2 + $0x2a] sm:$0xff]
      %v485 = vld [vmem:[#allocation2 + $0x32] sm:$0xff]
      %v486 = vld [vmem:[#allocation2 + $0x3a] sm:$0xff]
      %v487 = vld [vmem:[#allocation2 + $0x42] sm:$0xff]
      %v488 = vld [vmem:[#allocation2 + $0x4a] sm:$0xff]
      %v489 = vld [vmem:[#allocation2 + $0x52] sm:$0xff]
      %v490 = vld [vmem:[#allocation2 + $0x5a] sm:$0xff]
      %v491 = vld [vmem:[#allocation2 + $0x62] sm:$0xff]
      %v492 = vld [vmem:[#allocation2 + $0x6a] sm:$0xff]
      %v493 = vld [vmem:[#allocation2 + $0x72] sm:$0xff]
      %v494 = vld [vmem:[#allocation2 + $0x7a] sm:$0xff]
      %v495 = vld [vmem:[#allocation2 + $0x82] sm:$0xff]
      %v496 = vld [vmem:[#allocation2 + $0x8a] sm:$0xff]
      %v497 = vld [vmem:[#allocation2 + $0x92] sm:$0xff]
      %v498 = vld [vmem:[#allocation2 + $0x9a] sm:$0xff]
      %v499 = vld [vmem:[#allocation2 + $0xa2] sm:$0xff]
      %v500 = vld [vmem:[#allocation2 + $0xaa] sm:$0xff]
      %v501 = vld [vmem:[#allocation2 + $0xb2] sm:$0xff]
      %v502 = vld [vmem:[#allocation2 + $0xba] sm:$0xff]
      %v503 = vld [vmem:[#allocation2 + $0xc2] sm:$0xff]
      %v504 = vld [vmem:[#allocation2 + $0xca] sm:$0xff]
      %v505 = vld [vmem:[#allocation2 + $0xd2] sm:$0xff]
      %v506 = vld [vmem:[#allocation2 + $0xda] sm:$0xff]
      %v507 = vld [vmem:[#allocation2 + $0xe2] sm:$0xff]
      %v508 = vld [vmem:[#allocation2 + $0xea] sm:$0xff]
      %v509 = vld [vmem:[#allocation2 + $0xf2] sm:$0xff]
      %v510 = vld [vmem:[#allocation2 + $0xfa] sm:$0xff]
      %v511 = vld [vmem:[#allocation2 + $0x102] sm:$0xff]
      %v512 = vld [vmem:[#allocation2 + $0x10a] sm:$0xff]
      %v513 = vld [vmem:[#allocation2 + $0x112] sm:$0xff]
      %v514 = vld [vmem:[#allocation2 + $0x11a] sm:$0xff]
      %v515 = vld [vmem:[#allocation2 + $0x122] sm:$0xff]
      %v516 = vld [vmem:[#allocation2 + $0x12a] sm:$0xff]
      %v517 = vld [vmem:[#allocation2 + $0x132] sm:$0xff]
      %v518 = vld [vmem:[#allocation2 + $0x13a] sm:$0xff]
      %v519 = vld [vmem:[#allocation2 + $0x142] sm:$0xff]
      %v520 = vld [vmem:[#allocation2 + $0x14a] sm:$0xff]
      %v521 = vld [vmem:[#allocation2 + $0x152] sm:$0xff]
      %v522 = vld [vmem:[#allocation2 + $0x15a] sm:$0xff]
      %v523 = vld [vmem:[#allocation2 + $0x162] sm:$0xff]
      %v524 = vld [vmem:[#allocation2 + $0x16a] sm:$0xff]
      %v525 = vld [vmem:[#allocation2 + $0x172] sm:$0xff]
      %v526 = vld [vmem:[#allocation2 + $0x13] sm:$0xff]
      %v527 = vld [vmem:[#allocation2 + $0x1b] sm:$0xff]
      %v528 = vld [vmem:[#allocation2 + $0x23] sm:$0xff]
      %v529 = vld [vmem:[#allocation2 + $0x2b] sm:$0xff]
      %v530 = vld [vmem:[#allocation2 + $0x33] sm:$0xff]
      %v531 = vld [vmem:[#allocation2 + $0x3b] sm:$0xff]
      %v532 = vld [vmem:[#allocation2 + $0x43] sm:$0xff]
      %v533 = vld [vmem:[#allocation2 + $0x4b] sm:$0xff]
      %v534 = vld [vmem:[#allocation2 + $0x53] sm:$0xff]
      %v535 = vld [vmem:[#allocation2 + $0x5b] sm:$0xff]
      %v536 = vld [vmem:[#allocation2 + $0x63] sm:$0xff]
      %v537 = vld [vmem:[#allocation2 + $0x6b] sm:$0xff]
      %v538 = vld [vmem:[#allocation2 + $0x73] sm:$0xff]
      %v539 = vld [vmem:[#allocation2 + $0x7b] sm:$0xff]
      %v540 = vld [vmem:[#allocation2 + $0x83] sm:$0xff]
      %v541 = vld [vmem:[#allocation2 + $0x8b] sm:$0xff]
      %v542 = vld [vmem:[#allocation2 + $0x93] sm:$0xff]
      %v543 = vld [vmem:[#allocation2 + $0x9b] sm:$0xff]
      %v544 = vld [vmem:[#allocation2 + $0xa3] sm:$0xff]
      %v545 = vld [vmem:[#allocation2 + $0xab] sm:$0xff]
      %v546 = vld [vmem:[#allocation2 + $0xb3] sm:$0xff]
      %v547 = vld [vmem:[#allocation2 + $0xbb] sm:$0xff]
      %v548 = vld [vmem:[#allocation2 + $0xc3] sm:$0xff]
      %v549 = vld [vmem:[#allocation2 + $0xcb] sm:$0xff]
      %v550 = vld [vmem:[#allocation2 + $0xd3] sm:$0xff]
      %v551 = vld [vmem:[#allocation2 + $0xdb] sm:$0xff]
      %v552 = vld [vmem:[#allocation2 + $0xe3] sm:$0xff]
      %v553 = vld [vmem:[#allocation2 + $0xeb] sm:$0xff]
      %v554 = vld [vmem:[#allocation2 + $0xf3] sm:$0xff]
      %v555 = vld [vmem:[#allocation2 + $0xfb] sm:$0xff]
      %v556 = vld [vmem:[#allocation2 + $0x103] sm:$0xff]
      %v557 = vld [vmem:[#allocation2 + $0x10b] sm:$0xff]
      %v558 = vld [vmem:[#allocation2 + $0x113] sm:$0xff]
      %v559 = vld [vmem:[#allocation2 + $0x11b] sm:$0xff]
      %v560 = vld [vmem:[#allocation2 + $0x123] sm:$0xff]
      %v561 = vld [vmem:[#allocation2 + $0x12b] sm:$0xff]
      %v562 = vld [vmem:[#allocation2 + $0x133] sm:$0xff]
      %v563 = vld [vmem:[#allocation2 + $0x13b] sm:$0xff]
      %v564 = vld [vmem:[#allocation2 + $0x143] sm:$0xff]
      %v565 = vld [vmem:[#allocation2 + $0x14b] sm:$0xff]
      %v566 = vld [vmem:[#allocation2 + $0x153] sm:$0xff]
      %v567 = vld [vmem:[#allocation2 + $0x15b] sm:$0xff]
      %v568 = vld [vmem:[#allocation2 + $0x163] sm:$0xff]
      %v569 = vld [vmem:[#allocation2 + $0x16b] sm:$0xff]
      %v570 = vld [vmem:[#allocation2 + $0x173] sm:$0xff]
      %v571 = vld [vmem:[#allocation2 + $0x14] sm:$0xff]
      %v572 = vld [vmem:[#allocation2 + $0x1c] sm:$0xff]
      %v573 = vld [vmem:[#allocation2 + $0x24] sm:$0xff]
      %v574 = vld [vmem:[#allocation2 + $0x2c] sm:$0xff]
      %v575 = vld [vmem:[#allocation2 + $0x34] sm:$0xff]
      %v576 = vld [vmem:[#allocation2 + $0x3c] sm:$0xff]
      %v577 = vld [vmem:[#allocation2 + $0x44] sm:$0xff]
      %v578 = vld [vmem:[#allocation2 + $0x4c] sm:$0xff]
      %v579 = vld [vmem:[#allocation2 + $0x54] sm:$0xff]
      %v580 = vld [vmem:[#allocation2 + $0x5c] sm:$0xff]
      %v581 = vld [vmem:[#allocation2 + $0x64] sm:$0xff]
      %v582 = vld [vmem:[#allocation2 + $0x6c] sm:$0xff]
      %v583 = vld [vmem:[#allocation2 + $0x74] sm:$0xff]
      %v584 = vld [vmem:[#allocation2 + $0x7c] sm:$0xff]
      %v585 = vld [vmem:[#allocation2 + $0x84] sm:$0xff]
      %v586 = vld [vmem:[#allocation2 + $0x8c] sm:$0xff]
      %v587 = vld [vmem:[#allocation2 + $0x94] sm:$0xff]
      %v588 = vld [vmem:[#allocation2 + $0x9c] sm:$0xff]
      %v589 = vld [vmem:[#allocation2 + $0xa4] sm:$0xff]
      %v590 = vld [vmem:[#allocation2 + $0xac] sm:$0xff]
      %v591 = vld [vmem:[#allocation2 + $0xb4] sm:$0xff]
      %v592 = vld [vmem:[#allocation2 + $0xbc] sm:$0xff]
      %v593 = vld [vmem:[#allocation2 + $0xc4] sm:$0xff]
      %v594 = vld [vmem:[#allocation2 + $0xcc] sm:$0xff]
      %v595 = vld [vmem:[#allocation2 + $0xd4] sm:$0xff]
      %v596 = vld [vmem:[#allocation2 + $0xdc] sm:$0xff]
      %v597 = vld [vmem:[#allocation2 + $0xe4] sm:$0xff]
      %v598 = vld [vmem:[#allocation2 + $0xec] sm:$0xff]
      %v599 = vld [vmem:[#allocation2 + $0xf4] sm:$0xff]
      %v600 = vld [vmem:[#allocation2 + $0xfc] sm:$0xff]
      %v601 = vld [vmem:[#allocation2 + $0x104] sm:$0xff]
      %v602 = vld [vmem:[#allocation2 + $0x10c] sm:$0xff]
      %v603 = vld [vmem:[#allocation2 + $0x114] sm:$0xff]
      %v604 = vld [vmem:[#allocation2 + $0x11c] sm:$0xff]
      %v605 = vld [vmem:[#allocation2 + $0x124] sm:$0xff]
      %v606 = vld [vmem:[#allocation2 + $0x12c] sm:$0xff]
      %v607 = vld [vmem:[#allocation2 + $0x134] sm:$0xff]
      %v608 = vld [vmem:[#allocation2 + $0x13c] sm:$0xff]
      %v609 = vld [vmem:[#allocation2 + $0x144] sm:$0xff]
      %v610 = vld [vmem:[#allocation2 + $0x14c] sm:$0xff]
      %v611 = vld [vmem:[#allocation2 + $0x154] sm:$0xff]
      %v612 = vld [vmem:[#allocation2 + $0x15c] sm:$0xff]
      %v613 = vld [vmem:[#allocation2 + $0x164] sm:$0xff]
      %v614 = vld [vmem:[#allocation2 + $0x16c] sm:$0xff]
      %v615 = vld [vmem:[#allocation2 + $0x174] sm:$0xff]
      %v616 = vld [vmem:[#allocation2 + $0x17c] sm:$0xff]
      %v617 = vld [vmem:[#allocation2 + $0x184] sm:$0xff]
      %v618 = vld [vmem:[#allocation2 + $0x25] sm:$0xff]
      %v619 = vld [vmem:[#allocation2 + $0x2d] sm:$0xff]
      %v620 = vld [vmem:[#allocation2 + $0x35] sm:$0xff]
      %v621 = vld [vmem:[#allocation2 + $0x3d] sm:$0xff]
      %v622 = vld [vmem:[#allocation2 + $0x45] sm:$0xff]
      %v623 = vld [vmem:[#allocation2 + $0x4d] sm:$0xff]
      %v624 = vld [vmem:[#allocation2 + $0x55] sm:$0xff]
      %v625 = vld [vmem:[#allocation2 + $0x5d] sm:$0xff]
      %v626 = vld [vmem:[#allocation2 + $0x65] sm:$0xff]
      %v627 = vld [vmem:[#allocation2 + $0x6d] sm:$0xff]
      %v628 = vld [vmem:[#allocation2 + $0x75] sm:$0xff]
      %v629 = vld [vmem:[#allocation2 + $0x7d] sm:$0xff]
      %v630 = vld [vmem:[#allocation2 + $0x85] sm:$0xff]
      %v631 = vld [vmem:[#allocation2 + $0x8d] sm:$0xff]
      %v632 = vld [vmem:[#allocation2 + $0x95] sm:$0xff]
      %v633 = vld [vmem:[#allocation2 + $0x9d] sm:$0xff]
      %v634 = vld [vmem:[#allocation2 + $0xa5] sm:$0xff]
      %v635 = vld [vmem:[#allocation2 + $0xad] sm:$0xff]
      %v636 = vld [vmem:[#allocation2 + $0xb5] sm:$0xff]
      %v637 = vld [vmem:[#allocation2 + $0xbd] sm:$0xff]
      %v638 = vld [vmem:[#allocation2 + $0xc5] sm:$0xff]
      %v639 = vld [vmem:[#allocation2 + $0xcd] sm:$0xff]
      %v640 = vld [vmem:[#allocation2 + $0xd5] sm:$0xff]
      %v641 = vld [vmem:[#allocation2 + $0xdd] sm:$0xff]
      %v642 = vld [vmem:[#allocation2 + $0xe5] sm:$0xff]
      %v643 = vld [vmem:[#allocation2 + $0xed] sm:$0xff]
      %v644 = vld [vmem:[#allocation2 + $0xf5] sm:$0xff]
      %v645 = vld [vmem:[#allocation2 + $0xfd] sm:$0xff]
      %v646 = vld [vmem:[#allocation2 + $0x105] sm:$0xff]
      %v647 = vld [vmem:[#allocation2 + $0x10d] sm:$0xff]
      %v648 = vld [vmem:[#allocation2 + $0x115] sm:$0xff]
      %v649 = vld [vmem:[#allocation2 + $0x11d] sm:$0xff]
      %v650 = vld [vmem:[#allocation2 + $0x125] sm:$0xff]
      %v651 = vld [vmem:[#allocation2 + $0x12d] sm:$0xff]
      %v652 = vld [vmem:[#allocation2 + $0x135] sm:$0xff]
      %v653 = vld [vmem:[#allocation2 + $0x13d] sm:$0xff]
      %v654 = vld [vmem:[#allocation2 + $0x145] sm:$0xff]
      %v655 = vld [vmem:[#allocation2 + $0x14d] sm:$0xff]
      %v656 = vld [vmem:[#allocation2 + $0x155] sm:$0xff]
      %v657 = vld [vmem:[#allocation2 + $0x15d] sm:$0xff]
      %v658 = vld [vmem:[#allocation2 + $0x165] sm:$0xff]
      %v659 = vld [vmem:[#allocation2 + $0x16d] sm:$0xff]
      %v660 = vld [vmem:[#allocation2 + $0x175] sm:$0xff]
      %v661 = vld [vmem:[#allocation2 + $0x17d] sm:$0xff]
      %v662 = vld [vmem:[#allocation2 + $0x185] sm:$0xff]
      %v663 = vld [vmem:[#allocation2 + $0x26] sm:$0xff]
      %v664 = vld [vmem:[#allocation2 + $0x2e] sm:$0xff]
      %v665 = vld [vmem:[#allocation2 + $0x36] sm:$0xff]
      %v666 = vld [vmem:[#allocation2 + $0x3e] sm:$0xff]
      %v667 = vld [vmem:[#allocation2 + $0x46] sm:$0xff]
      %v668 = vld [vmem:[#allocation2 + $0x4e] sm:$0xff]
      %v669 = vld [vmem:[#allocation2 + $0x56] sm:$0xff]
      %v670 = vld [vmem:[#allocation2 + $0x5e] sm:$0xff]
      %v671 = vld [vmem:[#allocation2 + $0x66] sm:$0xff]
      %v672 = vld [vmem:[#allocation2 + $0x6e] sm:$0xff]
      %v673 = vld [vmem:[#allocation2 + $0x76] sm:$0xff]
      %v674 = vld [vmem:[#allocation2 + $0x7e] sm:$0xff]
      %v675 = vld [vmem:[#allocation2 + $0x86] sm:$0xff]
      %v676 = vld [vmem:[#allocation2 + $0x8e] sm:$0xff]
      %v677 = vld [vmem:[#allocation2 + $0x96] sm:$0xff]
      %v678 = vld [vmem:[#allocation2 + $0x9e] sm:$0xff]
      %v679 = vld [vmem:[#allocation2 + $0xa6] sm:$0xff]
      %v680 = vld [vmem:[#allocation2 + $0xae] sm:$0xff]
      %v681 = vld [vmem:[#allocation2 + $0xb6] sm:$0xff]
      %v682 = vld [vmem:[#allocation2 + $0xbe] sm:$0xff]
      %v683 = vld [vmem:[#allocation2 + $0xc6] sm:$0xff]
      %v684 = vld [vmem:[#allocation2 + $0xce] sm:$0xff]
      %v685 = vld [vmem:[#allocation2 + $0xd6] sm:$0xff]
      %v686 = vld [vmem:[#allocation2 + $0xde] sm:$0xff]
      %v687 = vld [vmem:[#allocation2 + $0xe6] sm:$0xff]
      %v688 = vld [vmem:[#allocation2 + $0xee] sm:$0xff]
      %v689 = vld [vmem:[#allocation2 + $0xf6] sm:$0xff]
      %v690 = vld [vmem:[#allocation2 + $0xfe] sm:$0xff]
      %v691 = vld [vmem:[#allocation2 + $0x106] sm:$0xff]
      %v692 = vld [vmem:[#allocation2 + $0x10e] sm:$0xff]
      %v693 = vld [vmem:[#allocation2 + $0x116] sm:$0xff]
      %v694 = vld [vmem:[#allocation2 + $0x11e] sm:$0xff]
      %v695 = vld [vmem:[#allocation2 + $0x126] sm:$0xff]
      %v696 = vld [vmem:[#allocation2 + $0x12e] sm:$0xff]
      %v697 = vld [vmem:[#allocation2 + $0x136] sm:$0xff]
      %v698 = vld [vmem:[#allocation2 + $0x13e] sm:$0xff]
      %v699 = vld [vmem:[#allocation2 + $0x146] sm:$0xff]
      %v700 = vld [vmem:[#allocation2 + $0x14e] sm:$0xff]
      %v701 = vld [vmem:[#allocation2 + $0x156] sm:$0xff]
      %v702 = vld [vmem:[#allocation2 + $0x15e] sm:$0xff]
      %v703 = vld [vmem:[#allocation2 + $0x166] sm:$0xff]
      %v704 = vld [vmem:[#allocation2 + $0x16e] sm:$0xff]
      %v705 = vld [vmem:[#allocation2 + $0x176] sm:$0xff]
      %v706 = vld [vmem:[#allocation2 + $0x17e] sm:$0xff]
      %v707 = vld [vmem:[#allocation2 + $0x186] sm:$0xff]
      %753 = vrot.lane.b32.xlu0 %v434, 4
      %v754 = vpop.permute.xlu0 %753
      %755 = vrot.lane.b32.xlu0 %v435, 4
      %v756 = vpop.permute.xlu0 %755
      %757 = vrot.lane.b32.xlu0 %v436, 4
      %v758 = vpop.permute.xlu0 %757
      %759 = vrot.lane.b32.xlu0 %v437, 4
      %v760 = vpop.permute.xlu0 %759
      %761 = vrot.lane.b32.xlu0 %v438, 4
      %v762 = vpop.permute.xlu0 %761
      %763 = vrot.lane.b32.xlu0 %v439, 4
      %v764 = vpop.permute.xlu0 %763
      %765 = vrot.lane.b32.xlu0 %v440, 4
      %v766 = vpop.permute.xlu0 %765
      %767 = vrot.lane.b32.xlu0 %v441, 4
      %v768 = vpop.permute.xlu0 %767
      %769 = vrot.lane.b32.xlu0 %v442, 4
      %v770 = vpop.permute.xlu0 %769
      %771 = vrot.lane.b32.xlu0 %v443, 4
      %v772 = vpop.permute.xlu0 %771
      %773 = vrot.lane.b32.xlu0 %v444, 4
      %v774 = vpop.permute.xlu0 %773
      %775 = vrot.lane.b32.xlu0 %v445, 4
      %v776 = vpop.permute.xlu0 %775
      %777 = vrot.lane.b32.xlu0 %v446, 4
      %v778 = vpop.permute.xlu0 %777
      %779 = vrot.lane.b32.xlu0 %v447, 4
      %v780 = vpop.permute.xlu0 %779
      %781 = vrot.lane.b32.xlu0 %v448, 4
      %v782 = vpop.permute.xlu0 %781
      %783 = vrot.lane.b32.xlu0 %v449, 4
      %v784 = vpop.permute.xlu0 %783
      %785 = vrot.lane.b32.xlu0 %v450, 4
      %v786 = vpop.permute.xlu0 %785
      %787 = vrot.lane.b32.xlu0 %v451, 4
      %v788 = vpop.permute.xlu0 %787
      %789 = vrot.lane.b32.xlu0 %v452, 4
      %v790 = vpop.permute.xlu0 %789
      %791 = vrot.lane.b32.xlu0 %v453, 4
      %v792 = vpop.permute.xlu0 %791
      %793 = vrot.lane.b32.xlu0 %v454, 4
      %v794 = vpop.permute.xlu0 %793
      %795 = vrot.lane.b32.xlu0 %v455, 4
      %v796 = vpop.permute.xlu0 %795
      %797 = vrot.lane.b32.xlu0 %v456, 4
      %v798 = vpop.permute.xlu0 %797
      %799 = vrot.lane.b32.xlu0 %v457, 4
      %v800 = vpop.permute.xlu0 %799
      %801 = vrot.lane.b32.xlu0 %v458, 4
      %v802 = vpop.permute.xlu0 %801
      %803 = vrot.lane.b32.xlu0 %v459, 4
      %v804 = vpop.permute.xlu0 %803
      %805 = vrot.lane.b32.xlu0 %v460, 4
      %v806 = vpop.permute.xlu0 %805
      %807 = vrot.lane.b32.xlu0 %v461, 4
      %v808 = vpop.permute.xlu0 %807
      %809 = vrot.lane.b32.xlu0 %v462, 4
      %v810 = vpop.permute.xlu0 %809
      %811 = vrot.lane.b32.xlu0 %v463, 4
      %v812 = vpop.permute.xlu0 %811
      %813 = vrot.lane.b32.xlu0 %v464, 4
      %v814 = vpop.permute.xlu0 %813
      %815 = vrot.lane.b32.xlu0 %v465, 4
      %v816 = vpop.permute.xlu0 %815
      %817 = vrot.lane.b32.xlu0 %v466, 4
      %v818 = vpop.permute.xlu0 %817
      %819 = vrot.lane.b32.xlu0 %v467, 4
      %v820 = vpop.permute.xlu0 %819
      %821 = vrot.lane.b32.xlu0 %v468, 4
      %v822 = vpop.permute.xlu0 %821
      %823 = vrot.lane.b32.xlu0 %v469, 4
      %v824 = vpop.permute.xlu0 %823
      %825 = vrot.lane.b32.xlu0 %v470, 4
      %v826 = vpop.permute.xlu0 %825
      %827 = vrot.lane.b32.xlu0 %v471, 4
      %v828 = vpop.permute.xlu0 %827
      %829 = vrot.lane.b32.xlu0 %v472, 4
      %v830 = vpop.permute.xlu0 %829
      %831 = vrot.lane.b32.xlu0 %v473, 4
      %v832 = vpop.permute.xlu0 %831
      %833 = vrot.lane.b32.xlu0 %v474, 4
      %v834 = vpop.permute.xlu0 %833
      %835 = vrot.lane.b32.xlu0 %v475, 4
      %v836 = vpop.permute.xlu0 %835
      %837 = vrot.lane.b32.xlu0 %v476, 4
      %v838 = vpop.permute.xlu0 %837
      %839 = vrot.lane.b32.xlu0 %v477, 4
      %v840 = vpop.permute.xlu0 %839
      %841 = vrot.lane.b32.xlu0 %v478, 4
      %v842 = vpop.permute.xlu0 %841
      %933 = vrot.lane.b32.xlu0 %v479, 8
      %v934 = vpop.permute.xlu0 %933
      %935 = vrot.lane.b32.xlu0 %v480, 8
      %v936 = vpop.permute.xlu0 %935
      %937 = vrot.lane.b32.xlu0 %v481, 8
      %v938 = vpop.permute.xlu0 %937
      %939 = vrot.lane.b32.xlu0 %v482, 8
      %v940 = vpop.permute.xlu0 %939
      %941 = vrot.lane.b32.xlu0 %v483, 8
      %v942 = vpop.permute.xlu0 %941
      %943 = vrot.lane.b32.xlu0 %v484, 8
      %v944 = vpop.permute.xlu0 %943
      %945 = vrot.lane.b32.xlu0 %v485, 8
      %v946 = vpop.permute.xlu0 %945
      %947 = vrot.lane.b32.xlu0 %v486, 8
      %v948 = vpop.permute.xlu0 %947
      %949 = vrot.lane.b32.xlu0 %v487, 8
      %v950 = vpop.permute.xlu0 %949
      %951 = vrot.lane.b32.xlu0 %v488, 8
      %v952 = vpop.permute.xlu0 %951
      %953 = vrot.lane.b32.xlu0 %v489, 8
      %v954 = vpop.permute.xlu0 %953
      %955 = vrot.lane.b32.xlu0 %v490, 8
      %v956 = vpop.permute.xlu0 %955
      %957 = vrot.lane.b32.xlu0 %v491, 8
      %v958 = vpop.permute.xlu0 %957
      %959 = vrot.lane.b32.xlu0 %v492, 8
      %v960 = vpop.permute.xlu0 %959
      %961 = vrot.lane.b32.xlu0 %v493, 8
      %v962 = vpop.permute.xlu0 %961
      %963 = vrot.lane.b32.xlu0 %v494, 8
      %v964 = vpop.permute.xlu0 %963
      %965 = vrot.lane.b32.xlu0 %v495, 8
      %v966 = vpop.permute.xlu0 %965
      %967 = vrot.lane.b32.xlu0 %v496, 8
      %v968 = vpop.permute.xlu0 %967
      %969 = vrot.lane.b32.xlu0 %v497, 8
      %v970 = vpop.permute.xlu0 %969
      %971 = vrot.lane.b32.xlu0 %v498, 8
      %v972 = vpop.permute.xlu0 %971
      %973 = vrot.lane.b32.xlu0 %v499, 8
      %v974 = vpop.permute.xlu0 %973
      %975 = vrot.lane.b32.xlu0 %v500, 8
      %v976 = vpop.permute.xlu0 %975
      %977 = vrot.lane.b32.xlu0 %v501, 8
      %v978 = vpop.permute.xlu0 %977
      %979 = vrot.lane.b32.xlu0 %v502, 8
      %v980 = vpop.permute.xlu0 %979
      %981 = vrot.lane.b32.xlu0 %v503, 8
      %v982 = vpop.permute.xlu0 %981
      %983 = vrot.lane.b32.xlu0 %v504, 8
      %v984 = vpop.permute.xlu0 %983
      %985 = vrot.lane.b32.xlu0 %v505, 8
      %v986 = vpop.permute.xlu0 %985
      %987 = vrot.lane.b32.xlu0 %v506, 8
      %v988 = vpop.permute.xlu0 %987
      %989 = vrot.lane.b32.xlu0 %v507, 8
      %v990 = vpop.permute.xlu0 %989
      %991 = vrot.lane.b32.xlu0 %v508, 8
      %v992 = vpop.permute.xlu0 %991
      %993 = vrot.lane.b32.xlu0 %v509, 8
      %v994 = vpop.permute.xlu0 %993
      %995 = vrot.lane.b32.xlu0 %v510, 8
      %v996 = vpop.permute.xlu0 %995
      %997 = vrot.lane.b32.xlu0 %v511, 8
      %v998 = vpop.permute.xlu0 %997
      %999 = vrot.lane.b32.xlu0 %v512, 8
      %v1000 = vpop.permute.xlu0 %999
      %1001 = vrot.lane.b32.xlu0 %v513, 8
      %v1002 = vpop.permute.xlu0 %1001
      %1003 = vrot.lane.b32.xlu0 %v514, 8
      %v1004 = vpop.permute.xlu0 %1003
      %1005 = vrot.lane.b32.xlu0 %v515, 8
      %v1006 = vpop.permute.xlu0 %1005
      %1007 = vrot.lane.b32.xlu0 %v516, 8
      %v1008 = vpop.permute.xlu0 %1007
      %1009 = vrot.lane.b32.xlu0 %v517, 8
      %v1010 = vpop.permute.xlu0 %1009
      %1011 = vrot.lane.b32.xlu0 %v518, 8
      %v1012 = vpop.permute.xlu0 %1011
      %1013 = vrot.lane.b32.xlu0 %v519, 8
      %v1014 = vpop.permute.xlu0 %1013
      %1015 = vrot.lane.b32.xlu0 %v520, 8
      %v1016 = vpop.permute.xlu0 %1015
      %1017 = vrot.lane.b32.xlu0 %v521, 8
      %v1018 = vpop.permute.xlu0 %1017
      %1019 = vrot.lane.b32.xlu0 %v522, 8
      %v1020 = vpop.permute.xlu0 %1019
      %1021 = vrot.lane.b32.xlu0 %v523, 8
      %v1022 = vpop.permute.xlu0 %1021
      %1070 = vrot.lane.b32.xlu0 %v481, 12
      %v1071 = vpop.permute.xlu0 %1070
      %1072 = vrot.lane.b32.xlu0 %v482, 12
      %v1073 = vpop.permute.xlu0 %1072
      %1074 = vrot.lane.b32.xlu0 %v483, 12
      %v1075 = vpop.permute.xlu0 %1074
      %1076 = vrot.lane.b32.xlu0 %v484, 12
      %v1077 = vpop.permute.xlu0 %1076
      %1078 = vrot.lane.b32.xlu0 %v485, 12
      %v1079 = vpop.permute.xlu0 %1078
      %1080 = vrot.lane.b32.xlu0 %v486, 12
      %v1081 = vpop.permute.xlu0 %1080
      %1082 = vrot.lane.b32.xlu0 %v487, 12
      %v1083 = vpop.permute.xlu0 %1082
      %1084 = vrot.lane.b32.xlu0 %v488, 12
      %v1085 = vpop.permute.xlu0 %1084
      %1086 = vrot.lane.b32.xlu0 %v489, 12
      %v1087 = vpop.permute.xlu0 %1086
      %1088 = vrot.lane.b32.xlu0 %v490, 12
      %v1089 = vpop.permute.xlu0 %1088
      %1090 = vrot.lane.b32.xlu0 %v491, 12
      %v1091 = vpop.permute.xlu0 %1090
      %1092 = vrot.lane.b32.xlu0 %v492, 12
      %v1093 = vpop.permute.xlu0 %1092
      %1094 = vrot.lane.b32.xlu0 %v493, 12
      %v1095 = vpop.permute.xlu0 %1094
      %1096 = vrot.lane.b32.xlu0 %v494, 12
      %v1097 = vpop.permute.xlu0 %1096
      %1098 = vrot.lane.b32.xlu0 %v495, 12
      %v1099 = vpop.permute.xlu0 %1098
      %1100 = vrot.lane.b32.xlu0 %v496, 12
      %v1101 = vpop.permute.xlu0 %1100
      %1102 = vrot.lane.b32.xlu0 %v497, 12
      %v1103 = vpop.permute.xlu0 %1102
      %1104 = vrot.lane.b32.xlu0 %v498, 12
      %v1105 = vpop.permute.xlu0 %1104
      %1106 = vrot.lane.b32.xlu0 %v499, 12
      %v1107 = vpop.permute.xlu0 %1106
      %1108 = vrot.lane.b32.xlu0 %v500, 12
      %v1109 = vpop.permute.xlu0 %1108
      %1110 = vrot.lane.b32.xlu0 %v501, 12
      %v1111 = vpop.permute.xlu0 %1110
      %1112 = vrot.lane.b32.xlu0 %v502, 12
      %v1113 = vpop.permute.xlu0 %1112
      %1114 = vrot.lane.b32.xlu0 %v503, 12
      %v1115 = vpop.permute.xlu0 %1114
      %1116 = vrot.lane.b32.xlu0 %v504, 12
      %v1117 = vpop.permute.xlu0 %1116
      %1118 = vrot.lane.b32.xlu0 %v505, 12
      %v1119 = vpop.permute.xlu0 %1118
      %1120 = vrot.lane.b32.xlu0 %v506, 12
      %v1121 = vpop.permute.xlu0 %1120
      %1122 = vrot.lane.b32.xlu0 %v507, 12
      %v1123 = vpop.permute.xlu0 %1122
      %1124 = vrot.lane.b32.xlu0 %v508, 12
      %v1125 = vpop.permute.xlu0 %1124
      %1126 = vrot.lane.b32.xlu0 %v509, 12
      %v1127 = vpop.permute.xlu0 %1126
      %1128 = vrot.lane.b32.xlu0 %v510, 12
      %v1129 = vpop.permute.xlu0 %1128
      %1130 = vrot.lane.b32.xlu0 %v511, 12
      %v1131 = vpop.permute.xlu0 %1130
      %1132 = vrot.lane.b32.xlu0 %v512, 12
      %v1133 = vpop.permute.xlu0 %1132
      %1134 = vrot.lane.b32.xlu0 %v513, 12
      %v1135 = vpop.permute.xlu0 %1134
      %1136 = vrot.lane.b32.xlu0 %v514, 12
      %v1137 = vpop.permute.xlu0 %1136
      %1138 = vrot.lane.b32.xlu0 %v515, 12
      %v1139 = vpop.permute.xlu0 %1138
      %1140 = vrot.lane.b32.xlu0 %v516, 12
      %v1141 = vpop.permute.xlu0 %1140
      %1142 = vrot.lane.b32.xlu0 %v517, 12
      %v1143 = vpop.permute.xlu0 %1142
      %1144 = vrot.lane.b32.xlu0 %v518, 12
      %v1145 = vpop.permute.xlu0 %1144
      %1146 = vrot.lane.b32.xlu0 %v519, 12
      %v1147 = vpop.permute.xlu0 %1146
      %1148 = vrot.lane.b32.xlu0 %v520, 12
      %v1149 = vpop.permute.xlu0 %1148
      %1150 = vrot.lane.b32.xlu0 %v521, 12
      %v1151 = vpop.permute.xlu0 %1150
      %1152 = vrot.lane.b32.xlu0 %v522, 12
      %v1153 = vpop.permute.xlu0 %1152
      %1154 = vrot.lane.b32.xlu0 %v523, 12
      %v1155 = vpop.permute.xlu0 %1154
      %1156 = vrot.lane.b32.xlu0 %v524, 12
      %v1157 = vpop.permute.xlu0 %1156
      %1158 = vrot.lane.b32.xlu0 %v525, 12
      %v1159 = vpop.permute.xlu0 %1158
      %1250 = vrot.lane.b32.xlu0 %v526, 16
      %v1251 = vpop.permute.xlu0 %1250
      %1252 = vrot.lane.b32.xlu0 %v527, 16
      %v1253 = vpop.permute.xlu0 %1252
      %1254 = vrot.lane.b32.xlu0 %v528, 16
      %v1255 = vpop.permute.xlu0 %1254
      %1256 = vrot.lane.b32.xlu0 %v529, 16
      %v1257 = vpop.permute.xlu0 %1256
      %1258 = vrot.lane.b32.xlu0 %v530, 16
      %v1259 = vpop.permute.xlu0 %1258
      %1260 = vrot.lane.b32.xlu0 %v531, 16
      %v1261 = vpop.permute.xlu0 %1260
      %1262 = vrot.lane.b32.xlu0 %v532, 16
      %v1263 = vpop.permute.xlu0 %1262
      %1264 = vrot.lane.b32.xlu0 %v533, 16
      %v1265 = vpop.permute.xlu0 %1264
      %1266 = vrot.lane.b32.xlu0 %v534, 16
      %v1267 = vpop.permute.xlu0 %1266
      %1268 = vrot.lane.b32.xlu0 %v535, 16
      %v1269 = vpop.permute.xlu0 %1268
      %1270 = vrot.lane.b32.xlu0 %v536, 16
      %v1271 = vpop.permute.xlu0 %1270
      %1272 = vrot.lane.b32.xlu0 %v537, 16
      %v1273 = vpop.permute.xlu0 %1272
      %1274 = vrot.lane.b32.xlu0 %v538, 16
      %v1275 = vpop.permute.xlu0 %1274
      %1276 = vrot.lane.b32.xlu0 %v539, 16
      %v1277 = vpop.permute.xlu0 %1276
      %1278 = vrot.lane.b32.xlu0 %v540, 16
      %v1279 = vpop.permute.xlu0 %1278
      %1280 = vrot.lane.b32.xlu0 %v541, 16
      %v1281 = vpop.permute.xlu0 %1280
      %1282 = vrot.lane.b32.xlu0 %v542, 16
      %v1283 = vpop.permute.xlu0 %1282
      %1284 = vrot.lane.b32.xlu0 %v543, 16
      %v1285 = vpop.permute.xlu0 %1284
      %1286 = vrot.lane.b32.xlu0 %v544, 16
      %v1287 = vpop.permute.xlu0 %1286
      %1288 = vrot.lane.b32.xlu0 %v545, 16
      %v1289 = vpop.permute.xlu0 %1288
      %1290 = vrot.lane.b32.xlu0 %v546, 16
      %v1291 = vpop.permute.xlu0 %1290
      %1292 = vrot.lane.b32.xlu0 %v547, 16
      %v1293 = vpop.permute.xlu0 %1292
      %1294 = vrot.lane.b32.xlu0 %v548, 16
      %v1295 = vpop.permute.xlu0 %1294
      %1296 = vrot.lane.b32.xlu0 %v549, 16
      %v1297 = vpop.permute.xlu0 %1296
      %1298 = vrot.lane.b32.xlu0 %v550, 16
      %v1299 = vpop.permute.xlu0 %1298
      %1300 = vrot.lane.b32.xlu0 %v551, 16
      %v1301 = vpop.permute.xlu0 %1300
      %1302 = vrot.lane.b32.xlu0 %v552, 16
      %v1303 = vpop.permute.xlu0 %1302
      %1304 = vrot.lane.b32.xlu0 %v553, 16
      %v1305 = vpop.permute.xlu0 %1304
      %1306 = vrot.lane.b32.xlu0 %v554, 16
      %v1307 = vpop.permute.xlu0 %1306
      %1308 = vrot.lane.b32.xlu0 %v555, 16
      %v1309 = vpop.permute.xlu0 %1308
      %1310 = vrot.lane.b32.xlu0 %v556, 16
      %v1311 = vpop.permute.xlu0 %1310
      %1312 = vrot.lane.b32.xlu0 %v557, 16
      %v1313 = vpop.permute.xlu0 %1312
      %1314 = vrot.lane.b32.xlu0 %v558, 16
      %v1315 = vpop.permute.xlu0 %1314
      %1316 = vrot.lane.b32.xlu0 %v559, 16
      %v1317 = vpop.permute.xlu0 %1316
      %1318 = vrot.lane.b32.xlu0 %v560, 16
      %v1319 = vpop.permute.xlu0 %1318
      %1320 = vrot.lane.b32.xlu0 %v561, 16
      %v1321 = vpop.permute.xlu0 %1320
      %1322 = vrot.lane.b32.xlu0 %v562, 16
      %v1323 = vpop.permute.xlu0 %1322
      %1324 = vrot.lane.b32.xlu0 %v563, 16
      %v1325 = vpop.permute.xlu0 %1324
      %1326 = vrot.lane.b32.xlu0 %v564, 16
      %v1327 = vpop.permute.xlu0 %1326
      %1328 = vrot.lane.b32.xlu0 %v565, 16
      %v1329 = vpop.permute.xlu0 %1328
      %1330 = vrot.lane.b32.xlu0 %v566, 16
      %v1331 = vpop.permute.xlu0 %1330
      %1332 = vrot.lane.b32.xlu0 %v567, 16
      %v1333 = vpop.permute.xlu0 %1332
      %1334 = vrot.lane.b32.xlu0 %v568, 16
      %v1335 = vpop.permute.xlu0 %1334
      %1336 = vrot.lane.b32.xlu0 %v569, 16
      %v1337 = vpop.permute.xlu0 %1336
      %1338 = vrot.lane.b32.xlu0 %v570, 16
      %v1339 = vpop.permute.xlu0 %1338
      %1430 = vrot.lane.b32.xlu0 %v571, 20
      %v1431 = vpop.permute.xlu0 %1430
      %1432 = vrot.lane.b32.xlu0 %v572, 20
      %v1433 = vpop.permute.xlu0 %1432
      %1434 = vrot.lane.b32.xlu0 %v573, 20
      %v1435 = vpop.permute.xlu0 %1434
      %1436 = vrot.lane.b32.xlu0 %v574, 20
      %v1437 = vpop.permute.xlu0 %1436
      %1438 = vrot.lane.b32.xlu0 %v575, 20
      %v1439 = vpop.permute.xlu0 %1438
      %1440 = vrot.lane.b32.xlu0 %v576, 20
      %v1441 = vpop.permute.xlu0 %1440
      %1442 = vrot.lane.b32.xlu0 %v577, 20
      %v1443 = vpop.permute.xlu0 %1442
      %1444 = vrot.lane.b32.xlu0 %v578, 20
      %v1445 = vpop.permute.xlu0 %1444
      %1446 = vrot.lane.b32.xlu0 %v579, 20
      %v1447 = vpop.permute.xlu0 %1446
      %1448 = vrot.lane.b32.xlu0 %v580, 20
      %v1449 = vpop.permute.xlu0 %1448
      %1450 = vrot.lane.b32.xlu0 %v581, 20
      %v1451 = vpop.permute.xlu0 %1450
      %1452 = vrot.lane.b32.xlu0 %v582, 20
      %v1453 = vpop.permute.xlu0 %1452
      %1454 = vrot.lane.b32.xlu0 %v583, 20
      %v1455 = vpop.permute.xlu0 %1454
      %1456 = vrot.lane.b32.xlu0 %v584, 20
      %v1457 = vpop.permute.xlu0 %1456
      %1458 = vrot.lane.b32.xlu0 %v585, 20
      %v1459 = vpop.permute.xlu0 %1458
      %1460 = vrot.lane.b32.xlu0 %v586, 20
      %v1461 = vpop.permute.xlu0 %1460
      %1462 = vrot.lane.b32.xlu0 %v587, 20
      %v1463 = vpop.permute.xlu0 %1462
      %1464 = vrot.lane.b32.xlu0 %v588, 20
      %v1465 = vpop.permute.xlu0 %1464
      %1466 = vrot.lane.b32.xlu0 %v589, 20
      %v1467 = vpop.permute.xlu0 %1466
      %1468 = vrot.lane.b32.xlu0 %v590, 20
      %v1469 = vpop.permute.xlu0 %1468
      %1470 = vrot.lane.b32.xlu0 %v591, 20
      %v1471 = vpop.permute.xlu0 %1470
      %1472 = vrot.lane.b32.xlu0 %v592, 20
      %v1473 = vpop.permute.xlu0 %1472
      %1474 = vrot.lane.b32.xlu0 %v593, 20
      %v1475 = vpop.permute.xlu0 %1474
      %1476 = vrot.lane.b32.xlu0 %v594, 20
      %v1477 = vpop.permute.xlu0 %1476
      %1478 = vrot.lane.b32.xlu0 %v595, 20
      %v1479 = vpop.permute.xlu0 %1478
      %1480 = vrot.lane.b32.xlu0 %v596, 20
      %v1481 = vpop.permute.xlu0 %1480
      %1482 = vrot.lane.b32.xlu0 %v597, 20
      %v1483 = vpop.permute.xlu0 %1482
      %1484 = vrot.lane.b32.xlu0 %v598, 20
      %v1485 = vpop.permute.xlu0 %1484
      %1486 = vrot.lane.b32.xlu0 %v599, 20
      %v1487 = vpop.permute.xlu0 %1486
      %1488 = vrot.lane.b32.xlu0 %v600, 20
      %v1489 = vpop.permute.xlu0 %1488
      %1490 = vrot.lane.b32.xlu0 %v601, 20
      %v1491 = vpop.permute.xlu0 %1490
      %1492 = vrot.lane.b32.xlu0 %v602, 20
      %v1493 = vpop.permute.xlu0 %1492
      %1494 = vrot.lane.b32.xlu0 %v603, 20
      %v1495 = vpop.permute.xlu0 %1494
      %1496 = vrot.lane.b32.xlu0 %v604, 20
      %v1497 = vpop.permute.xlu0 %1496
      %1498 = vrot.lane.b32.xlu0 %v605, 20
      %v1499 = vpop.permute.xlu0 %1498
      %1500 = vrot.lane.b32.xlu0 %v606, 20
      %v1501 = vpop.permute.xlu0 %1500
      %1502 = vrot.lane.b32.xlu0 %v607, 20
      %v1503 = vpop.permute.xlu0 %1502
      %1504 = vrot.lane.b32.xlu0 %v608, 20
      %v1505 = vpop.permute.xlu0 %1504
      %1506 = vrot.lane.b32.xlu0 %v609, 20
      %v1507 = vpop.permute.xlu0 %1506
      %1508 = vrot.lane.b32.xlu0 %v610, 20
      %v1509 = vpop.permute.xlu0 %1508
      %1510 = vrot.lane.b32.xlu0 %v611, 20
      %v1511 = vpop.permute.xlu0 %1510
      %1512 = vrot.lane.b32.xlu0 %v612, 20
      %v1513 = vpop.permute.xlu0 %1512
      %1514 = vrot.lane.b32.xlu0 %v613, 20
      %v1515 = vpop.permute.xlu0 %1514
      %1516 = vrot.lane.b32.xlu0 %v614, 20
      %v1517 = vpop.permute.xlu0 %1516
      %1518 = vrot.lane.b32.xlu0 %v615, 20
      %v1519 = vpop.permute.xlu0 %1518
      %1567 = vrot.lane.b32.xlu0 %v573, 24
      %v1568 = vpop.permute.xlu0 %1567
      %1569 = vrot.lane.b32.xlu0 %v574, 24
      %v1570 = vpop.permute.xlu0 %1569
      %1571 = vrot.lane.b32.xlu0 %v575, 24
      %v1572 = vpop.permute.xlu0 %1571
      %1573 = vrot.lane.b32.xlu0 %v576, 24
      %v1574 = vpop.permute.xlu0 %1573
      %1575 = vrot.lane.b32.xlu0 %v577, 24
      %v1576 = vpop.permute.xlu0 %1575
      %1577 = vrot.lane.b32.xlu0 %v578, 24
      %v1578 = vpop.permute.xlu0 %1577
      %1579 = vrot.lane.b32.xlu0 %v579, 24
      %v1580 = vpop.permute.xlu0 %1579
      %1581 = vrot.lane.b32.xlu0 %v580, 24
      %v1582 = vpop.permute.xlu0 %1581
      %1583 = vrot.lane.b32.xlu0 %v581, 24
      %v1584 = vpop.permute.xlu0 %1583
      %1585 = vrot.lane.b32.xlu0 %v582, 24
      %v1586 = vpop.permute.xlu0 %1585
      %1587 = vrot.lane.b32.xlu0 %v583, 24
      %v1588 = vpop.permute.xlu0 %1587
      %1589 = vrot.lane.b32.xlu0 %v584, 24
      %v1590 = vpop.permute.xlu0 %1589
      %1591 = vrot.lane.b32.xlu0 %v585, 24
      %v1592 = vpop.permute.xlu0 %1591
      %1593 = vrot.lane.b32.xlu0 %v586, 24
      %v1594 = vpop.permute.xlu0 %1593
      %1595 = vrot.lane.b32.xlu0 %v587, 24
      %v1596 = vpop.permute.xlu0 %1595
      %1597 = vrot.lane.b32.xlu0 %v588, 24
      %v1598 = vpop.permute.xlu0 %1597
      %1599 = vrot.lane.b32.xlu0 %v589, 24
      %v1600 = vpop.permute.xlu0 %1599
      %1601 = vrot.lane.b32.xlu0 %v590, 24
      %v1602 = vpop.permute.xlu0 %1601
      %1603 = vrot.lane.b32.xlu0 %v591, 24
      %v1604 = vpop.permute.xlu0 %1603
      %1605 = vrot.lane.b32.xlu0 %v592, 24
      %v1606 = vpop.permute.xlu0 %1605
      %1607 = vrot.lane.b32.xlu0 %v593, 24
      %v1608 = vpop.permute.xlu0 %1607
      %1609 = vrot.lane.b32.xlu0 %v594, 24
      %v1610 = vpop.permute.xlu0 %1609
      %1611 = vrot.lane.b32.xlu0 %v595, 24
      %v1612 = vpop.permute.xlu0 %1611
      %1613 = vrot.lane.b32.xlu0 %v596, 24
      %v1614 = vpop.permute.xlu0 %1613
      %1615 = vrot.lane.b32.xlu0 %v597, 24
      %v1616 = vpop.permute.xlu0 %1615
      %1617 = vrot.lane.b32.xlu0 %v598, 24
      %v1618 = vpop.permute.xlu0 %1617
      %1619 = vrot.lane.b32.xlu0 %v599, 24
      %v1620 = vpop.permute.xlu0 %1619
      %1621 = vrot.lane.b32.xlu0 %v600, 24
      %v1622 = vpop.permute.xlu0 %1621
      %1623 = vrot.lane.b32.xlu0 %v601, 24
      %v1624 = vpop.permute.xlu0 %1623
      %1625 = vrot.lane.b32.xlu0 %v602, 24
      %v1626 = vpop.permute.xlu0 %1625
      %1627 = vrot.lane.b32.xlu0 %v603, 24
      %v1628 = vpop.permute.xlu0 %1627
      %1629 = vrot.lane.b32.xlu0 %v604, 24
      %v1630 = vpop.permute.xlu0 %1629
      %1631 = vrot.lane.b32.xlu0 %v605, 24
      %v1632 = vpop.permute.xlu0 %1631
      %1633 = vrot.lane.b32.xlu0 %v606, 24
      %v1634 = vpop.permute.xlu0 %1633
      %1635 = vrot.lane.b32.xlu0 %v607, 24
      %v1636 = vpop.permute.xlu0 %1635
      %1637 = vrot.lane.b32.xlu0 %v608, 24
      %v1638 = vpop.permute.xlu0 %1637
      %1639 = vrot.lane.b32.xlu0 %v609, 24
      %v1640 = vpop.permute.xlu0 %1639
      %1641 = vrot.lane.b32.xlu0 %v610, 24
      %v1642 = vpop.permute.xlu0 %1641
      %1643 = vrot.lane.b32.xlu0 %v611, 24
      %v1644 = vpop.permute.xlu0 %1643
      %1645 = vrot.lane.b32.xlu0 %v612, 24
      %v1646 = vpop.permute.xlu0 %1645
      %1647 = vrot.lane.b32.xlu0 %v613, 24
      %v1648 = vpop.permute.xlu0 %1647
      %1649 = vrot.lane.b32.xlu0 %v614, 24
      %v1650 = vpop.permute.xlu0 %1649
      %1651 = vrot.lane.b32.xlu0 %v615, 24
      %v1652 = vpop.permute.xlu0 %1651
      %1653 = vrot.lane.b32.xlu0 %v616, 24
      %v1654 = vpop.permute.xlu0 %1653
      %1655 = vrot.lane.b32.xlu0 %v617, 24
      %v1656 = vpop.permute.xlu0 %1655
      %1747 = vrot.lane.b32.xlu0 %v618, 28
      %v1748 = vpop.permute.xlu0 %1747
      %1749 = vrot.lane.b32.xlu0 %v619, 28
      %v1750 = vpop.permute.xlu0 %1749
      %1751 = vrot.lane.b32.xlu0 %v620, 28
      %v1752 = vpop.permute.xlu0 %1751
      %1753 = vrot.lane.b32.xlu0 %v621, 28
      %v1754 = vpop.permute.xlu0 %1753
      %1755 = vrot.lane.b32.xlu0 %v622, 28
      %v1756 = vpop.permute.xlu0 %1755
      %1757 = vrot.lane.b32.xlu0 %v623, 28
      %v1758 = vpop.permute.xlu0 %1757
      %1759 = vrot.lane.b32.xlu0 %v624, 28
      %v1760 = vpop.permute.xlu0 %1759
      %1761 = vrot.lane.b32.xlu0 %v625, 28
      %v1762 = vpop.permute.xlu0 %1761
      %1763 = vrot.lane.b32.xlu0 %v626, 28
      %v1764 = vpop.permute.xlu0 %1763
      %1765 = vrot.lane.b32.xlu0 %v627, 28
      %v1766 = vpop.permute.xlu0 %1765
      %1767 = vrot.lane.b32.xlu0 %v628, 28
      %v1768 = vpop.permute.xlu0 %1767
      %1769 = vrot.lane.b32.xlu0 %v629, 28
      %v1770 = vpop.permute.xlu0 %1769
      %1771 = vrot.lane.b32.xlu0 %v630, 28
      %v1772 = vpop.permute.xlu0 %1771
      %1773 = vrot.lane.b32.xlu0 %v631, 28
      %v1774 = vpop.permute.xlu0 %1773
      %1775 = vrot.lane.b32.xlu0 %v632, 28
      %v1776 = vpop.permute.xlu0 %1775
      %1777 = vrot.lane.b32.xlu0 %v633, 28
      %v1778 = vpop.permute.xlu0 %1777
      %1779 = vrot.lane.b32.xlu0 %v634, 28
      %v1780 = vpop.permute.xlu0 %1779
      %1781 = vrot.lane.b32.xlu0 %v635, 28
      %v1782 = vpop.permute.xlu0 %1781
      %1783 = vrot.lane.b32.xlu0 %v636, 28
      %v1784 = vpop.permute.xlu0 %1783
      %1785 = vrot.lane.b32.xlu0 %v637, 28
      %v1786 = vpop.permute.xlu0 %1785
      %1787 = vrot.lane.b32.xlu0 %v638, 28
      %v1788 = vpop.permute.xlu0 %1787
      %1789 = vrot.lane.b32.xlu0 %v639, 28
      %v1790 = vpop.permute.xlu0 %1789
      %1791 = vrot.lane.b32.xlu0 %v640, 28
      %v1792 = vpop.permute.xlu0 %1791
      %1793 = vrot.lane.b32.xlu0 %v641, 28
      %v1794 = vpop.permute.xlu0 %1793
      %1795 = vrot.lane.b32.xlu0 %v642, 28
      %v1796 = vpop.permute.xlu0 %1795
      %1797 = vrot.lane.b32.xlu0 %v643, 28
      %v1798 = vpop.permute.xlu0 %1797
      %1799 = vrot.lane.b32.xlu0 %v644, 28
      %v1800 = vpop.permute.xlu0 %1799
      %1801 = vrot.lane.b32.xlu0 %v645, 28
      %v1802 = vpop.permute.xlu0 %1801
      %1803 = vrot.lane.b32.xlu0 %v646, 28
      %v1804 = vpop.permute.xlu0 %1803
      %1805 = vrot.lane.b32.xlu0 %v647, 28
      %v1806 = vpop.permute.xlu0 %1805
      %1807 = vrot.lane.b32.xlu0 %v648, 28
      %v1808 = vpop.permute.xlu0 %1807
      %1809 = vrot.lane.b32.xlu0 %v649, 28
      %v1810 = vpop.permute.xlu0 %1809
      %1811 = vrot.lane.b32.xlu0 %v650, 28
      %v1812 = vpop.permute.xlu0 %1811
      %1813 = vrot.lane.b32.xlu0 %v651, 28
      %v1814 = vpop.permute.xlu0 %1813
      %1815 = vrot.lane.b32.xlu0 %v652, 28
      %v1816 = vpop.permute.xlu0 %1815
      %1817 = vrot.lane.b32.xlu0 %v653, 28
      %v1818 = vpop.permute.xlu0 %1817
      %1819 = vrot.lane.b32.xlu0 %v654, 28
      %v1820 = vpop.permute.xlu0 %1819
      %1821 = vrot.lane.b32.xlu0 %v655, 28
      %v1822 = vpop.permute.xlu0 %1821
      %1823 = vrot.lane.b32.xlu0 %v656, 28
      %v1824 = vpop.permute.xlu0 %1823
      %1825 = vrot.lane.b32.xlu0 %v657, 28
      %v1826 = vpop.permute.xlu0 %1825
      %1827 = vrot.lane.b32.xlu0 %v658, 28
      %v1828 = vpop.permute.xlu0 %1827
      %1829 = vrot.lane.b32.xlu0 %v659, 28
      %v1830 = vpop.permute.xlu0 %1829
      %1831 = vrot.lane.b32.xlu0 %v660, 28
      %v1832 = vpop.permute.xlu0 %1831
      %1833 = vrot.lane.b32.xlu0 %v661, 28
      %v1834 = vpop.permute.xlu0 %1833
      %1835 = vrot.lane.b32.xlu0 %v662, 28
      %v1836 = vpop.permute.xlu0 %1835
      %1927 = vrot.lane.b32.xlu0 %v663, 32
      %v1928 = vpop.permute.xlu0 %1927
      %1929 = vrot.lane.b32.xlu0 %v664, 32
      %v1930 = vpop.permute.xlu0 %1929
      %1931 = vrot.lane.b32.xlu0 %v665, 32
      %v1932 = vpop.permute.xlu0 %1931
      %1933 = vrot.lane.b32.xlu0 %v666, 32
      %v1934 = vpop.permute.xlu0 %1933
      %1935 = vrot.lane.b32.xlu0 %v667, 32
      %v1936 = vpop.permute.xlu0 %1935
      %1937 = vrot.lane.b32.xlu0 %v668, 32
      %v1938 = vpop.permute.xlu0 %1937
      %1939 = vrot.lane.b32.xlu0 %v669, 32
      %v1940 = vpop.permute.xlu0 %1939
      %1941 = vrot.lane.b32.xlu0 %v670, 32
      %v1942 = vpop.permute.xlu0 %1941
      %1943 = vrot.lane.b32.xlu0 %v671, 32
      %v1944 = vpop.permute.xlu0 %1943
      %1945 = vrot.lane.b32.xlu0 %v672, 32
      %v1946 = vpop.permute.xlu0 %1945
      %1947 = vrot.lane.b32.xlu0 %v673, 32
      %v1948 = vpop.permute.xlu0 %1947
      %1949 = vrot.lane.b32.xlu0 %v674, 32
      %v1950 = vpop.permute.xlu0 %1949
      %1951 = vrot.lane.b32.xlu0 %v675, 32
      %v1952 = vpop.permute.xlu0 %1951
      %1953 = vrot.lane.b32.xlu0 %v676, 32
      %v1954 = vpop.permute.xlu0 %1953
      %1955 = vrot.lane.b32.xlu0 %v677, 32
      %v1956 = vpop.permute.xlu0 %1955
      %1957 = vrot.lane.b32.xlu0 %v678, 32
      %v1958 = vpop.permute.xlu0 %1957
      %1959 = vrot.lane.b32.xlu0 %v679, 32
      %v1960 = vpop.permute.xlu0 %1959
      %1961 = vrot.lane.b32.xlu0 %v680, 32
      %v1962 = vpop.permute.xlu0 %1961
      %1963 = vrot.lane.b32.xlu0 %v681, 32
      %v1964 = vpop.permute.xlu0 %1963
      %1965 = vrot.lane.b32.xlu0 %v682, 32
      %v1966 = vpop.permute.xlu0 %1965
      %1967 = vrot.lane.b32.xlu0 %v683, 32
      %v1968 = vpop.permute.xlu0 %1967
      %1969 = vrot.lane.b32.xlu0 %v684, 32
      %v1970 = vpop.permute.xlu0 %1969
      %1971 = vrot.lane.b32.xlu0 %v685, 32
      %v1972 = vpop.permute.xlu0 %1971
      %1973 = vrot.lane.b32.xlu0 %v686, 32
      %v1974 = vpop.permute.xlu0 %1973
      %1975 = vrot.lane.b32.xlu0 %v687, 32
      %v1976 = vpop.permute.xlu0 %1975
      %1977 = vrot.lane.b32.xlu0 %v688, 32
      %v1978 = vpop.permute.xlu0 %1977
      %1979 = vrot.lane.b32.xlu0 %v689, 32
      %v1980 = vpop.permute.xlu0 %1979
      %1981 = vrot.lane.b32.xlu0 %v690, 32
      %v1982 = vpop.permute.xlu0 %1981
      %1983 = vrot.lane.b32.xlu0 %v691, 32
      %v1984 = vpop.permute.xlu0 %1983
      %1985 = vrot.lane.b32.xlu0 %v692, 32
      %v1986 = vpop.permute.xlu0 %1985
      %1987 = vrot.lane.b32.xlu0 %v693, 32
      %v1988 = vpop.permute.xlu0 %1987
      %1989 = vrot.lane.b32.xlu0 %v694, 32
      %v1990 = vpop.permute.xlu0 %1989
      %1991 = vrot.lane.b32.xlu0 %v695, 32
      %v1992 = vpop.permute.xlu0 %1991
      %1993 = vrot.lane.b32.xlu0 %v696, 32
      %v1994 = vpop.permute.xlu0 %1993
      %1995 = vrot.lane.b32.xlu0 %v697, 32
      %v1996 = vpop.permute.xlu0 %1995
      %1997 = vrot.lane.b32.xlu0 %v698, 32
      %v1998 = vpop.permute.xlu0 %1997
      %1999 = vrot.lane.b32.xlu0 %v699, 32
      %v2000 = vpop.permute.xlu0 %1999
      %2001 = vrot.lane.b32.xlu0 %v700, 32
      %v2002 = vpop.permute.xlu0 %2001
      %2003 = vrot.lane.b32.xlu0 %v701, 32
      %v2004 = vpop.permute.xlu0 %2003
      %2005 = vrot.lane.b32.xlu0 %v702, 32
      %v2006 = vpop.permute.xlu0 %2005
      %2007 = vrot.lane.b32.xlu0 %v703, 32
      %v2008 = vpop.permute.xlu0 %2007
      %2009 = vrot.lane.b32.xlu0 %v704, 32
      %v2010 = vpop.permute.xlu0 %2009
      %2011 = vrot.lane.b32.xlu0 %v705, 32
      %v2012 = vpop.permute.xlu0 %2011
      %2013 = vrot.lane.b32.xlu0 %v706, 32
      %v2014 = vpop.permute.xlu0 %2013
      %2015 = vrot.lane.b32.xlu0 %v707, 32
      %v2016 = vpop.permute.xlu0 %2015
      %v2062 = vsel %vm328, %v389, %v754
      %v2063 = vsel %vm328, %v390, %v756
      %v2064 = vsel %vm328, %v391, %v758
      %v2065 = vsel %vm328, %v392, %v760
      %v2066 = vsel %vm328, %v393, %v762
      %v2067 = vsel %vm328, %v394, %v764
      %v2068 = vsel %vm328, %v395, %v766
      %v2069 = vsel %vm328, %v396, %v768
      %v2070 = vsel %vm328, %v397, %v770
      %v2071 = vsel %vm328, %v398, %v772
      %v2072 = vsel %vm328, %v399, %v774
      %v2073 = vsel %vm328, %v400, %v776
      %v2074 = vsel %vm328, %v401, %v778
      %v2075 = vsel %vm328, %v402, %v780
      %v2076 = vsel %vm328, %v403, %v782
      %v2077 = vsel %vm328, %v404, %v784
      %v2078 = vsel %vm328, %v405, %v786
      %v2079 = vsel %vm328, %v406, %v788
      %v2080 = vsel %vm328, %v407, %v790
      %v2081 = vsel %vm328, %v408, %v792
      %v2082 = vsel %vm328, %v409, %v794
      %v2083 = vsel %vm328, %v410, %v796
      %v2084 = vsel %vm328, %v411, %v798
      %v2085 = vsel %vm328, %v412, %v800
      %v2086 = vsel %vm328, %v413, %v802
      %v2087 = vsel %vm328, %v414, %v804
      %v2088 = vsel %vm328, %v415, %v806
      %v2089 = vsel %vm328, %v416, %v808
      %v2090 = vsel %vm328, %v417, %v810
      %v2091 = vsel %vm328, %v418, %v812
      %v2092 = vsel %vm328, %v419, %v814
      %v2093 = vsel %vm328, %v420, %v816
      %v2094 = vsel %vm328, %v421, %v818
      %v2095 = vsel %vm328, %v422, %v820
      %v2096 = vsel %vm328, %v423, %v822
      %v2097 = vsel %vm328, %v424, %v824
      %v2098 = vsel %vm328, %v425, %v826
      %v2099 = vsel %vm328, %v426, %v828
      %v2100 = vsel %vm328, %v427, %v830
      %v2101 = vsel %vm328, %v428, %v832
      %v2102 = vsel %vm328, %v429, %v834
      %v2103 = vsel %vm328, %v430, %v836
      %v2104 = vsel %vm328, %v431, %v838
      %v2105 = vsel %vm328, %v432, %v840
      %v2106 = vsel %vm328, %v433, %v842
      %vm2107 = vcmask 64512
      %v2108 = vsel %vm2107, %v2062, %v934
      %v2109 = vsel %vm2107, %v2063, %v936
      %v2110 = vsel %vm2107, %v2064, %v938
      %v2111 = vsel %vm2107, %v2065, %v940
      %v2112 = vsel %vm2107, %v2066, %v942
      %v2113 = vsel %vm2107, %v2067, %v944
      %v2114 = vsel %vm2107, %v2068, %v946
      %v2115 = vsel %vm2107, %v2069, %v948
      %v2116 = vsel %vm2107, %v2070, %v950
      %v2117 = vsel %vm2107, %v2071, %v952
      %v2118 = vsel %vm2107, %v2072, %v954
      %v2119 = vsel %vm2107, %v2073, %v956
      %v2120 = vsel %vm2107, %v2074, %v958
      %v2121 = vsel %vm2107, %v2075, %v960
      %v2122 = vsel %vm2107, %v2076, %v962
      %v2123 = vsel %vm2107, %v2077, %v964
      %v2124 = vsel %vm2107, %v2078, %v966
      %v2125 = vsel %vm2107, %v2079, %v968
      %v2126 = vsel %vm2107, %v2080, %v970
      %v2127 = vsel %vm2107, %v2081, %v972
      %v2128 = vsel %vm2107, %v2082, %v974
      %v2129 = vsel %vm2107, %v2083, %v976
      %v2130 = vsel %vm2107, %v2084, %v978
      %v2131 = vsel %vm2107, %v2085, %v980
      %v2132 = vsel %vm2107, %v2086, %v982
      %v2133 = vsel %vm2107, %v2087, %v984
      %v2134 = vsel %vm2107, %v2088, %v986
      %v2135 = vsel %vm2107, %v2089, %v988
      %v2136 = vsel %vm2107, %v2090, %v990
      %v2137 = vsel %vm2107, %v2091, %v992
      %v2138 = vsel %vm2107, %v2092, %v994
      %v2139 = vsel %vm2107, %v2093, %v996
      %v2140 = vsel %vm2107, %v2094, %v998
      %v2141 = vsel %vm2107, %v2095, %v1000
      %v2142 = vsel %vm2107, %v2096, %v1002
      %v2143 = vsel %vm2107, %v2097, %v1004
      %v2144 = vsel %vm2107, %v2098, %v1006
      %v2145 = vsel %vm2107, %v2099, %v1008
      %v2146 = vsel %vm2107, %v2100, %v1010
      %v2147 = vsel %vm2107, %v2101, %v1012
      %v2148 = vsel %vm2107, %v2102, %v1014
      %v2149 = vsel %vm2107, %v2103, %v1016
      %v2150 = vsel %vm2107, %v2104, %v1018
      %v2151 = vsel %vm2107, %v2105, %v1020
      %v2152 = vsel %vm2107, %v2106, %v1022
      %vm2153 = vcmask 97280
      %v2154 = vsel %vm2153, %v2108, %v1071
      %v2155 = vsel %vm2153, %v2109, %v1073
      %v2156 = vsel %vm2153, %v2110, %v1075
      %v2157 = vsel %vm2153, %v2111, %v1077
      %v2158 = vsel %vm2153, %v2112, %v1079
      %v2159 = vsel %vm2153, %v2113, %v1081
      %v2160 = vsel %vm2153, %v2114, %v1083
      %v2161 = vsel %vm2153, %v2115, %v1085
      %v2162 = vsel %vm2153, %v2116, %v1087
      %v2163 = vsel %vm2153, %v2117, %v1089
      %v2164 = vsel %vm2153, %v2118, %v1091
      %v2165 = vsel %vm2153, %v2119, %v1093
      %v2166 = vsel %vm2153, %v2120, %v1095
      %v2167 = vsel %vm2153, %v2121, %v1097
      %v2168 = vsel %vm2153, %v2122, %v1099
      %v2169 = vsel %vm2153, %v2123, %v1101
      %v2170 = vsel %vm2153, %v2124, %v1103
      %v2171 = vsel %vm2153, %v2125, %v1105
      %v2172 = vsel %vm2153, %v2126, %v1107
      %v2173 = vsel %vm2153, %v2127, %v1109
      %v2174 = vsel %vm2153, %v2128, %v1111
      %v2175 = vsel %vm2153, %v2129, %v1113
      %v2176 = vsel %vm2153, %v2130, %v1115
      %v2177 = vsel %vm2153, %v2131, %v1117
      %v2178 = vsel %vm2153, %v2132, %v1119
      %v2179 = vsel %vm2153, %v2133, %v1121
      %v2180 = vsel %vm2153, %v2134, %v1123
      %v2181 = vsel %vm2153, %v2135, %v1125
      %v2182 = vsel %vm2153, %v2136, %v1127
      %v2183 = vsel %vm2153, %v2137, %v1129
      %v2184 = vsel %vm2153, %v2138, %v1131
      %v2185 = vsel %vm2153, %v2139, %v1133
      %v2186 = vsel %vm2153, %v2140, %v1135
      %v2187 = vsel %vm2153, %v2141, %v1137
      %v2188 = vsel %vm2153, %v2142, %v1139
      %v2189 = vsel %vm2153, %v2143, %v1141
      %v2190 = vsel %vm2153, %v2144, %v1143
      %v2191 = vsel %vm2153, %v2145, %v1145
      %v2192 = vsel %vm2153, %v2146, %v1147
      %v2193 = vsel %vm2153, %v2147, %v1149
      %v2194 = vsel %vm2153, %v2148, %v1151
      %v2195 = vsel %vm2153, %v2149, %v1153
      %v2196 = vsel %vm2153, %v2150, %v1155
      %v2197 = vsel %vm2153, %v2151, %v1157
      %v2198 = vsel %vm2153, %v2152, %v1159
      %vm2199 = vcmask 130048
      %v2200 = vsel %vm2199, %v2154, %v1251
      %v2201 = vsel %vm2199, %v2155, %v1253
      %v2202 = vsel %vm2199, %v2156, %v1255
      %v2203 = vsel %vm2199, %v2157, %v1257
      %v2204 = vsel %vm2199, %v2158, %v1259
      %v2205 = vsel %vm2199, %v2159, %v1261
      %v2206 = vsel %vm2199, %v2160, %v1263
      %v2207 = vsel %vm2199, %v2161, %v1265
      %v2208 = vsel %vm2199, %v2162, %v1267
      %v2209 = vsel %vm2199, %v2163, %v1269
      %v2210 = vsel %vm2199, %v2164, %v1271
      %v2211 = vsel %vm2199, %v2165, %v1273
      %v2212 = vsel %vm2199, %v2166, %v1275
      %v2213 = vsel %vm2199, %v2167, %v1277
      %v2214 = vsel %vm2199, %v2168, %v1279
      %v2215 = vsel %vm2199, %v2169, %v1281
      %v2216 = vsel %vm2199, %v2170, %v1283
      %v2217 = vsel %vm2199, %v2171, %v1285
      %v2218 = vsel %vm2199, %v2172, %v1287
      %v2219 = vsel %vm2199, %v2173, %v1289
      %v2220 = vsel %vm2199, %v2174, %v1291
      %v2221 = vsel %vm2199, %v2175, %v1293
      %v2222 = vsel %vm2199, %v2176, %v1295
      %v2223 = vsel %vm2199, %v2177, %v1297
      %v2224 = vsel %vm2199, %v2178, %v1299
      %v2225 = vsel %vm2199, %v2179, %v1301
      %v2226 = vsel %vm2199, %v2180, %v1303
      %v2227 = vsel %vm2199, %v2181, %v1305
      %v2228 = vsel %vm2199, %v2182, %v1307
      %v2229 = vsel %vm2199, %v2183, %v1309
      %v2230 = vsel %vm2199, %v2184, %v1311
      %v2231 = vsel %vm2199, %v2185, %v1313
      %v2232 = vsel %vm2199, %v2186, %v1315
      %v2233 = vsel %vm2199, %v2187, %v1317
      %v2234 = vsel %vm2199, %v2188, %v1319
      %v2235 = vsel %vm2199, %v2189, %v1321
      %v2236 = vsel %vm2199, %v2190, %v1323
      %v2237 = vsel %vm2199, %v2191, %v1325
      %v2238 = vsel %vm2199, %v2192, %v1327
      %v2239 = vsel %vm2199, %v2193, %v1329
      %v2240 = vsel %vm2199, %v2194, %v1331
      %v2241 = vsel %vm2199, %v2195, %v1333
      %v2242 = vsel %vm2199, %v2196, %v1335
      %v2243 = vsel %vm2199, %v2197, %v1337
      %v2244 = vsel %vm2199, %v2198, %v1339
      %vm2245 = vcmask 162816
      %v2246 = vsel %vm2245, %v2200, %v1431
      %v2247 = vsel %vm2245, %v2201, %v1433
      %v2248 = vsel %vm2245, %v2202, %v1435
      %v2249 = vsel %vm2245, %v2203, %v1437
      %v2250 = vsel %vm2245, %v2204, %v1439
      %v2251 = vsel %vm2245, %v2205, %v1441
      %v2252 = vsel %vm2245, %v2206, %v1443
      %v2253 = vsel %vm2245, %v2207, %v1445
      %v2254 = vsel %vm2245, %v2208, %v1447
      %v2255 = vsel %vm2245, %v2209, %v1449
      %v2256 = vsel %vm2245, %v2210, %v1451
      %v2257 = vsel %vm2245, %v2211, %v1453
      %v2258 = vsel %vm2245, %v2212, %v1455
      %v2259 = vsel %vm2245, %v2213, %v1457
      %v2260 = vsel %vm2245, %v2214, %v1459
      %v2261 = vsel %vm2245, %v2215, %v1461
      %v2262 = vsel %vm2245, %v2216, %v1463
      %v2263 = vsel %vm2245, %v2217, %v1465
      %v2264 = vsel %vm2245, %v2218, %v1467
      %v2265 = vsel %vm2245, %v2219, %v1469
      %v2266 = vsel %vm2245, %v2220, %v1471
      %v2267 = vsel %vm2245, %v2221, %v1473
      %v2268 = vsel %vm2245, %v2222, %v1475
      %v2269 = vsel %vm2245, %v2223, %v1477
      %v2270 = vsel %vm2245, %v2224, %v1479
      %v2271 = vsel %vm2245, %v2225, %v1481
      %v2272 = vsel %vm2245, %v2226, %v1483
      %v2273 = vsel %vm2245, %v2227, %v1485
      %v2274 = vsel %vm2245, %v2228, %v1487
      %v2275 = vsel %vm2245, %v2229, %v1489
      %v2276 = vsel %vm2245, %v2230, %v1491
      %v2277 = vsel %vm2245, %v2231, %v1493
      %v2278 = vsel %vm2245, %v2232, %v1495
      %v2279 = vsel %vm2245, %v2233, %v1497
      %v2280 = vsel %vm2245, %v2234, %v1499
      %v2281 = vsel %vm2245, %v2235, %v1501
      %v2282 = vsel %vm2245, %v2236, %v1503
      %v2283 = vsel %vm2245, %v2237, %v1505
      %v2284 = vsel %vm2245, %v2238, %v1507
      %v2285 = vsel %vm2245, %v2239, %v1509
      %v2286 = vsel %vm2245, %v2240, %v1511
      %v2287 = vsel %vm2245, %v2241, %v1513
      %v2288 = vsel %vm2245, %v2242, %v1515
      %v2289 = vsel %vm2245, %v2243, %v1517
      %v2290 = vsel %vm2245, %v2244, %v1519
      %vm2291 = vcmask 195584
      %v2292 = vsel %vm2291, %v2246, %v1568
      %v2293 = vsel %vm2291, %v2247, %v1570
      %v2294 = vsel %vm2291, %v2248, %v1572
      %v2295 = vsel %vm2291, %v2249, %v1574
      %v2296 = vsel %vm2291, %v2250, %v1576
      %v2297 = vsel %vm2291, %v2251, %v1578
      %v2298 = vsel %vm2291, %v2252, %v1580
      %v2299 = vsel %vm2291, %v2253, %v1582
      %v2300 = vsel %vm2291, %v2254, %v1584
      %v2301 = vsel %vm2291, %v2255, %v1586
      %v2302 = vsel %vm2291, %v2256, %v1588
      %v2303 = vsel %vm2291, %v2257, %v1590
      %v2304 = vsel %vm2291, %v2258, %v1592
      %v2305 = vsel %vm2291, %v2259, %v1594
      %v2306 = vsel %vm2291, %v2260, %v1596
      %v2307 = vsel %vm2291, %v2261, %v1598
      %v2308 = vsel %vm2291, %v2262, %v1600
      %v2309 = vsel %vm2291, %v2263, %v1602
      %v2310 = vsel %vm2291, %v2264, %v1604
      %v2311 = vsel %vm2291, %v2265, %v1606
      %v2312 = vsel %vm2291, %v2266, %v1608
      %v2313 = vsel %vm2291, %v2267, %v1610
      %v2314 = vsel %vm2291, %v2268, %v1612
      %v2315 = vsel %vm2291, %v2269, %v1614
      %v2316 = vsel %vm2291, %v2270, %v1616
      %v2317 = vsel %vm2291, %v2271, %v1618
      %v2318 = vsel %vm2291, %v2272, %v1620
      %v2319 = vsel %vm2291, %v2273, %v1622
      %v2320 = vsel %vm2291, %v2274, %v1624
      %v2321 = vsel %vm2291, %v2275, %v1626
      %v2322 = vsel %vm2291, %v2276, %v1628
      %v2323 = vsel %vm2291, %v2277, %v1630
      %v2324 = vsel %vm2291, %v2278, %v1632
      %v2325 = vsel %vm2291, %v2279, %v1634
      %v2326 = vsel %vm2291, %v2280, %v1636
      %v2327 = vsel %vm2291, %v2281, %v1638
      %v2328 = vsel %vm2291, %v2282, %v1640
      %v2329 = vsel %vm2291, %v2283, %v1642
      %v2330 = vsel %vm2291, %v2284, %v1644
      %v2331 = vsel %vm2291, %v2285, %v1646
      %v2332 = vsel %vm2291, %v2286, %v1648
      %v2333 = vsel %vm2291, %v2287, %v1650
      %v2334 = vsel %vm2291, %v2288, %v1652
      %v2335 = vsel %vm2291, %v2289, %v1654
      %v2336 = vsel %vm2291, %v2290, %v1656
      %vm2337 = vcmask 228352
      %v2338 = vsel %vm2337, %v2292, %v1748
      %v2339 = vsel %vm2337, %v2293, %v1750
      %v2340 = vsel %vm2337, %v2294, %v1752
      %v2341 = vsel %vm2337, %v2295, %v1754
      %v2342 = vsel %vm2337, %v2296, %v1756
      %v2343 = vsel %vm2337, %v2297, %v1758
      %v2344 = vsel %vm2337, %v2298, %v1760
      %v2345 = vsel %vm2337, %v2299, %v1762
      %v2346 = vsel %vm2337, %v2300, %v1764
      %v2347 = vsel %vm2337, %v2301, %v1766
      %v2348 = vsel %vm2337, %v2302, %v1768
      %v2349 = vsel %vm2337, %v2303, %v1770
      %v2350 = vsel %vm2337, %v2304, %v1772
      %v2351 = vsel %vm2337, %v2305, %v1774
      %v2352 = vsel %vm2337, %v2306, %v1776
      %v2353 = vsel %vm2337, %v2307, %v1778
      %v2354 = vsel %vm2337, %v2308, %v1780
      %v2355 = vsel %vm2337, %v2309, %v1782
      %v2356 = vsel %vm2337, %v2310, %v1784
      %v2357 = vsel %vm2337, %v2311, %v1786
      %v2358 = vsel %vm2337, %v2312, %v1788
      %v2359 = vsel %vm2337, %v2313, %v1790
      %v2360 = vsel %vm2337, %v2314, %v1792
      %v2361 = vsel %vm2337, %v2315, %v1794
      %v2362 = vsel %vm2337, %v2316, %v1796
      %v2363 = vsel %vm2337, %v2317, %v1798
      %v2364 = vsel %vm2337, %v2318, %v1800
      %v2365 = vsel %vm2337, %v2319, %v1802
      %v2366 = vsel %vm2337, %v2320, %v1804
      %v2367 = vsel %vm2337, %v2321, %v1806
      %v2368 = vsel %vm2337, %v2322, %v1808
      %v2369 = vsel %vm2337, %v2323, %v1810
      %v2370 = vsel %vm2337, %v2324, %v1812
      %v2371 = vsel %vm2337, %v2325, %v1814
      %v2372 = vsel %vm2337, %v2326, %v1816
      %v2373 = vsel %vm2337, %v2327, %v1818
      %v2374 = vsel %vm2337, %v2328, %v1820
      %v2375 = vsel %vm2337, %v2329, %v1822
      %v2376 = vsel %vm2337, %v2330, %v1824
      %v2377 = vsel %vm2337, %v2331, %v1826
      %v2378 = vsel %vm2337, %v2332, %v1828
      %v2379 = vsel %vm2337, %v2333, %v1830
      %v2380 = vsel %vm2337, %v2334, %v1832
      %v2381 = vsel %vm2337, %v2335, %v1834
      %v2382 = vsel %vm2337, %v2336, %v1836
      %vm2383 = vcmask 261120
      %v2384 = vsel %vm2383, %v2338, %v1928
      %v2385 = vsel %vm2383, %v2339, %v1930
      %v2386 = vsel %vm2383, %v2340, %v1932
      %v2387 = vsel %vm2383, %v2341, %v1934
      %v2388 = vsel %vm2383, %v2342, %v1936
      %v2389 = vsel %vm2383, %v2343, %v1938
      %v2390 = vsel %vm2383, %v2344, %v1940
      %v2391 = vsel %vm2383, %v2345, %v1942
      %v2392 = vsel %vm2383, %v2346, %v1944
      %v2393 = vsel %vm2383, %v2347, %v1946
      %v2394 = vsel %vm2383, %v2348, %v1948
      %v2395 = vsel %vm2383, %v2349, %v1950
      %v2396 = vsel %vm2383, %v2350, %v1952
      %v2397 = vsel %vm2383, %v2351, %v1954
      %v2398 = vsel %vm2383, %v2352, %v1956
      %v2399 = vsel %vm2383, %v2353, %v1958
      %v2400 = vsel %vm2383, %v2354, %v1960
      %v2401 = vsel %vm2383, %v2355, %v1962
      %v2402 = vsel %vm2383, %v2356, %v1964
      %v2403 = vsel %vm2383, %v2357, %v1966
      %v2404 = vsel %vm2383, %v2358, %v1968
      %v2405 = vsel %vm2383, %v2359, %v1970
      %v2406 = vsel %vm2383, %v2360, %v1972
      %v2407 = vsel %vm2383, %v2361, %v1974
      %v2408 = vsel %vm2383, %v2362, %v1976
      %v2409 = vsel %vm2383, %v2363, %v1978
      %v2410 = vsel %vm2383, %v2364, %v1980
      %v2411 = vsel %vm2383, %v2365, %v1982
      %v2412 = vsel %vm2383, %v2366, %v1984
      %v2413 = vsel %vm2383, %v2367, %v1986
      %v2414 = vsel %vm2383, %v2368, %v1988
      %v2415 = vsel %vm2383, %v2369, %v1990
      %v2416 = vsel %vm2383, %v2370, %v1992
      %v2417 = vsel %vm2383, %v2371, %v1994
      %v2418 = vsel %vm2383, %v2372, %v1996
      %v2419 = vsel %vm2383, %v2373, %v1998
      %v2420 = vsel %vm2383, %v2374, %v2000
      %v2421 = vsel %vm2383, %v2375, %v2002
      %v2422 = vsel %vm2383, %v2376, %v2004
      %v2423 = vsel %vm2383, %v2377, %v2006
      %v2424 = vsel %vm2383, %v2378, %v2008
      %v2425 = vsel %vm2383, %v2379, %v2010
      %v2426 = vsel %vm2383, %v2380, %v2012
      %v2427 = vsel %vm2383, %v2381, %v2014
      %v2428 = vsel %vm2383, %v2382, %v2016
      %v2429 = vpack.c.bf16 %v2385, %v2384
      %v2430 = vpack.c.bf16 %v2387, %v2386
      %v2431 = vpack.c.bf16 %v2389, %v2388
      %v2432 = vpack.c.bf16 %v2391, %v2390
      %v2433 = vpack.c.bf16 %v2393, %v2392
      %v2434 = vpack.c.bf16 %v2395, %v2394
      %v2435 = vpack.c.bf16 %v2397, %v2396
      %v2436 = vpack.c.bf16 %v2399, %v2398
      %v2437 = vpack.c.bf16 %v2401, %v2400
      %v2438 = vpack.c.bf16 %v2403, %v2402
      %v2439 = vpack.c.bf16 %v2405, %v2404
      %v2440 = vpack.c.bf16 %v2407, %v2406
      %v2441 = vpack.c.bf16 %v2409, %v2408
      %v2442 = vpack.c.bf16 %v2411, %v2410
      %v2443 = vpack.c.bf16 %v2413, %v2412
      %v2444 = vpack.c.bf16 %v2415, %v2414
      %v2445 = vpack.c.bf16 %v2417, %v2416
      %v2446 = vpack.c.bf16 %v2419, %v2418
      %v2447 = vpack.c.bf16 %v2421, %v2420
      %v2448 = vpack.c.bf16 %v2423, %v2422
      %v2449 = vpack.c.bf16 %v2425, %v2424
      %v2450 = vpack.c.bf16 %v2427, %v2426
      %v2451 = vpack.c.bf16 %v2428, %v2428
      %v2452 = vld [vmem:[%s2] sm:$0xf]
      %v2453 = vld [vmem:[%s2 + $0x4] sm:$0xf]
      %v2454 = vld [vmem:[%s2 + $0x8] sm:$0xf]
      %v2455 = vld [vmem:[%s2 + $0xc] sm:$0xf]
      %v2456 = vld [vmem:[%s2 + $0x10] sm:$0x3]
      %v2457 = vld [vmem:[%s3] sm:$0x1]
      %v2459 = vlaneseq
      %v2460 = vshrl.u32 %v2459, 7
      %v2461 = vsub.s32 0, %v2460
      %v2462 = vrot.slane %v2457, %v2461
      %v2469 = vunpack.c.l.b16 %v2452
      %v2470 = vunpack.c.l.b16 %v2453
      %v2471 = vunpack.c.l.b16 %v2454
      %v2472 = vunpack.c.l.b16 %v2455
      %v2473 = vunpack.c.l.b16 %v2456
      %v2474 = vpack.c.b16 %v2470, %v2469
      %v2475 = vpack.c.b16 %v2472, %v2471
      %v2476 = vpack.c.b16 %v2473, %v2473
      %vm2479 = vcmask 293888
      %v2481 = vsel %vm2479, %v2429, 0
      %v2484 = vsel %vm2479, %v2430, 0
      %v2487 = vsel %vm2479, %v2431, 0
      %v2490 = vsel %vm2479, %v2432, 0
      %v2493 = vsel %vm2479, %v2433, 0
      %v2496 = vsel %vm2479, %v2434, 0
      %v2499 = vsel %vm2479, %v2435, 0
      %v2502 = vsel %vm2479, %v2436, 0
      %v2505 = vsel %vm2479, %v2437, 0
      %v2508 = vsel %vm2479, %v2438, 0
      %v2511 = vsel %vm2479, %v2439, 0
      %v2514 = vsel %vm2479, %v2440, 0
      %v2517 = vsel %vm2479, %v2441, 0
      %v2520 = vsel %vm2479, %v2442, 0
      %v2523 = vsel %vm2479, %v2443, 0
      %v2526 = vsel %vm2479, %v2444, 0
      %v2529 = vsel %vm2479, %v2445, 0
      %v2532 = vsel %vm2479, %v2446, 0
      %v2535 = vsel %vm2479, %v2447, 0
      %v2538 = vsel %vm2479, %v2448, 0
      %v2541 = vsel %vm2479, %v2449, 0
      %v2544 = vsel %vm2479, %v2450, 0
      %v2547 = vsel %vm2479, %v2451, 0
      %vm2549 = vcmask 1041408
      %v2551 = vsel %vm2549, %v2476, 0
      %2553 = vmatprep.subr.bf16.mxu0 0
      %2554 = vmatpush1.bf16.msra.mxu0 0
      %2555 = vmatprep.subr.bf16.mxu0 0
      %2556 = vmatpush1.bf16.msra.mxu0 0
      %2557 = vmatprep.subr.bf16.mxu0 0
      %2558 = vmatpush1.bf16.msra.mxu0 0
      %2559 = vmatprep.subr.bf16.mxu0 0
      %2560 = vmatpush1.bf16.msra.mxu0 0
      %2561 = vmatprep.subr.bf16.mxu0 0
      %2562 = vmatpush1.bf16.msra.mxu0 0
      %2563 = vmatprep.subr.bf16.mxu0 0
      %2564 = vmatpush1.bf16.msra.mxu0 %v2551
      %2565 = vmatprep.subr.bf16.mxu0 0
      %2566 = vmatpush1.bf16.msra.mxu0 %v2475
      %2567 = vmatprep.subr.bf16.mxu0 0
      %2568 = vmatpush1.bf16.msra.mxu0 %v2474
      %2569 = vmatprep.subr.bf16.mxu0 0
      %2570 = vmatpush2.bf16.msra.mxu0 0
      %2571 = vmatprep.subr.bf16.mxu0 0
      %2572 = vmatpush2.bf16.msra.mxu0 0
      %2573 = vmatprep.subr.bf16.mxu0 0
      %2574 = vmatpush2.bf16.msra.mxu0 0
      %2575 = vmatprep.subr.bf16.mxu0 0
      %2576 = vmatpush2.bf16.msra.mxu0 0
      %2577 = vmatprep.subr.bf16.mxu0 0
      %2578 = vmatpush2.bf16.msra.mxu0 0
      %2579 = vmatprep.subr.bf16.mxu0 0
      %2580 = vmatpush2.bf16.msra.mxu0 0
      %2581 = vmatprep.subr.bf16.mxu0 0
      %2582 = vmatpush2.bf16.msra.mxu0 0
      %2583 = vmatprep.subr.bf16.mxu0 0
      %2584 = vmatpush2.bf16.msra.mxu0 0
      %2585 = vmatprep.mubr.bf16.mxu0 0
      %2586 = vmatmul.mubr.bf16.gmra.mxu0 %v2481
      %v2587 = vpop.f32.mrf.mxu0
      %v2588 = vadd.f32 %v2462, %v2587
      %v2589 = vpop.f32.mrf.mxu0
      %v2590 = vpop.f32.mrf.mxu0
      %v2591 = vadd.f32 %v2462, %v2590
      %v2592 = vpop.f32.mrf.mxu0
      %2593 = vmatprep.mubr.bf16.mxu0 0
      %2594 = vmatmul.mubr.bf16.gmra.mxu0 %v2484
      %v2595 = vpop.f32.mrf.mxu0
      %v2596 = vadd.f32 %v2462, %v2595
      %v2597 = vpop.f32.mrf.mxu0
      %v2598 = vpop.f32.mrf.mxu0
      %v2599 = vadd.f32 %v2462, %v2598
      %v2600 = vpop.f32.mrf.mxu0
      %2601 = vmatprep.mubr.bf16.mxu0 0
      %2602 = vmatmul.mubr.bf16.gmra.mxu0 %v2487
      %v2603 = vpop.f32.mrf.mxu0
      %v2604 = vadd.f32 %v2462, %v2603
      %v2605 = vpop.f32.mrf.mxu0
      %v2606 = vpop.f32.mrf.mxu0
      %v2607 = vadd.f32 %v2462, %v2606
      %v2608 = vpop.f32.mrf.mxu0
      %2609 = vmatprep.mubr.bf16.mxu0 0
      %2610 = vmatmul.mubr.bf16.gmra.mxu0 %v2490
      %v2611 = vpop.f32.mrf.mxu0
      %v2612 = vadd.f32 %v2462, %v2611
      %v2613 = vpop.f32.mrf.mxu0
      %v2614 = vpop.f32.mrf.mxu0
      %v2615 = vadd.f32 %v2462, %v2614
      %v2616 = vpop.f32.mrf.mxu0
      %2617 = vmatprep.mubr.bf16.mxu0 0
      %2618 = vmatmul.mubr.bf16.gmra.mxu0 %v2493
      %v2619 = vpop.f32.mrf.mxu0
      %v2620 = vadd.f32 %v2462, %v2619
      %v2621 = vpop.f32.mrf.mxu0
      %v2622 = vpop.f32.mrf.mxu0
      %v2623 = vadd.f32 %v2462, %v2622
      %v2624 = vpop.f32.mrf.mxu0
      %2625 = vmatprep.mubr.bf16.mxu0 0
      %2626 = vmatmul.mubr.bf16.gmra.mxu0 %v2496
      %v2627 = vpop.f32.mrf.mxu0
      %v2628 = vadd.f32 %v2462, %v2627
      %v2629 = vpop.f32.mrf.mxu0
      %v2630 = vpop.f32.mrf.mxu0
      %v2631 = vadd.f32 %v2462, %v2630
      %v2632 = vpop.f32.mrf.mxu0
      %2633 = vmatprep.mubr.bf16.mxu0 0
      %2634 = vmatmul.mubr.bf16.gmra.mxu0 %v2499
      %v2635 = vpop.f32.mrf.mxu0
      %v2636 = vadd.f32 %v2462, %v2635
      %v2637 = vpop.f32.mrf.mxu0
      %v2638 = vpop.f32.mrf.mxu0
      %v2639 = vadd.f32 %v2462, %v2638
      %v2640 = vpop.f32.mrf.mxu0
      %2641 = vmatprep.mubr.bf16.mxu0 0
      %2642 = vmatmul.mubr.bf16.gmra.mxu0 %v2502
      %v2643 = vpop.f32.mrf.mxu0
      %v2644 = vadd.f32 %v2462, %v2643
      %v2645 = vpop.f32.mrf.mxu0
      %v2646 = vpop.f32.mrf.mxu0
      %v2647 = vadd.f32 %v2462, %v2646
      %v2648 = vpop.f32.mrf.mxu0
      %2649 = vmatprep.mubr.bf16.mxu0 0
      %2650 = vmatmul.mubr.bf16.gmra.mxu0 %v2505
      %v2651 = vpop.f32.mrf.mxu0
      %v2652 = vadd.f32 %v2462, %v2651
      %v2653 = vpop.f32.mrf.mxu0
      %v2654 = vpop.f32.mrf.mxu0
      %v2655 = vadd.f32 %v2462, %v2654
      %v2656 = vpop.f32.mrf.mxu0
      %2657 = vmatprep.mubr.bf16.mxu0 0
      %2658 = vmatmul.mubr.bf16.gmra.mxu0 %v2508
      %v2659 = vpop.f32.mrf.mxu0
      %v2660 = vadd.f32 %v2462, %v2659
      %v2661 = vpop.f32.mrf.mxu0
      %v2662 = vpop.f32.mrf.mxu0
      %v2663 = vadd.f32 %v2462, %v2662
      %v2664 = vpop.f32.mrf.mxu0
      %2665 = vmatprep.mubr.bf16.mxu0 0
      %2666 = vmatmul.mubr.bf16.gmra.mxu0 %v2511
      %v2667 = vpop.f32.mrf.mxu0
      %v2668 = vadd.f32 %v2462, %v2667
      %v2669 = vpop.f32.mrf.mxu0
      %v2670 = vpop.f32.mrf.mxu0
      %v2671 = vadd.f32 %v2462, %v2670
      %v2672 = vpop.f32.mrf.mxu0
      %2673 = vmatprep.mubr.bf16.mxu0 0
      %2674 = vmatmul.mubr.bf16.gmra.mxu0 %v2514
      %v2675 = vpop.f32.mrf.mxu0
      %v2676 = vadd.f32 %v2462, %v2675
      %v2677 = vpop.f32.mrf.mxu0
      %v2678 = vpop.f32.mrf.mxu0
      %v2679 = vadd.f32 %v2462, %v2678
      %v2680 = vpop.f32.mrf.mxu0
      %2681 = vmatprep.mubr.bf16.mxu0 0
      %2682 = vmatmul.mubr.bf16.gmra.mxu0 %v2517
      %v2683 = vpop.f32.mrf.mxu0
      %v2684 = vadd.f32 %v2462, %v2683
      %v2685 = vpop.f32.mrf.mxu0
      %v2686 = vpop.f32.mrf.mxu0
      %v2687 = vadd.f32 %v2462, %v2686
      %v2688 = vpop.f32.mrf.mxu0
      %2689 = vmatprep.mubr.bf16.mxu0 0
      %2690 = vmatmul.mubr.bf16.gmra.mxu0 %v2520
      %v2691 = vpop.f32.mrf.mxu0
      %v2692 = vadd.f32 %v2462, %v2691
      %v2693 = vpop.f32.mrf.mxu0
      %v2694 = vpop.f32.mrf.mxu0
      %v2695 = vadd.f32 %v2462, %v2694
      %v2696 = vpop.f32.mrf.mxu0
      %2697 = vmatprep.mubr.bf16.mxu0 0
      %2698 = vmatmul.mubr.bf16.gmra.mxu0 %v2523
      %v2699 = vpop.f32.mrf.mxu0
      %v2700 = vadd.f32 %v2462, %v2699
      %v2701 = vpop.f32.mrf.mxu0
      %v2702 = vpop.f32.mrf.mxu0
      %v2703 = vadd.f32 %v2462, %v2702
      %v2704 = vpop.f32.mrf.mxu0
      %2705 = vmatprep.mubr.bf16.mxu0 0
      %2706 = vmatmul.mubr.bf16.gmra.mxu0 %v2526
      %v2707 = vpop.f32.mrf.mxu0
      %v2708 = vadd.f32 %v2462, %v2707
      %v2709 = vpop.f32.mrf.mxu0
      %v2710 = vpop.f32.mrf.mxu0
      %v2711 = vadd.f32 %v2462, %v2710
      %v2712 = vpop.f32.mrf.mxu0
      %2713 = vmatprep.mubr.bf16.mxu0 0
      %2714 = vmatmul.mubr.bf16.gmra.mxu0 %v2529
      %v2715 = vpop.f32.mrf.mxu0
      %v2716 = vadd.f32 %v2462, %v2715
      %v2717 = vpop.f32.mrf.mxu0
      %v2718 = vpop.f32.mrf.mxu0
      %v2719 = vadd.f32 %v2462, %v2718
      %v2720 = vpop.f32.mrf.mxu0
      %2721 = vmatprep.mubr.bf16.mxu0 0
      %2722 = vmatmul.mubr.bf16.gmra.mxu0 %v2532
      %v2723 = vpop.f32.mrf.mxu0
      %v2724 = vadd.f32 %v2462, %v2723
      %v2725 = vpop.f32.mrf.mxu0
      %v2726 = vpop.f32.mrf.mxu0
      %v2727 = vadd.f32 %v2462, %v2726
      %v2728 = vpop.f32.mrf.mxu0
      %2729 = vmatprep.mubr.bf16.mxu0 0
      %2730 = vmatmul.mubr.bf16.gmra.mxu0 %v2535
      %v2731 = vpop.f32.mrf.mxu0
      %v2732 = vadd.f32 %v2462, %v2731
      %v2733 = vpop.f32.mrf.mxu0
      %v2734 = vpop.f32.mrf.mxu0
      %v2735 = vadd.f32 %v2462, %v2734
      %v2736 = vpop.f32.mrf.mxu0
      %2737 = vmatprep.mubr.bf16.mxu0 0
      %2738 = vmatmul.mubr.bf16.gmra.mxu0 %v2538
      %v2739 = vpop.f32.mrf.mxu0
      %v2740 = vadd.f32 %v2462, %v2739
      %v2741 = vpop.f32.mrf.mxu0
      %v2742 = vpop.f32.mrf.mxu0
      %v2743 = vadd.f32 %v2462, %v2742
      %v2744 = vpop.f32.mrf.mxu0
      %2745 = vmatprep.mubr.bf16.mxu0 0
      %2746 = vmatmul.mubr.bf16.gmra.mxu0 %v2541
      %v2747 = vpop.f32.mrf.mxu0
      %v2748 = vadd.f32 %v2462, %v2747
      %v2749 = vpop.f32.mrf.mxu0
      %v2750 = vpop.f32.mrf.mxu0
      %v2751 = vadd.f32 %v2462, %v2750
      %v2752 = vpop.f32.mrf.mxu0
      %2753 = vmatprep.mubr.bf16.mxu0 0
      %2754 = vmatmul.mubr.bf16.gmra.mxu0 %v2544
      %v2755 = vpop.f32.mrf.mxu0
      %v2756 = vadd.f32 %v2462, %v2755
      %v2757 = vpop.f32.mrf.mxu0
      %v2758 = vpop.f32.mrf.mxu0
      %v2759 = vadd.f32 %v2462, %v2758
      %v2760 = vpop.f32.mrf.mxu0
      %2761 = vmatprep.mubr.bf16.mxu0 0
      %2762 = vmatmul.mubr.bf16.gmra.mxu0 %v2547
      %v2763 = vpop.f32.mrf.mxu0
      %v2764 = vadd.f32 %v2462, %v2763
      %v2765 = vpop.f32.mrf.mxu0
      %v2766 = vpop.f32.mrf.mxu0
      %v2767 = vpop.f32.mrf.mxu0
      %2768 = vdwg.mxu0
      %v2769 = vmax.f32 %v2588, 0.0
      %v2770 = vmax.f32 %v2591, 0.0
      %v2771 = vmax.f32 %v2596, 0.0
      %v2772 = vmax.f32 %v2599, 0.0
      %v2773 = vmax.f32 %v2604, 0.0
      %v2774 = vmax.f32 %v2607, 0.0
      %v2775 = vmax.f32 %v2612, 0.0
      %v2776 = vmax.f32 %v2615, 0.0
      %v2777 = vmax.f32 %v2620, 0.0
      %v2778 = vmax.f32 %v2623, 0.0
      %v2779 = vmax.f32 %v2628, 0.0
      %v2780 = vmax.f32 %v2631, 0.0
      %v2781 = vmax.f32 %v2636, 0.0
      %v2782 = vmax.f32 %v2639, 0.0
      %v2783 = vmax.f32 %v2644, 0.0
      %v2784 = vmax.f32 %v2647, 0.0
      %v2785 = vmax.f32 %v2652, 0.0
      %v2786 = vmax.f32 %v2655, 0.0
      %v2787 = vmax.f32 %v2660, 0.0
      %v2788 = vmax.f32 %v2663, 0.0
      %v2789 = vmax.f32 %v2668, 0.0
      %v2790 = vmax.f32 %v2671, 0.0
      %v2791 = vmax.f32 %v2676, 0.0
      %v2792 = vmax.f32 %v2679, 0.0
      %v2793 = vmax.f32 %v2684, 0.0
      %v2794 = vmax.f32 %v2687, 0.0
      %v2795 = vmax.f32 %v2692, 0.0
      %v2796 = vmax.f32 %v2695, 0.0
      %v2797 = vmax.f32 %v2700, 0.0
      %v2798 = vmax.f32 %v2703, 0.0
      %v2799 = vmax.f32 %v2708, 0.0
      %v2800 = vmax.f32 %v2711, 0.0
      %v2801 = vmax.f32 %v2716, 0.0
      %v2802 = vmax.f32 %v2719, 0.0
      %v2803 = vmax.f32 %v2724, 0.0
      %v2804 = vmax.f32 %v2727, 0.0
      %v2805 = vmax.f32 %v2732, 0.0
      %v2806 = vmax.f32 %v2735, 0.0
      %v2807 = vmax.f32 %v2740, 0.0
      %v2808 = vmax.f32 %v2743, 0.0
      %v2809 = vmax.f32 %v2748, 0.0
      %v2810 = vmax.f32 %v2751, 0.0
      %v2811 = vmax.f32 %v2756, 0.0
      %v2812 = vmax.f32 %v2759, 0.0
      %v2813 = vmax.f32 %v2764, 0.0
      %2814 = vst [vmem:[%s235] sm:$0xff] %v2769
      %2815 = vst [vmem:[%s235 + $0x8] sm:$0xff] %v2770
      %2816 = vst [vmem:[%s235 + $0x10] sm:$0xff] %v2771
      %2817 = vst [vmem:[%s235 + $0x18] sm:$0xff] %v2772
      %2818 = vst [vmem:[%s235 + $0x20] sm:$0xff] %v2773
      %2819 = vst [vmem:[%s235 + $0x28] sm:$0xff] %v2774
      %2820 = vst [vmem:[%s235 + $0x30] sm:$0xff] %v2775
      %2821 = vst [vmem:[%s235 + $0x38] sm:$0xff] %v2776
      %2822 = vst [vmem:[%s235 + $0x40] sm:$0xff] %v2777
      %2823 = vst [vmem:[%s235 + $0x48] sm:$0xff] %v2778
      %2824 = vst [vmem:[%s235 + $0x50] sm:$0xff] %v2779
      %2825 = vst [vmem:[%s235 + $0x58] sm:$0xff] %v2780
      %2826 = vst [vmem:[%s235 + $0x60] sm:$0xff] %v2781
      %2827 = vst [vmem:[%s235 + $0x68] sm:$0xff] %v2782
      %2828 = vst [vmem:[%s235 + $0x70] sm:$0xff] %v2783
      %2829 = vst [vmem:[%s235 + $0x78] sm:$0xff] %v2784
      %2830 = vst [vmem:[%s235 + $0x80] sm:$0xff] %v2785
      %2831 = vst [vmem:[%s235 + $0x88] sm:$0xff] %v2786
      %2832 = vst [vmem:[%s235 + $0x90] sm:$0xff] %v2787
      %2833 = vst [vmem:[%s235 + $0x98] sm:$0xff] %v2788
      %2834 = vst [vmem:[%s235 + $0xa0] sm:$0xff] %v2789
      %2835 = vst [vmem:[%s235 + $0xa8] sm:$0xff] %v2790
      %2836 = vst [vmem:[%s235 + $0xb0] sm:$0xff] %v2791
      %2837 = vst [vmem:[%s235 + $0xb8] sm:$0xff] %v2792
      %2838 = vst [vmem:[%s235 + $0xc0] sm:$0xff] %v2793
      %2839 = vst [vmem:[%s235 + $0xc8] sm:$0xff] %v2794
      %2840 = vst [vmem:[%s235 + $0xd0] sm:$0xff] %v2795
      %2841 = vst [vmem:[%s235 + $0xd8] sm:$0xff] %v2796
      %2842 = vst [vmem:[%s235 + $0xe0] sm:$0xff] %v2797
      %2843 = vst [vmem:[%s235 + $0xe8] sm:$0xff] %v2798
      %2844 = vst [vmem:[%s235 + $0xf0] sm:$0xff] %v2799
      %2845 = vst [vmem:[%s235 + $0xf8] sm:$0xff] %v2800
      %2846 = vst [vmem:[%s235 + $0x100] sm:$0xff] %v2801
      %2847 = vst [vmem:[%s235 + $0x108] sm:$0xff] %v2802
      %2848 = vst [vmem:[%s235 + $0x110] sm:$0xff] %v2803
      %2849 = vst [vmem:[%s235 + $0x118] sm:$0xff] %v2804
      %2850 = vst [vmem:[%s235 + $0x120] sm:$0xff] %v2805
      %2851 = vst [vmem:[%s235 + $0x128] sm:$0xff] %v2806
      %2852 = vst [vmem:[%s235 + $0x130] sm:$0xff] %v2807
      %2853 = vst [vmem:[%s235 + $0x138] sm:$0xff] %v2808
      %2854 = vst [vmem:[%s235 + $0x140] sm:$0xff] %v2809
      %2855 = vst [vmem:[%s235 + $0x148] sm:$0xff] %v2810
      %2856 = vst [vmem:[%s235 + $0x150] sm:$0xff] %v2811
      %2857 = vst [vmem:[%s235 + $0x158] sm:$0xff] %v2812
      %2858 = vst [vmem:[%s235 + $0x160] sm:$0xff] %v2813
      %s2859 = smul.u32 45, %s15
      %p2860 = scmp.lt.s32.totalorder %s2859, 89
      %s2861 = scalar_select %p2860, %s2859, 89
      %s2862 = smul.addr %s2861, 8
      %s2863 = scalar_lea.vmem %s4, %s2862
      // Predicated region
      $region37: #{conv_block_forward.3} parent=35 // pred_check
        %p2864 = pneg %p131
      $region38: #{conv_block_forward.3} parent=35 // pred_check_branch
        %2866 = sbr.rel (%p2864) target = $region40
      $region39: #{conv_block_forward.3} parent=35 // pred_region
        %s2867 = smul.u32 45, %s15
      $region40: #{conv_block_forward.3} parent=35 // pred_fallthru
        _
    $region36: #{conv_block_forward.3} parent=5 // pred_fallthru
      _
    %p2868 = scmp.le.s32.totalorder 2, %s10
    // Predicated region
    $region41: #{conv_block_forward.3} parent=5 // pred_check
      %p2869 = pneg %p2868
    $region42: #{conv_block_forward.3} parent=5 // pred_check_branch
      %2871 = sbr.rel (%p2869) target = $region44
    $region43: #{conv_block_forward.3} parent=5 // pred_region
      %s2872 = ssub.s32 %s10, 2
      // Predicated region
      $region45: #{conv_block_forward.3} parent=43 // pred_check
        %p2873 = pneg %p137
      $region46: #{conv_block_forward.3} parent=43 // pred_check_branch
        %2875 = sbr.rel (%p2873) target = $region48
      $region47: #{conv_block_forward.3} parent=43 // pred_region
        %s2876 = smul.u32 45, %s16
        %p2877 = scmp.lt.s32.totalorder %s2876, 89
        %s2878 = scalar_select %p2877, %s2876, 89
        %s2879 = smul.addr %s2878, 8
        %s2880 = scalar_lea.vmem %s4, %s2879
      $region48: #{conv_block_forward.3} parent=43 // pred_fallthru
        _
    $region44: #{conv_block_forward.3} parent=5 // pred_fallthru
      _
  $region6: #{conv_block_forward.3} parent=0 // loop_footer
    %s14 = sadd.s32 1, %s10
  $region7: #{conv_block_forward.3} parent=0 // loop_footer_branch
    %9 = sbr.rel target = $region3
  $region8: #{conv_block_forward.3} parent=0 // loop_exit
    _

// kernel: conv_block_forward.2
$region0: #{conv_block_forward.2}
  #allocation0 [shape = 'u32[]', space=smem, size = 0x4, offset = 0x4, fixed_abs, tag = 'smem constant byte address 0x4 - core index']
  #allocation1 [shape = 'u32[144,128]{1,0:T(1,128)}', space=vmem, size = 0x12000, scoped, tag = 'internal scratch']
  #allocation2 [shape = 'f32[400,4]{1,0:T(8,128)}', space=vmem, size = 0x32000, scoped, tag = 'scratch operand']
  %s0 = inlined_call_operand.vmem [shape: bf16[1080,4], index: 0, kind: input, shape index: {}, may-alias: {0,1}]
  %s1 = inlined_call_operand.vmem [shape: bf16[1080,4], index: 1, kind: input, shape index: {}, may-alias: {0,1}]
  %s2 = inlined_call_operand.vmem [shape: bf16[36,128], index: 2, kind: input, shape index: {}]
  %s3 = inlined_call_operand.vmem [shape: f32[720,1], index: 3, kind: input, shape index: {}]
  %s4 = inlined_call_operand.vmem [shape: f32[2,2,128], index: 4, kind: output, shape index: {}]
  %s5 = sld [smem:[#allocation0]]
  $region49: #{conv_block_forward.2} parent=0
    _
  %s7 = ssub.s32 1, %s5
  %s8 = scalar_select 0, %s7, %s5
  loop: start=0, step=1, limit=4
  $region2: #{conv_block_forward.2} parent=0 // loop_pre_header
    _
  $region3: #{conv_block_forward.2} parent=0 // loop_header
    %s10 = sphi 0, %s14
    %p11 = scmp.ge.s32.totalorder %s10, 4
    %s20 = sphi 0, %s22
    %s23 = sphi 0, %s20
    %s24 = sphi 0, %s23
    %s40 = sphi 0, %s24
    %s50 = sphi 0, %s52
    %s53 = sphi 0, %s50
    %s54 = sphi 0, %s53
    %s70 = sphi 0, %s54
    %s74 = sphi 0, %s74
    %s76 = sphi 0, %s74
    %s77 = sphi 0, %s76
    %s91 = sphi 0, %s77
    %s97 = sphi 0, %s99
    %s100 = sphi 0, %s97
    %s101 = sphi 0, %s100
    %s117 = sphi 0, %s101
    %s123 = sphi 0, %s125
    %s126 = sphi 0, %s123
    %s127 = sphi 0, %s126
    %s143 = sphi 0, %s127
  $region4: #{conv_block_forward.2} parent=0 // loop_header_branch
    %13 = sbr.rel (%p11) target = $region8
  $region5: #{conv_block_forward.2} parent=0 // loop_body
    %s15 = ssub.s32 %s10, 1
    %s16 = ssub.s32 %s10, 2
    %s17 = sadd.s32 %s10, 1
    %s18 = ssub.s32 %s10, %s17
    %p19 = scmp.eq.s32.totalorder %s18, 0
    %s21 = sadd.s32 %s20, 1
    %s22 = scalar_select %p19, %s20, %s21
    %p25 = pneg %p19
    %p26 = scmp.eq.s32.totalorder %s10, 1
    %p27 = por %p25, %p26
    %p28 = scmp.ne.s32.totalorder %s20, %s23
    %p29 = scmp.eq.s32.totalorder %s10, 0
    %p30 = por %p28, %p29
    %p31 = scmp.ne.s32.totalorder %s20, %s23
    %p32 = scmp.eq.s32.totalorder %s15, 1
    %p33 = por %p31, %p32
    %p34 = scmp.ne.s32.totalorder %s23, %s24
    %p35 = scmp.eq.s32.totalorder %s15, 0
    %p36 = por %p34, %p35
    %p37 = scmp.ne.s32.totalorder %s23, %s24
    %p38 = scmp.eq.s32.totalorder %s16, 1
    %p39 = por %p37, %p38
    %p41 = scmp.ne.s32.totalorder %s24, %s40
    %p42 = scmp.eq.s32.totalorder %s16, 0
    %p43 = por %p41, %p42
    %s44 = sadd.s32 %s10, 1
    %s45 = smul.u32 %s44, 9
    %s46 = sadd.s32 %s17, 1
    %s47 = smul.u32 %s46, 9
    %s48 = ssub.s32 %s45, %s47
    %p49 = scmp.eq.s32.totalorder %s48, 0
    %s51 = sadd.s32 %s50, 1
    %s52 = scalar_select %p49, %s50, %s51
    %p55 = pneg %p49
    %p56 = scmp.eq.s32.totalorder %s10, 1
    %p57 = por %p55, %p56
    %p58 = scmp.ne.s32.totalorder %s50, %s53
    %p59 = scmp.eq.s32.totalorder %s10, 0
    %p60 = por %p58, %p59
    %p61 = scmp.ne.s32.totalorder %s50, %s53
    %p62 = scmp.eq.s32.totalorder %s15, 1
    %p63 = por %p61, %p62
    %p64 = scmp.ne.s32.totalorder %s53, %s54
    %p65 = scmp.eq.s32.totalorder %s15, 0
    %p66 = por %p64, %p65
    %p67 = scmp.ne.s32.totalorder %s53, %s54
    %p68 = scmp.eq.s32.totalorder %s16, 1
    %p69 = por %p67, %p68
    %p71 = scmp.ne.s32.totalorder %s54, %s70
    %p72 = scmp.eq.s32.totalorder %s16, 0
    %p73 = por %p71, %p72
    %s75 = sadd.s32 %s74, 1
    %p78 = scmp.eq.s32.totalorder %s10, 1
    %p79 = scmp.ne.s32.totalorder %s74, %s76
    %p80 = scmp.eq.s32.totalorder %s10, 0
    %p81 = por %p79, %p80
    %p82 = scmp.ne.s32.totalorder %s74, %s76
    %p83 = scmp.eq.s32.totalorder %s15, 1
    %p84 = por %p82, %p83
    %p85 = scmp.ne.s32.totalorder %s76, %s77
    %p86 = scmp.eq.s32.totalorder %s15, 0
    %p87 = por %p85, %p86
    %p88 = scmp.ne.s32.totalorder %s76, %s77
    %p89 = scmp.eq.s32.totalorder %s16, 1
    %p90 = por %p88, %p89
    %p92 = scmp.ne.s32.totalorder %s77, %s91
    %p93 = scmp.eq.s32.totalorder %s16, 0
    %p94 = por %p92, %p93
    %s95 = ssub.s32 %s10, %s17
    %p96 = scmp.eq.s32.totalorder %s95, 0
    %s98 = sadd.s32 %s97, 1
    %s99 = scalar_select %p96, %s97, %s98
    %p102 = pneg %p96
    %p103 = scmp.eq.s32.totalorder %s10, 1
    %p104 = por %p102, %p103
    %p105 = scmp.ne.s32.totalorder %s97, %s100
    %p106 = scmp.eq.s32.totalorder %s10, 0
    %p107 = por %p105, %p106
    %p108 = scmp.ne.s32.totalorder %s97, %s100
    %p109 = scmp.eq.s32.totalorder %s15, 1
    %p110 = por %p108, %p109
    %p111 = scmp.ne.s32.totalorder %s100, %s101
    %p112 = scmp.eq.s32.totalorder %s15, 0
    %p113 = por %p111, %p112
    %p114 = scmp.ne.s32.totalorder %s100, %s101
    %p115 = scmp.eq.s32.totalorder %s16, 1
    %p116 = por %p114, %p115
    %p118 = scmp.ne.s32.totalorder %s101, %s117
    %p119 = scmp.eq.s32.totalorder %s16, 0
    %p120 = por %p118, %p119
    %s121 = ssub.s32 %s10, %s17
    %p122 = scmp.eq.s32.totalorder %s121, 0
    %s124 = sadd.s32 %s123, 1
    %s125 = scalar_select %p122, %s123, %s124
    %p128 = pneg %p122
    %p129 = scmp.eq.s32.totalorder %s10, 1
    %p130 = por %p128, %p129
    %p131 = scmp.ne.s32.totalorder %s123, %s126
    %p132 = scmp.eq.s32.totalorder %s10, 0
    %p133 = por %p131, %p132
    %p134 = scmp.ne.s32.totalorder %s123, %s126
    %p135 = scmp.eq.s32.totalorder %s15, 1
    %p136 = por %p134, %p135
    %p137 = scmp.ne.s32.totalorder %s126, %s127
    %p138 = scmp.eq.s32.totalorder %s15, 0
    %p139 = por %p137, %p138
    %p140 = scmp.ne.s32.totalorder %s126, %s127
    %p141 = scmp.eq.s32.totalorder %s16, 1
    %p142 = por %p140, %p141
    %p144 = scmp.ne.s32.totalorder %s127, %s143
    %p145 = scmp.eq.s32.totalorder %s16, 0
    %p146 = por %p144, %p145
    %p147 = scmp.le.s32.totalorder 1, %s10
    %p148 = scmp.lt.s32.totalorder %s10, 3
    %p149 = pnand %p147, %p148
    %p150 = pneg %p149
    // Predicated region
    $region9: #{conv_block_forward.2} parent=5 // pred_check
      _
    $region10: #{conv_block_forward.2} parent=5 // pred_check_branch
      %152 = sbr.rel (%p149) target = $region12
    $region11: #{conv_block_forward.2} parent=5 // pred_region
      %s153 = ssub.s32 %s10, 1
      // Predicated region
      $region13: #{conv_block_forward.2} parent=11 // pred_check
        %p154 = pneg %p87
      $region14: #{conv_block_forward.2} parent=11 // pred_check_branch
        %156 = sbr.rel (%p154) target = $region16
      $region15: #{conv_block_forward.2} parent=11 // pred_region
        _
      $region16: #{conv_block_forward.2} parent=11 // pred_fallthru
        _
    $region12: #{conv_block_forward.2} parent=5 // pred_fallthru
      _
    %p157 = scmp.lt.s32.totalorder %s10, 2
    // Predicated region
    $region17: #{conv_block_forward.2} parent=5 // pred_check
      %p158 = pneg %p157
    $region18: #{conv_block_forward.2} parent=5 // pred_check_branch
      %160 = sbr.rel (%p158) target = $region20
    $region19: #{conv_block_forward.2} parent=5 // pred_region
      // Predicated region
      $region21: #{conv_block_forward.2} parent=19 // pred_check
        %p161 = pneg %p30
      $region22: #{conv_block_forward.2} parent=19 // pred_check_branch
        %163 = sbr.rel (%p161) target = $region24
      $region23: #{conv_block_forward.2} parent=19 // pred_region
        %s164 = smul.u32 45, %s10
        %p165 = scmp.lt.s32.totalorder %s164, 134
        %s166 = scalar_select %p165, %s164, 134
        %s167 = smul.addr %s166, 4
        %s168 = scalar_lea.vmem %s0, %s167
        %s169 = smul.u32 45, %s10
      $region24: #{conv_block_forward.2} parent=19 // pred_fallthru
        _
      // Predicated region
      $region25: #{conv_block_forward.2} parent=19 // pred_check
        %p170 = pneg %p60
      $region26: #{conv_block_forward.2} parent=19 // pred_check_branch
        %172 = sbr.rel (%p170) target = $region28
      $region27: #{conv_block_forward.2} parent=19 // pred_region
        %s173 = sadd.s32 %s10, 1
        %s174 = smul.u32 %s173, 9
        %s175 = smul.u32 5, %s174
        %p176 = scmp.lt.s32.totalorder %s175, 134
        %s177 = scalar_select %p176, %s175, 134
        %s178 = smul.addr %s177, 4
        %s179 = scalar_lea.vmem %s1, %s178
        %s180 = sadd.s32 %s10, 1
        %s181 = smul.u32 %s180, 9
        %s182 = smul.u32 5, %s181
      $region28: #{conv_block_forward.2} parent=19 // pred_fallthru
        _
      // Predicated region
      $region29: #{conv_block_forward.2} parent=19 // pred_check
        %p183 = pneg %p107
      $region30: #{conv_block_forward.2} parent=19 // pred_check_branch
        %185 = sbr.rel (%p183) target = $region32
      $region31: #{conv_block_forward.2} parent=19 // pred_region
        %s186 = smul.u32 45, %s10
        %p187 = scmp.lt.s32.totalorder %s186, 89
        %s188 = scalar_select %p187, %s186, 89
        %s189 = smul.addr %s188, 8
        %s190 = scalar_lea.vmem %s3, %s189
        %s191 = smul.u32 45, %s10
      $region32: #{conv_block_forward.2} parent=19 // pred_fallthru
        _
    $region20: #{conv_block_forward.2} parent=5 // pred_fallthru
      _
    %p192 = scmp.le.s32.totalorder 1, %s10
    %p193 = scmp.lt.s32.totalorder %s10, 3
    %p194 = pnand %p192, %p193
    %p195 = pneg %p194
    // Predicated region
    $region33: #{conv_block_forward.2} parent=5 // pred_check
      _
    $region34: #{conv_block_forward.2} parent=5 // pred_check_branch
      %197 = sbr.rel (%p194) target = $region36
    $region35: #{conv_block_forward.2} parent=5 // pred_region
      %s198 = ssub.s32 %s10, 1
      %s199 = smul.u32 45, %s15
      %p200 = scmp.lt.s32.totalorder %s199, 134
      %s201 = scalar_select %p200, %s199, 134
      %s202 = smul.addr %s201, 4
      %s203 = scalar_lea.vmem %s0, %s202
      %p204 = pneg %p36
      %p205 = pneg %p33
      %s206 = sadd.s32 %s15, 1
      %s207 = smul.u32 %s206, 9
      %s208 = smul.u32 5, %s207
      %p209 = scmp.lt.s32.totalorder %s208, 134
      %s210 = scalar_select %p209, %s208, 134
      %s211 = smul.addr %s210, 4
      %s212 = scalar_lea.vmem %s1, %s211
      %p213 = pneg %p66
      %p214 = pneg %p63
      %p215 = pneg %p87
      %p216 = pneg %p84
      %s217 = smul.u32 45, %s15
      %p218 = scmp.lt.s32.totalorder %s217, 89
      %s219 = scalar_select %p218, %s217, 89
      %s220 = smul.addr %s219, 8
      %s221 = scalar_lea.vmem %s3, %s220
      %p222 = pneg %p113
      %p223 = pneg %p110
      %p224 = pneg %p139
      %p225 = pneg %p136
      %p226 = scmp.lt.s32.totalorder %s15, 1
      %s227 = scalar_select %p226, %s15, 1
      %s228 = smul.addr %s227, 2
      %s229 = scalar_lea.vmem %s4, %s228
      %s230 = smul.u32 45, %s15
      %p231 = scmp.lt.s32.totalorder %s230, 134
      %s232 = scalar_select %p231, %s230, 134
      %s233 = smul.addr %s232, 4
      %s234 = scalar_lea.vmem %s0, %s233
      %s235 = smul.u32 45, %s15
      %s236 = sadd.s32 %s15, 1
      %s237 = smul.u32 %s236, 9
      %s238 = smul.u32 5, %s237
      %p239 = scmp.lt.s32.totalorder %s238, 134
      %s240 = scalar_select %p239, %s238, 134
      %s241 = smul.addr %s240, 4
      %s242 = scalar_lea.vmem %s1, %s241
      %s243 = sadd.s32 %s15, 1
      %s244 = smul.u32 %s243, 9
      %s245 = smul.u32 5, %s244
      %s246 = smul.u32 45, %s15
      %p247 = scmp.lt.s32.totalorder %s246, 89
      %s248 = scalar_select %p247, %s246, 89
      %s249 = smul.addr %s248, 8
      %s250 = scalar_lea.vmem %s3, %s249
      %s251 = smul.u32 45, %s15
      %p252 = scmp.lt.s32.totalorder %s15, 1
      %s253 = scalar_select %p252, %s15, 1
      %s254 = smul.addr %s253, 2
      %s255 = scalar_lea.vmem %s4, %s254
      %v257 = vld [vmem:[%s234] sm:$0xf]
      %v258 = vld [vmem:[%s234 + $0x4] sm:$0xf]
      %v259 = vld [vmem:[%s234 + $0x8] sm:$0xf]
      %v260 = vld [vmem:[%s234 + $0xc] sm:$0xf]
      %v261 = vld [vmem:[%s234 + $0x10] sm:$0xf]
      %v262 = vld [vmem:[%s234 + $0x14] sm:$0xf]
      %v263 = vld [vmem:[%s234 + $0x18] sm:$0xf]
      %v264 = vld [vmem:[%s234 + $0x1c] sm:$0xf]
      %v265 = vld [vmem:[%s234 + $0x20] sm:$0xf]
      %v266 = vld [vmem:[%s234 + $0x24] sm:$0xf]
      %v267 = vld [vmem:[%s234 + $0x28] sm:$0xf]
      %v268 = vld [vmem:[%s234 + $0x2c] sm:$0xf]
      %v269 = vld [vmem:[%s234 + $0x30] sm:$0xf]
      %v270 = vld [vmem:[%s234 + $0x34] sm:$0xf]
      %v271 = vld [vmem:[%s234 + $0x38] sm:$0xf]
      %v272 = vld [vmem:[%s234 + $0x3c] sm:$0xf]
      %v273 = vld [vmem:[%s234 + $0x40] sm:$0xf]
      %v274 = vld [vmem:[%s234 + $0x44] sm:$0xf]
      %v275 = vld [vmem:[%s234 + $0x48] sm:$0xf]
      %v276 = vld [vmem:[%s234 + $0x4c] sm:$0xf]
      %v277 = vld [vmem:[%s234 + $0x50] sm:$0xf]
      %v278 = vld [vmem:[%s234 + $0x54] sm:$0xf]
      %v279 = vld [vmem:[%s234 + $0x58] sm:$0xf]
      %v280 = vld [vmem:[%s234 + $0x5c] sm:$0xf]
      %v281 = vld [vmem:[%s234 + $0x60] sm:$0xf]
      %v282 = vld [vmem:[%s234 + $0x64] sm:$0xf]
      %v283 = vld [vmem:[%s234 + $0x68] sm:$0xf]
      %v284 = vld [vmem:[%s234 + $0x6c] sm:$0xf]
      %v285 = vld [vmem:[%s234 + $0x70] sm:$0xf]
      %v286 = vld [vmem:[%s234 + $0x74] sm:$0xf]
      %v287 = vld [vmem:[%s234 + $0x78] sm:$0xf]
      %v288 = vld [vmem:[%s234 + $0x7c] sm:$0xf]
      %v289 = vld [vmem:[%s234 + $0x80] sm:$0xf]
      %v290 = vld [vmem:[%s234 + $0x84] sm:$0xf]
      %v291 = vld [vmem:[%s234 + $0x88] sm:$0xf]
      %v292 = vld [vmem:[%s234 + $0x8c] sm:$0xf]
      %v293 = vld [vmem:[%s234 + $0x90] sm:$0xf]
      %v294 = vld [vmem:[%s234 + $0x94] sm:$0xf]
      %v295 = vld [vmem:[%s234 + $0x98] sm:$0xf]
      %v296 = vld [vmem:[%s234 + $0x9c] sm:$0xf]
      %v297 = vld [vmem:[%s234 + $0xa0] sm:$0xf]
      %v298 = vld [vmem:[%s234 + $0xa4] sm:$0xf]
      %v299 = vld [vmem:[%s234 + $0xa8] sm:$0xf]
      %v300 = vld [vmem:[%s234 + $0xac] sm:$0xf]
      %v301 = vld [vmem:[%s234 + $0xb0] sm:$0xf]
      %v302 = vunpack.c.l.bf16 %v257
      %v303 = vunpack.c.l.bf16 %v258
      %v304 = vunpack.c.l.bf16 %v259
      %v305 = vunpack.c.l.bf16 %v260
      %v306 = vunpack.c.l.bf16 %v261
      %v307 = vunpack.c.l.bf16 %v262
      %v308 = vunpack.c.l.bf16 %v263
      %v309 = vunpack.c.l.bf16 %v264
      %v310 = vunpack.c.l.bf16 %v265
      %v311 = vunpack.c.l.bf16 %v266
      %v312 = vunpack.c.l.bf16 %v267
      %v313 = vunpack.c.l.bf16 %v268
      %v314 = vunpack.c.l.bf16 %v269
      %v315 = vunpack.c.l.bf16 %v270
      %v316 = vunpack.c.l.bf16 %v271
      %v317 = vunpack.c.l.bf16 %v272
      %v318 = vunpack.c.l.bf16 %v273
      %v319 = vunpack.c.l.bf16 %v274
      %v320 = vunpack.c.l.bf16 %v275
      %v321 = vunpack.c.l.bf16 %v276
      %v322 = vunpack.c.l.bf16 %v277
      %v323 = vunpack.c.l.bf16 %v278
      %v324 = vunpack.c.l.bf16 %v279
      %v325 = vunpack.c.l.bf16 %v280
      %v326 = vunpack.c.l.bf16 %v281
      %v327 = vunpack.c.l.bf16 %v282
      %v328 = vunpack.c.l.bf16 %v283
      %v329 = vunpack.c.l.bf16 %v284
      %v330 = vunpack.c.l.bf16 %v285
      %v331 = vunpack.c.l.bf16 %v286
      %v332 = vunpack.c.l.bf16 %v287
      %v333 = vunpack.c.l.bf16 %v288
      %v334 = vunpack.c.l.bf16 %v289
      %v335 = vunpack.c.l.bf16 %v290
      %v336 = vunpack.c.l.bf16 %v291
      %v337 = vunpack.c.l.bf16 %v292
      %v338 = vunpack.c.l.bf16 %v293
      %v339 = vunpack.c.l.bf16 %v294
      %v340 = vunpack.c.l.bf16 %v295
      %v341 = vunpack.c.l.bf16 %v296
      %v342 = vunpack.c.l.bf16 %v297
      %v343 = vunpack.c.l.bf16 %v298
      %v344 = vunpack.c.l.bf16 %v299
      %v345 = vunpack.c.l.bf16 %v300
      %v346 = vunpack.c.l.bf16 %v301
      %vm347 = vcmask 31744
      %348 = vst.msk [vmem:[#allocation2] sm:$0xff] %vm347, %v302
      %349 = vst.msk [vmem:[#allocation2 + $0x8] sm:$0xff] %vm347, %v303
      %350 = vst.msk [vmem:[#allocation2 + $0x10] sm:$0xff] %vm347, %v304
      %351 = vst.msk [vmem:[#allocation2 + $0x18] sm:$0xff] %vm347, %v305
      %352 = vst.msk [vmem:[#allocation2 + $0x20] sm:$0xff] %vm347, %v306
      %353 = vst.msk [vmem:[#allocation2 + $0x28] sm:$0xff] %vm347, %v307
      %354 = vst.msk [vmem:[#allocation2 + $0x30] sm:$0xff] %vm347, %v308
      %355 = vst.msk [vmem:[#allocation2 + $0x38] sm:$0xff] %vm347, %v309
      %356 = vst.msk [vmem:[#allocation2 + $0x40] sm:$0xff] %vm347, %v310
      %357 = vst.msk [vmem:[#allocation2 + $0x48] sm:$0xff] %vm347, %v311
      %358 = vst.msk [vmem:[#allocation2 + $0x50] sm:$0xff] %vm347, %v312
      %359 = vst.msk [vmem:[#allocation2 + $0x58] sm:$0xff] %vm347, %v313
      %360 = vst.msk [vmem:[#allocation2 + $0x60] sm:$0xff] %vm347, %v314
      %361 = vst.msk [vmem:[#allocation2 + $0x68] sm:$0xff] %vm347, %v315
      %362 = vst.msk [vmem:[#allocation2 + $0x70] sm:$0xff] %vm347, %v316
      %363 = vst.msk [vmem:[#allocation2 + $0x78] sm:$0xff] %vm347, %v317
      %364 = vst.msk [vmem:[#allocation2 + $0x80] sm:$0xff] %vm347, %v318
      %365 = vst.msk [vmem:[#allocation2 + $0x88] sm:$0xff] %vm347, %v319
      %366 = vst.msk [vmem:[#allocation2 + $0x90] sm:$0xff] %vm347, %v320
      %367 = vst.msk [vmem:[#allocation2 + $0x98] sm:$0xff] %vm347, %v321
      %368 = vst.msk [vmem:[#allocation2 + $0xa0] sm:$0xff] %vm347, %v322
      %369 = vst.msk [vmem:[#allocation2 + $0xa8] sm:$0xff] %vm347, %v323
      %370 = vst.msk [vmem:[#allocation2 + $0xb0] sm:$0xff] %vm347, %v324
      %371 = vst.msk [vmem:[#allocation2 + $0xb8] sm:$0xff] %vm347, %v325
      %372 = vst.msk [vmem:[#allocation2 + $0xc0] sm:$0xff] %vm347, %v326
      %373 = vst.msk [vmem:[#allocation2 + $0xc8] sm:$0xff] %vm347, %v327
      %374 = vst.msk [vmem:[#allocation2 + $0xd0] sm:$0xff] %vm347, %v328
      %375 = vst.msk [vmem:[#allocation2 + $0xd8] sm:$0xff] %vm347, %v329
      %376 = vst.msk [vmem:[#allocation2 + $0xe0] sm:$0xff] %vm347, %v330
      %377 = vst.msk [vmem:[#allocation2 + $0xe8] sm:$0xff] %vm347, %v331
      %378 = vst.msk [vmem:[#allocation2 + $0xf0] sm:$0xff] %vm347, %v332
      %379 = vst.msk [vmem:[#allocation2 + $0xf8] sm:$0xff] %vm347, %v333
      %380 = vst.msk [vmem:[#allocation2 + $0x100] sm:$0xff] %vm347, %v334
      %381 = vst.msk [vmem:[#allocation2 + $0x108] sm:$0xff] %vm347, %v335
      %382 = vst.msk [vmem:[#allocation2 + $0x110] sm:$0xff] %vm347, %v336
      %383 = vst.msk [vmem:[#allocation2 + $0x118] sm:$0xff] %vm347, %v337
      %384 = vst.msk [vmem:[#allocation2 + $0x120] sm:$0xff] %vm347, %v338
      %385 = vst.msk [vmem:[#allocation2 + $0x128] sm:$0xff] %vm347, %v339
      %386 = vst.msk [vmem:[#allocation2 + $0x130] sm:$0xff] %vm347, %v340
      %387 = vst.msk [vmem:[#allocation2 + $0x138] sm:$0xff] %vm347, %v341
      %388 = vst.msk [vmem:[#allocation2 + $0x140] sm:$0xff] %vm347, %v342
      %389 = vst.msk [vmem:[#allocation2 + $0x148] sm:$0xff] %vm347, %v343
      %390 = vst.msk [vmem:[#allocation2 + $0x150] sm:$0xff] %vm347, %v344
      %391 = vst.msk [vmem:[#allocation2 + $0x158] sm:$0xff] %vm347, %v345
      %392 = vst.msk [vmem:[#allocation2 + $0x160] sm:$0xff] %vm347, %v346
      %v393 = vld [vmem:[%s242] sm:$0xf]
      %v394 = vld [vmem:[%s242 + $0x4] sm:$0xf]
      %v395 = vld [vmem:[%s242 + $0x8] sm:$0xf]
      %v396 = vld [vmem:[%s242 + $0xc] sm:$0xf]
      %v397 = vld [vmem:[%s242 + $0x10] sm:$0xf]
      %v398 = vunpack.c.l.bf16 %v393
      %v399 = vunpack.c.l.bf16 %v394
      %v400 = vunpack.c.l.bf16 %v395
      %v401 = vunpack.c.l.bf16 %v396
      %v402 = vunpack.c.l.bf16 %v397
      %403 = vst.msk [vmem:[#allocation2 + $0x168] sm:$0xff] %vm347, %v398
      %404 = vst.msk [vmem:[#allocation2 + $0x170] sm:$0xff] %vm347, %v399
      %405 = vst.msk [vmem:[#allocation2 + $0x178] sm:$0xff] %vm347, %v400
      %406 = vst.msk [vmem:[#allocation2 + $0x180] sm:$0xff] %vm347, %v401
      %407 = vst.msk [vmem:[#allocation2 + $0x188] sm:$0xff] %vm347, %v402
      %v408 = vld [vmem:[#allocation2] sm:$0xff]
      %v409 = vld [vmem:[#allocation2 + $0x8] sm:$0xff]
      %v410 = vld [vmem:[#allocation2 + $0x10] sm:$0xff]
      %v411 = vld [vmem:[#allocation2 + $0x18] sm:$0xff]
      %v412 = vld [vmem:[#allocation2 + $0x20] sm:$0xff]
      %v413 = vld [vmem:[#allocation2 + $0x28] sm:$0xff]
      %v414 = vld [vmem:[#allocation2 + $0x30] sm:$0xff]
      %v415 = vld [vmem:[#allocation2 + $0x38] sm:$0xff]
      %v416 = vld [vmem:[#allocation2 + $0x40] sm:$0xff]
      %v417 = vld [vmem:[#allocation2 + $0x48] sm:$0xff]
      %v418 = vld [vmem:[#allocation2 + $0x50] sm:$0xff]
      %v419 = vld [vmem:[#allocation2 + $0x58] sm:$0xff]
      %v420 = vld [vmem:[#allocation2 + $0x60] sm:$0xff]
      %v421 = vld [vmem:[#allocation2 + $0x68] sm:$0xff]
      %v422 = vld [vmem:[#allocation2 + $0x70] sm:$0xff]
      %v423 = vld [vmem:[#allocation2 + $0x78] sm:$0xff]
      %v424 = vld [vmem:[#allocation2 + $0x80] sm:$0xff]
      %v425 = vld [vmem:[#allocation2 + $0x88] sm:$0xff]
      %v426 = vld [vmem:[#allocation2 + $0x90] sm:$0xff]
      %v427 = vld [vmem:[#allocation2 + $0x98] sm:$0xff]
      %v428 = vld [vmem:[#allocation2 + $0xa0] sm:$0xff]
      %v429 = vld [vmem:[#allocation2 + $0xa8] sm:$0xff]
      %v430 = vld [vmem:[#allocation2 + $0xb0] sm:$0xff]
      %v431 = vld [vmem:[#allocation2 + $0xb8] sm:$0xff]
      %v432 = vld [vmem:[#allocation2 + $0xc0] sm:$0xff]
      %v433 = vld [vmem:[#allocation2 + $0xc8] sm:$0xff]
      %v434 = vld [vmem:[#allocation2 + $0xd0] sm:$0xff]
      %v435 = vld [vmem:[#allocation2 + $0xd8] sm:$0xff]
      %v436 = vld [vmem:[#allocation2 + $0xe0] sm:$0xff]
      %v437 = vld [vmem:[#allocation2 + $0xe8] sm:$0xff]
      %v438 = vld [vmem:[#allocation2 + $0xf0] sm:$0xff]
      %v439 = vld [vmem:[#allocation2 + $0xf8] sm:$0xff]
      %v440 = vld [vmem:[#allocation2 + $0x100] sm:$0xff]
      %v441 = vld [vmem:[#allocation2 + $0x108] sm:$0xff]
      %v442 = vld [vmem:[#allocation2 + $0x110] sm:$0xff]
      %v443 = vld [vmem:[#allocation2 + $0x118] sm:$0xff]
      %v444 = vld [vmem:[#allocation2 + $0x120] sm:$0xff]
      %v445 = vld [vmem:[#allocation2 + $0x128] sm:$0xff]
      %v446 = vld [vmem:[#allocation2 + $0x130] sm:$0xff]
      %v447 = vld [vmem:[#allocation2 + $0x138] sm:$0xff]
      %v448 = vld [vmem:[#allocation2 + $0x140] sm:$0xff]
      %v449 = vld [vmem:[#allocation2 + $0x148] sm:$0xff]
      %v450 = vld [vmem:[#allocation2 + $0x150] sm:$0xff]
      %v451 = vld [vmem:[#allocation2 + $0x158] sm:$0xff]
      %v452 = vld [vmem:[#allocation2 + $0x160] sm:$0xff]
      %v453 = vld [vmem:[#allocation2 + $0x1] sm:$0xff]
      %v454 = vld [vmem:[#allocation2 + $0x9] sm:$0xff]
      %v455 = vld [vmem:[#allocation2 + $0x11] sm:$0xff]
      %v456 = vld [vmem:[#allocation2 + $0x19] sm:$0xff]
      %v457 = vld [vmem:[#allocation2 + $0x21] sm:$0xff]
      %v458 = vld [vmem:[#allocation2 + $0x29] sm:$0xff]
      %v459 = vld [vmem:[#allocation2 + $0x31] sm:$0xff]
      %v460 = vld [vmem:[#allocation2 + $0x39] sm:$0xff]
      %v461 = vld [vmem:[#allocation2 + $0x41] sm:$0xff]
      %v462 = vld [vmem:[#allocation2 + $0x49] sm:$0xff]
      %v463 = vld [vmem:[#allocation2 + $0x51] sm:$0xff]
      %v464 = vld [vmem:[#allocation2 + $0x59] sm:$0xff]
      %v465 = vld [vmem:[#allocation2 + $0x61] sm:$0xff]
      %v466 = vld [vmem:[#allocation2 + $0x69] sm:$0xff]
      %v467 = vld [vmem:[#allocation2 + $0x71] sm:$0xff]
      %v468 = vld [vmem:[#allocation2 + $0x79] sm:$0xff]
      %v469 = vld [vmem:[#allocation2 + $0x81] sm:$0xff]
      %v470 = vld [vmem:[#allocation2 + $0x89] sm:$0xff]
      %v471 = vld [vmem:[#allocation2 + $0x91] sm:$0xff]
      %v472 = vld [vmem:[#allocation2 + $0x99] sm:$0xff]
      %v473 = vld [vmem:[#allocation2 + $0xa1] sm:$0xff]
      %v474 = vld [vmem:[#allocation2 + $0xa9] sm:$0xff]
      %v475 = vld [vmem:[#allocation2 + $0xb1] sm:$0xff]
      %v476 = vld [vmem:[#allocation2 + $0xb9] sm:$0xff]
      %v477 = vld [vmem:[#allocation2 + $0xc1] sm:$0xff]
      %v478 = vld [vmem:[#allocation2 + $0xc9] sm:$0xff]
      %v479 = vld [vmem:[#allocation2 + $0xd1] sm:$0xff]
      %v480 = vld [vmem:[#allocation2 + $0xd9] sm:$0xff]
      %v481 = vld [vmem:[#allocation2 + $0xe1] sm:$0xff]
      %v482 = vld [vmem:[#allocation2 + $0xe9] sm:$0xff]
      %v483 = vld [vmem:[#allocation2 + $0xf1] sm:$0xff]
      %v484 = vld [vmem:[#allocation2 + $0xf9] sm:$0xff]
      %v485 = vld [vmem:[#allocation2 + $0x101] sm:$0xff]
      %v486 = vld [vmem:[#allocation2 + $0x109] sm:$0xff]
      %v487 = vld [vmem:[#allocation2 + $0x111] sm:$0xff]
      %v488 = vld [vmem:[#allocation2 + $0x119] sm:$0xff]
      %v489 = vld [vmem:[#allocation2 + $0x121] sm:$0xff]
      %v490 = vld [vmem:[#allocation2 + $0x129] sm:$0xff]
      %v491 = vld [vmem:[#allocation2 + $0x131] sm:$0xff]
      %v492 = vld [vmem:[#allocation2 + $0x139] sm:$0xff]
      %v493 = vld [vmem:[#allocation2 + $0x141] sm:$0xff]
      %v494 = vld [vmem:[#allocation2 + $0x149] sm:$0xff]
      %v495 = vld [vmem:[#allocation2 + $0x151] sm:$0xff]
      %v496 = vld [vmem:[#allocation2 + $0x159] sm:$0xff]
      %v497 = vld [vmem:[#allocation2 + $0x161] sm:$0xff]
      %v498 = vld [vmem:[#allocation2 + $0x2] sm:$0xff]
      %v499 = vld [vmem:[#allocation2 + $0xa] sm:$0xff]
      %v500 = vld [vmem:[#allocation2 + $0x12] sm:$0xff]
      %v501 = vld [vmem:[#allocation2 + $0x1a] sm:$0xff]
      %v502 = vld [vmem:[#allocation2 + $0x22] sm:$0xff]
      %v503 = vld [vmem:[#allocation2 + $0x2a] sm:$0xff]
      %v504 = vld [vmem:[#allocation2 + $0x32] sm:$0xff]
      %v505 = vld [vmem:[#allocation2 + $0x3a] sm:$0xff]
      %v506 = vld [vmem:[#allocation2 + $0x42] sm:$0xff]
      %v507 = vld [vmem:[#allocation2 + $0x4a] sm:$0xff]
      %v508 = vld [vmem:[#allocation2 + $0x52] sm:$0xff]
      %v509 = vld [vmem:[#allocation2 + $0x5a] sm:$0xff]
      %v510 = vld [vmem:[#allocation2 + $0x62] sm:$0xff]
      %v511 = vld [vmem:[#allocation2 + $0x6a] sm:$0xff]
      %v512 = vld [vmem:[#allocation2 + $0x72] sm:$0xff]
      %v513 = vld [vmem:[#allocation2 + $0x7a] sm:$0xff]
      %v514 = vld [vmem:[#allocation2 + $0x82] sm:$0xff]
      %v515 = vld [vmem:[#allocation2 + $0x8a] sm:$0xff]
      %v516 = vld [vmem:[#allocation2 + $0x92] sm:$0xff]
      %v517 = vld [vmem:[#allocation2 + $0x9a] sm:$0xff]
      %v518 = vld [vmem:[#allocation2 + $0xa2] sm:$0xff]
      %v519 = vld [vmem:[#allocation2 + $0xaa] sm:$0xff]
      %v520 = vld [vmem:[#allocation2 + $0xb2] sm:$0xff]
      %v521 = vld [vmem:[#allocation2 + $0xba] sm:$0xff]
      %v522 = vld [vmem:[#allocation2 + $0xc2] sm:$0xff]
      %v523 = vld [vmem:[#allocation2 + $0xca] sm:$0xff]
      %v524 = vld [vmem:[#allocation2 + $0xd2] sm:$0xff]
      %v525 = vld [vmem:[#allocation2 + $0xda] sm:$0xff]
      %v526 = vld [vmem:[#allocation2 + $0xe2] sm:$0xff]
      %v527 = vld [vmem:[#allocation2 + $0xea] sm:$0xff]
      %v528 = vld [vmem:[#allocation2 + $0xf2] sm:$0xff]
      %v529 = vld [vmem:[#allocation2 + $0xfa] sm:$0xff]
      %v530 = vld [vmem:[#allocation2 + $0x102] sm:$0xff]
      %v531 = vld [vmem:[#allocation2 + $0x10a] sm:$0xff]
      %v532 = vld [vmem:[#allocation2 + $0x112] sm:$0xff]
      %v533 = vld [vmem:[#allocation2 + $0x11a] sm:$0xff]
      %v534 = vld [vmem:[#allocation2 + $0x122] sm:$0xff]
      %v535 = vld [vmem:[#allocation2 + $0x12a] sm:$0xff]
      %v536 = vld [vmem:[#allocation2 + $0x132] sm:$0xff]
      %v537 = vld [vmem:[#allocation2 + $0x13a] sm:$0xff]
      %v538 = vld [vmem:[#allocation2 + $0x142] sm:$0xff]
      %v539 = vld [vmem:[#allocation2 + $0x14a] sm:$0xff]
      %v540 = vld [vmem:[#allocation2 + $0x152] sm:$0xff]
      %v541 = vld [vmem:[#allocation2 + $0x15a] sm:$0xff]
      %v542 = vld [vmem:[#allocation2 + $0x162] sm:$0xff]
      %v543 = vld [vmem:[#allocation2 + $0x16a] sm:$0xff]
      %v544 = vld [vmem:[#allocation2 + $0x172] sm:$0xff]
      %v545 = vld [vmem:[#allocation2 + $0x13] sm:$0xff]
      %v546 = vld [vmem:[#allocation2 + $0x1b] sm:$0xff]
      %v547 = vld [vmem:[#allocation2 + $0x23] sm:$0xff]
      %v548 = vld [vmem:[#allocation2 + $0x2b] sm:$0xff]
      %v549 = vld [vmem:[#allocation2 + $0x33] sm:$0xff]
      %v550 = vld [vmem:[#allocation2 + $0x3b] sm:$0xff]
      %v551 = vld [vmem:[#allocation2 + $0x43] sm:$0xff]
      %v552 = vld [vmem:[#allocation2 + $0x4b] sm:$0xff]
      %v553 = vld [vmem:[#allocation2 + $0x53] sm:$0xff]
      %v554 = vld [vmem:[#allocation2 + $0x5b] sm:$0xff]
      %v555 = vld [vmem:[#allocation2 + $0x63] sm:$0xff]
      %v556 = vld [vmem:[#allocation2 + $0x6b] sm:$0xff]
      %v557 = vld [vmem:[#allocation2 + $0x73] sm:$0xff]
      %v558 = vld [vmem:[#allocation2 + $0x7b] sm:$0xff]
      %v559 = vld [vmem:[#allocation2 + $0x83] sm:$0xff]
      %v560 = vld [vmem:[#allocation2 + $0x8b] sm:$0xff]
      %v561 = vld [vmem:[#allocation2 + $0x93] sm:$0xff]
      %v562 = vld [vmem:[#allocation2 + $0x9b] sm:$0xff]
      %v563 = vld [vmem:[#allocation2 + $0xa3] sm:$0xff]
      %v564 = vld [vmem:[#allocation2 + $0xab] sm:$0xff]
      %v565 = vld [vmem:[#allocation2 + $0xb3] sm:$0xff]
      %v566 = vld [vmem:[#allocation2 + $0xbb] sm:$0xff]
      %v567 = vld [vmem:[#allocation2 + $0xc3] sm:$0xff]
      %v568 = vld [vmem:[#allocation2 + $0xcb] sm:$0xff]
      %v569 = vld [vmem:[#allocation2 + $0xd3] sm:$0xff]
      %v570 = vld [vmem:[#allocation2 + $0xdb] sm:$0xff]
      %v571 = vld [vmem:[#allocation2 + $0xe3] sm:$0xff]
      %v572 = vld [vmem:[#allocation2 + $0xeb] sm:$0xff]
      %v573 = vld [vmem:[#allocation2 + $0xf3] sm:$0xff]
      %v574 = vld [vmem:[#allocation2 + $0xfb] sm:$0xff]
      %v575 = vld [vmem:[#allocation2 + $0x103] sm:$0xff]
      %v576 = vld [vmem:[#allocation2 + $0x10b] sm:$0xff]
      %v577 = vld [vmem:[#allocation2 + $0x113] sm:$0xff]
      %v578 = vld [vmem:[#allocation2 + $0x11b] sm:$0xff]
      %v579 = vld [vmem:[#allocation2 + $0x123] sm:$0xff]
      %v580 = vld [vmem:[#allocation2 + $0x12b] sm:$0xff]
      %v581 = vld [vmem:[#allocation2 + $0x133] sm:$0xff]
      %v582 = vld [vmem:[#allocation2 + $0x13b] sm:$0xff]
      %v583 = vld [vmem:[#allocation2 + $0x143] sm:$0xff]
      %v584 = vld [vmem:[#allocation2 + $0x14b] sm:$0xff]
      %v585 = vld [vmem:[#allocation2 + $0x153] sm:$0xff]
      %v586 = vld [vmem:[#allocation2 + $0x15b] sm:$0xff]
      %v587 = vld [vmem:[#allocation2 + $0x163] sm:$0xff]
      %v588 = vld [vmem:[#allocation2 + $0x16b] sm:$0xff]
      %v589 = vld [vmem:[#allocation2 + $0x173] sm:$0xff]
      %v590 = vld [vmem:[#allocation2 + $0x14] sm:$0xff]
      %v591 = vld [vmem:[#allocation2 + $0x1c] sm:$0xff]
      %v592 = vld [vmem:[#allocation2 + $0x24] sm:$0xff]
      %v593 = vld [vmem:[#allocation2 + $0x2c] sm:$0xff]
      %v594 = vld [vmem:[#allocation2 + $0x34] sm:$0xff]
      %v595 = vld [vmem:[#allocation2 + $0x3c] sm:$0xff]
      %v596 = vld [vmem:[#allocation2 + $0x44] sm:$0xff]
      %v597 = vld [vmem:[#allocation2 + $0x4c] sm:$0xff]
      %v598 = vld [vmem:[#allocation2 + $0x54] sm:$0xff]
      %v599 = vld [vmem:[#allocation2 + $0x5c] sm:$0xff]
      %v600 = vld [vmem:[#allocation2 + $0x64] sm:$0xff]
      %v601 = vld [vmem:[#allocation2 + $0x6c] sm:$0xff]
      %v602 = vld [vmem:[#allocation2 + $0x74] sm:$0xff]
      %v603 = vld [vmem:[#allocation2 + $0x7c] sm:$0xff]
      %v604 = vld [vmem:[#allocation2 + $0x84] sm:$0xff]
      %v605 = vld [vmem:[#allocation2 + $0x8c] sm:$0xff]
      %v606 = vld [vmem:[#allocation2 + $0x94] sm:$0xff]
      %v607 = vld [vmem:[#allocation2 + $0x9c] sm:$0xff]
      %v608 = vld [vmem:[#allocation2 + $0xa4] sm:$0xff]
      %v609 = vld [vmem:[#allocation2 + $0xac] sm:$0xff]
      %v610 = vld [vmem:[#allocation2 + $0xb4] sm:$0xff]
      %v611 = vld [vmem:[#allocation2 + $0xbc] sm:$0xff]
      %v612 = vld [vmem:[#allocation2 + $0xc4] sm:$0xff]
      %v613 = vld [vmem:[#allocation2 + $0xcc] sm:$0xff]
      %v614 = vld [vmem:[#allocation2 + $0xd4] sm:$0xff]
      %v615 = vld [vmem:[#allocation2 + $0xdc] sm:$0xff]
      %v616 = vld [vmem:[#allocation2 + $0xe4] sm:$0xff]
      %v617 = vld [vmem:[#allocation2 + $0xec] sm:$0xff]
      %v618 = vld [vmem:[#allocation2 + $0xf4] sm:$0xff]
      %v619 = vld [vmem:[#allocation2 + $0xfc] sm:$0xff]
      %v620 = vld [vmem:[#allocation2 + $0x104] sm:$0xff]
      %v621 = vld [vmem:[#allocation2 + $0x10c] sm:$0xff]
      %v622 = vld [vmem:[#allocation2 + $0x114] sm:$0xff]
      %v623 = vld [vmem:[#allocation2 + $0x11c] sm:$0xff]
      %v624 = vld [vmem:[#allocation2 + $0x124] sm:$0xff]
      %v625 = vld [vmem:[#allocation2 + $0x12c] sm:$0xff]
      %v626 = vld [vmem:[#allocation2 + $0x134] sm:$0xff]
      %v627 = vld [vmem:[#allocation2 + $0x13c] sm:$0xff]
      %v628 = vld [vmem:[#allocation2 + $0x144] sm:$0xff]
      %v629 = vld [vmem:[#allocation2 + $0x14c] sm:$0xff]
      %v630 = vld [vmem:[#allocation2 + $0x154] sm:$0xff]
      %v631 = vld [vmem:[#allocation2 + $0x15c] sm:$0xff]
      %v632 = vld [vmem:[#allocation2 + $0x164] sm:$0xff]
      %v633 = vld [vmem:[#allocation2 + $0x16c] sm:$0xff]
      %v634 = vld [vmem:[#allocation2 + $0x174] sm:$0xff]
      %v635 = vld [vmem:[#allocation2 + $0x17c] sm:$0xff]
      %v636 = vld [vmem:[#allocation2 + $0x184] sm:$0xff]
      %v637 = vld [vmem:[#allocation2 + $0x25] sm:$0xff]
      %v638 = vld [vmem:[#allocation2 + $0x2d] sm:$0xff]
      %v639 = vld [vmem:[#allocation2 + $0x35] sm:$0xff]
      %v640 = vld [vmem:[#allocation2 + $0x3d] sm:$0xff]
      %v641 = vld [vmem:[#allocation2 + $0x45] sm:$0xff]
      %v642 = vld [vmem:[#allocation2 + $0x4d] sm:$0xff]
      %v643 = vld [vmem:[#allocation2 + $0x55] sm:$0xff]
      %v644 = vld [vmem:[#allocation2 + $0x5d] sm:$0xff]
      %v645 = vld [vmem:[#allocation2 + $0x65] sm:$0xff]
      %v646 = vld [vmem:[#allocation2 + $0x6d] sm:$0xff]
      %v647 = vld [vmem:[#allocation2 + $0x75] sm:$0xff]
      %v648 = vld [vmem:[#allocation2 + $0x7d] sm:$0xff]
      %v649 = vld [vmem:[#allocation2 + $0x85] sm:$0xff]
      %v650 = vld [vmem:[#allocation2 + $0x8d] sm:$0xff]
      %v651 = vld [vmem:[#allocation2 + $0x95] sm:$0xff]
      %v652 = vld [vmem:[#allocation2 + $0x9d] sm:$0xff]
      %v653 = vld [vmem:[#allocation2 + $0xa5] sm:$0xff]
      %v654 = vld [vmem:[#allocation2 + $0xad] sm:$0xff]
      %v655 = vld [vmem:[#allocation2 + $0xb5] sm:$0xff]
      %v656 = vld [vmem:[#allocation2 + $0xbd] sm:$0xff]
      %v657 = vld [vmem:[#allocation2 + $0xc5] sm:$0xff]
      %v658 = vld [vmem:[#allocation2 + $0xcd] sm:$0xff]
      %v659 = vld [vmem:[#allocation2 + $0xd5] sm:$0xff]
      %v660 = vld [vmem:[#allocation2 + $0xdd] sm:$0xff]
      %v661 = vld [vmem:[#allocation2 + $0xe5] sm:$0xff]
      %v662 = vld [vmem:[#allocation2 + $0xed] sm:$0xff]
      %v663 = vld [vmem:[#allocation2 + $0xf5] sm:$0xff]
      %v664 = vld [vmem:[#allocation2 + $0xfd] sm:$0xff]
      %v665 = vld [vmem:[#allocation2 + $0x105] sm:$0xff]
      %v666 = vld [vmem:[#allocation2 + $0x10d] sm:$0xff]
      %v667 = vld [vmem:[#allocation2 + $0x115] sm:$0xff]
      %v668 = vld [vmem:[#allocation2 + $0x11d] sm:$0xff]
      %v669 = vld [vmem:[#allocation2 + $0x125] sm:$0xff]
      %v670 = vld [vmem:[#allocation2 + $0x12d] sm:$0xff]
      %v671 = vld [vmem:[#allocation2 + $0x135] sm:$0xff]
      %v672 = vld [vmem:[#allocation2 + $0x13d] sm:$0xff]
      %v673 = vld [vmem:[#allocation2 + $0x145] sm:$0xff]
      %v674 = vld [vmem:[#allocation2 + $0x14d] sm:$0xff]
      %v675 = vld [vmem:[#allocation2 + $0x155] sm:$0xff]
      %v676 = vld [vmem:[#allocation2 + $0x15d] sm:$0xff]
      %v677 = vld [vmem:[#allocation2 + $0x165] sm:$0xff]
      %v678 = vld [vmem:[#allocation2 + $0x16d] sm:$0xff]
      %v679 = vld [vmem:[#allocation2 + $0x175] sm:$0xff]
      %v680 = vld [vmem:[#allocation2 + $0x17d] sm:$0xff]
      %v681 = vld [vmem:[#allocation2 + $0x185] sm:$0xff]
      %v682 = vld [vmem:[#allocation2 + $0x26] sm:$0xff]
      %v683 = vld [vmem:[#allocation2 + $0x2e] sm:$0xff]
      %v684 = vld [vmem:[#allocation2 + $0x36] sm:$0xff]
      %v685 = vld [vmem:[#allocation2 + $0x3e] sm:$0xff]
      %v686 = vld [vmem:[#allocation2 + $0x46] sm:$0xff]
      %v687 = vld [vmem:[#allocation2 + $0x4e] sm:$0xff]
      %v688 = vld [vmem:[#allocation2 + $0x56] sm:$0xff]
      %v689 = vld [vmem:[#allocation2 + $0x5e] sm:$0xff]
      %v690 = vld [vmem:[#allocation2 + $0x66] sm:$0xff]
      %v691 = vld [vmem:[#allocation2 + $0x6e] sm:$0xff]
      %v692 = vld [vmem:[#allocation2 + $0x76] sm:$0xff]
      %v693 = vld [vmem:[#allocation2 + $0x7e] sm:$0xff]
      %v694 = vld [vmem:[#allocation2 + $0x86] sm:$0xff]
      %v695 = vld [vmem:[#allocation2 + $0x8e] sm:$0xff]
      %v696 = vld [vmem:[#allocation2 + $0x96] sm:$0xff]
      %v697 = vld [vmem:[#allocation2 + $0x9e] sm:$0xff]
      %v698 = vld [vmem:[#allocation2 + $0xa6] sm:$0xff]
      %v699 = vld [vmem:[#allocation2 + $0xae] sm:$0xff]
      %v700 = vld [vmem:[#allocation2 + $0xb6] sm:$0xff]
      %v701 = vld [vmem:[#allocation2 + $0xbe] sm:$0xff]
      %v702 = vld [vmem:[#allocation2 + $0xc6] sm:$0xff]
      %v703 = vld [vmem:[#allocation2 + $0xce] sm:$0xff]
      %v704 = vld [vmem:[#allocation2 + $0xd6] sm:$0xff]
      %v705 = vld [vmem:[#allocation2 + $0xde] sm:$0xff]
      %v706 = vld [vmem:[#allocation2 + $0xe6] sm:$0xff]
      %v707 = vld [vmem:[#allocation2 + $0xee] sm:$0xff]
      %v708 = vld [vmem:[#allocation2 + $0xf6] sm:$0xff]
      %v709 = vld [vmem:[#allocation2 + $0xfe] sm:$0xff]
      %v710 = vld [vmem:[#allocation2 + $0x106] sm:$0xff]
      %v711 = vld [vmem:[#allocation2 + $0x10e] sm:$0xff]
      %v712 = vld [vmem:[#allocation2 + $0x116] sm:$0xff]
      %v713 = vld [vmem:[#allocation2 + $0x11e] sm:$0xff]
      %v714 = vld [vmem:[#allocation2 + $0x126] sm:$0xff]
      %v715 = vld [vmem:[#allocation2 + $0x12e] sm:$0xff]
      %v716 = vld [vmem:[#allocation2 + $0x136] sm:$0xff]
      %v717 = vld [vmem:[#allocation2 + $0x13e] sm:$0xff]
      %v718 = vld [vmem:[#allocation2 + $0x146] sm:$0xff]
      %v719 = vld [vmem:[#allocation2 + $0x14e] sm:$0xff]
      %v720 = vld [vmem:[#allocation2 + $0x156] sm:$0xff]
      %v721 = vld [vmem:[#allocation2 + $0x15e] sm:$0xff]
      %v722 = vld [vmem:[#allocation2 + $0x166] sm:$0xff]
      %v723 = vld [vmem:[#allocation2 + $0x16e] sm:$0xff]
      %v724 = vld [vmem:[#allocation2 + $0x176] sm:$0xff]
      %v725 = vld [vmem:[#allocation2 + $0x17e] sm:$0xff]
      %v726 = vld [vmem:[#allocation2 + $0x186] sm:$0xff]
      %772 = vrot.lane.b32.xlu0 %v453, 4
      %v773 = vpop.permute.xlu0 %772
      %774 = vrot.lane.b32.xlu0 %v454, 4
      %v775 = vpop.permute.xlu0 %774
      %776 = vrot.lane.b32.xlu0 %v455, 4
      %v777 = vpop.permute.xlu0 %776
      %778 = vrot.lane.b32.xlu0 %v456, 4
      %v779 = vpop.permute.xlu0 %778
      %780 = vrot.lane.b32.xlu0 %v457, 4
      %v781 = vpop.permute.xlu0 %780
      %782 = vrot.lane.b32.xlu0 %v458, 4
      %v783 = vpop.permute.xlu0 %782
      %784 = vrot.lane.b32.xlu0 %v459, 4
      %v785 = vpop.permute.xlu0 %784
      %786 = vrot.lane.b32.xlu0 %v460, 4
      %v787 = vpop.permute.xlu0 %786
      %788 = vrot.lane.b32.xlu0 %v461, 4
      %v789 = vpop.permute.xlu0 %788
      %790 = vrot.lane.b32.xlu0 %v462, 4
      %v791 = vpop.permute.xlu0 %790
      %792 = vrot.lane.b32.xlu0 %v463, 4
      %v793 = vpop.permute.xlu0 %792
      %794 = vrot.lane.b32.xlu0 %v464, 4
      %v795 = vpop.permute.xlu0 %794
      %796 = vrot.lane.b32.xlu0 %v465, 4
      %v797 = vpop.permute.xlu0 %796
      %798 = vrot.lane.b32.xlu0 %v466, 4
      %v799 = vpop.permute.xlu0 %798
      %800 = vrot.lane.b32.xlu0 %v467, 4
      %v801 = vpop.permute.xlu0 %800
      %802 = vrot.lane.b32.xlu0 %v468, 4
      %v803 = vpop.permute.xlu0 %802
      %804 = vrot.lane.b32.xlu0 %v469, 4
      %v805 = vpop.permute.xlu0 %804
      %806 = vrot.lane.b32.xlu0 %v470, 4
      %v807 = vpop.permute.xlu0 %806
      %808 = vrot.lane.b32.xlu0 %v471, 4
      %v809 = vpop.permute.xlu0 %808
      %810 = vrot.lane.b32.xlu0 %v472, 4
      %v811 = vpop.permute.xlu0 %810
      %812 = vrot.lane.b32.xlu0 %v473, 4
      %v813 = vpop.permute.xlu0 %812
      %814 = vrot.lane.b32.xlu0 %v474, 4
      %v815 = vpop.permute.xlu0 %814
      %816 = vrot.lane.b32.xlu0 %v475, 4
      %v817 = vpop.permute.xlu0 %816
      %818 = vrot.lane.b32.xlu0 %v476, 4
      %v819 = vpop.permute.xlu0 %818
      %820 = vrot.lane.b32.xlu0 %v477, 4
      %v821 = vpop.permute.xlu0 %820
      %822 = vrot.lane.b32.xlu0 %v478, 4
      %v823 = vpop.permute.xlu0 %822
      %824 = vrot.lane.b32.xlu0 %v479, 4
      %v825 = vpop.permute.xlu0 %824
      %826 = vrot.lane.b32.xlu0 %v480, 4
      %v827 = vpop.permute.xlu0 %826
      %828 = vrot.lane.b32.xlu0 %v481, 4
      %v829 = vpop.permute.xlu0 %828
      %830 = vrot.lane.b32.xlu0 %v482, 4
      %v831 = vpop.permute.xlu0 %830
      %832 = vrot.lane.b32.xlu0 %v483, 4
      %v833 = vpop.permute.xlu0 %832
      %834 = vrot.lane.b32.xlu0 %v484, 4
      %v835 = vpop.permute.xlu0 %834
      %836 = vrot.lane.b32.xlu0 %v485, 4
      %v837 = vpop.permute.xlu0 %836
      %838 = vrot.lane.b32.xlu0 %v486, 4
      %v839 = vpop.permute.xlu0 %838
      %840 = vrot.lane.b32.xlu0 %v487, 4
      %v841 = vpop.permute.xlu0 %840
      %842 = vrot.lane.b32.xlu0 %v488, 4
      %v843 = vpop.permute.xlu0 %842
      %844 = vrot.lane.b32.xlu0 %v489, 4
      %v845 = vpop.permute.xlu0 %844
      %846 = vrot.lane.b32.xlu0 %v490, 4
      %v847 = vpop.permute.xlu0 %846
      %848 = vrot.lane.b32.xlu0 %v491, 4
      %v849 = vpop.permute.xlu0 %848
      %850 = vrot.lane.b32.xlu0 %v492, 4
      %v851 = vpop.permute.xlu0 %850
      %852 = vrot.lane.b32.xlu0 %v493, 4
      %v853 = vpop.permute.xlu0 %852
      %854 = vrot.lane.b32.xlu0 %v494, 4
      %v855 = vpop.permute.xlu0 %854
      %856 = vrot.lane.b32.xlu0 %v495, 4
      %v857 = vpop.permute.xlu0 %856
      %858 = vrot.lane.b32.xlu0 %v496, 4
      %v859 = vpop.permute.xlu0 %858
      %860 = vrot.lane.b32.xlu0 %v497, 4
      %v861 = vpop.permute.xlu0 %860
      %952 = vrot.lane.b32.xlu0 %v498, 8
      %v953 = vpop.permute.xlu0 %952
      %954 = vrot.lane.b32.xlu0 %v499, 8
      %v955 = vpop.permute.xlu0 %954
      %956 = vrot.lane.b32.xlu0 %v500, 8
      %v957 = vpop.permute.xlu0 %956
      %958 = vrot.lane.b32.xlu0 %v501, 8
      %v959 = vpop.permute.xlu0 %958
      %960 = vrot.lane.b32.xlu0 %v502, 8
      %v961 = vpop.permute.xlu0 %960
      %962 = vrot.lane.b32.xlu0 %v503, 8
      %v963 = vpop.permute.xlu0 %962
      %964 = vrot.lane.b32.xlu0 %v504, 8
      %v965 = vpop.permute.xlu0 %964
      %966 = vrot.lane.b32.xlu0 %v505, 8
      %v967 = vpop.permute.xlu0 %966
      %968 = vrot.lane.b32.xlu0 %v506, 8
      %v969 = vpop.permute.xlu0 %968
      %970 = vrot.lane.b32.xlu0 %v507, 8
      %v971 = vpop.permute.xlu0 %970
      %972 = vrot.lane.b32.xlu0 %v508, 8
      %v973 = vpop.permute.xlu0 %972
      %974 = vrot.lane.b32.xlu0 %v509, 8
      %v975 = vpop.permute.xlu0 %974
      %976 = vrot.lane.b32.xlu0 %v510, 8
      %v977 = vpop.permute.xlu0 %976
      %978 = vrot.lane.b32.xlu0 %v511, 8
      %v979 = vpop.permute.xlu0 %978
      %980 = vrot.lane.b32.xlu0 %v512, 8
      %v981 = vpop.permute.xlu0 %980
      %982 = vrot.lane.b32.xlu0 %v513, 8
      %v983 = vpop.permute.xlu0 %982
      %984 = vrot.lane.b32.xlu0 %v514, 8
      %v985 = vpop.permute.xlu0 %984
      %986 = vrot.lane.b32.xlu0 %v515, 8
      %v987 = vpop.permute.xlu0 %986
      %988 = vrot.lane.b32.xlu0 %v516, 8
      %v989 = vpop.permute.xlu0 %988
      %990 = vrot.lane.b32.xlu0 %v517, 8
      %v991 = vpop.permute.xlu0 %990
      %992 = vrot.lane.b32.xlu0 %v518, 8
      %v993 = vpop.permute.xlu0 %992
      %994 = vrot.lane.b32.xlu0 %v519, 8
      %v995 = vpop.permute.xlu0 %994
      %996 = vrot.lane.b32.xlu0 %v520, 8
      %v997 = vpop.permute.xlu0 %996
      %998 = vrot.lane.b32.xlu0 %v521, 8
      %v999 = vpop.permute.xlu0 %998
      %1000 = vrot.lane.b32.xlu0 %v522, 8
      %v1001 = vpop.permute.xlu0 %1000
      %1002 = vrot.lane.b32.xlu0 %v523, 8
      %v1003 = vpop.permute.xlu0 %1002
      %1004 = vrot.lane.b32.xlu0 %v524, 8
      %v1005 = vpop.permute.xlu0 %1004
      %1006 = vrot.lane.b32.xlu0 %v525, 8
      %v1007 = vpop.permute.xlu0 %1006
      %1008 = vrot.lane.b32.xlu0 %v526, 8
      %v1009 = vpop.permute.xlu0 %1008
      %1010 = vrot.lane.b32.xlu0 %v527, 8
      %v1011 = vpop.permute.xlu0 %1010
      %1012 = vrot.lane.b32.xlu0 %v528, 8
      %v1013 = vpop.permute.xlu0 %1012
      %1014 = vrot.lane.b32.xlu0 %v529, 8
      %v1015 = vpop.permute.xlu0 %1014
      %1016 = vrot.lane.b32.xlu0 %v530, 8
      %v1017 = vpop.permute.xlu0 %1016
      %1018 = vrot.lane.b32.xlu0 %v531, 8
      %v1019 = vpop.permute.xlu0 %1018
      %1020 = vrot.lane.b32.xlu0 %v532, 8
      %v1021 = vpop.permute.xlu0 %1020
      %1022 = vrot.lane.b32.xlu0 %v533, 8
      %v1023 = vpop.permute.xlu0 %1022
      %1024 = vrot.lane.b32.xlu0 %v534, 8
      %v1025 = vpop.permute.xlu0 %1024
      %1026 = vrot.lane.b32.xlu0 %v535, 8
      %v1027 = vpop.permute.xlu0 %1026
      %1028 = vrot.lane.b32.xlu0 %v536, 8
      %v1029 = vpop.permute.xlu0 %1028
      %1030 = vrot.lane.b32.xlu0 %v537, 8
      %v1031 = vpop.permute.xlu0 %1030
      %1032 = vrot.lane.b32.xlu0 %v538, 8
      %v1033 = vpop.permute.xlu0 %1032
      %1034 = vrot.lane.b32.xlu0 %v539, 8
      %v1035 = vpop.permute.xlu0 %1034
      %1036 = vrot.lane.b32.xlu0 %v540, 8
      %v1037 = vpop.permute.xlu0 %1036
      %1038 = vrot.lane.b32.xlu0 %v541, 8
      %v1039 = vpop.permute.xlu0 %1038
      %1040 = vrot.lane.b32.xlu0 %v542, 8
      %v1041 = vpop.permute.xlu0 %1040
      %1089 = vrot.lane.b32.xlu0 %v500, 12
      %v1090 = vpop.permute.xlu0 %1089
      %1091 = vrot.lane.b32.xlu0 %v501, 12
      %v1092 = vpop.permute.xlu0 %1091
      %1093 = vrot.lane.b32.xlu0 %v502, 12
      %v1094 = vpop.permute.xlu0 %1093
      %1095 = vrot.lane.b32.xlu0 %v503, 12
      %v1096 = vpop.permute.xlu0 %1095
      %1097 = vrot.lane.b32.xlu0 %v504, 12
      %v1098 = vpop.permute.xlu0 %1097
      %1099 = vrot.lane.b32.xlu0 %v505, 12
      %v1100 = vpop.permute.xlu0 %1099
      %1101 = vrot.lane.b32.xlu0 %v506, 12
      %v1102 = vpop.permute.xlu0 %1101
      %1103 = vrot.lane.b32.xlu0 %v507, 12
      %v1104 = vpop.permute.xlu0 %1103
      %1105 = vrot.lane.b32.xlu0 %v508, 12
      %v1106 = vpop.permute.xlu0 %1105
      %1107 = vrot.lane.b32.xlu0 %v509, 12
      %v1108 = vpop.permute.xlu0 %1107
      %1109 = vrot.lane.b32.xlu0 %v510, 12
      %v1110 = vpop.permute.xlu0 %1109
      %1111 = vrot.lane.b32.xlu0 %v511, 12
      %v1112 = vpop.permute.xlu0 %1111
      %1113 = vrot.lane.b32.xlu0 %v512, 12
      %v1114 = vpop.permute.xlu0 %1113
      %1115 = vrot.lane.b32.xlu0 %v513, 12
      %v1116 = vpop.permute.xlu0 %1115
      %1117 = vrot.lane.b32.xlu0 %v514, 12
      %v1118 = vpop.permute.xlu0 %1117
      %1119 = vrot.lane.b32.xlu0 %v515, 12
      %v1120 = vpop.permute.xlu0 %1119
      %1121 = vrot.lane.b32.xlu0 %v516, 12
      %v1122 = vpop.permute.xlu0 %1121
      %1123 = vrot.lane.b32.xlu0 %v517, 12
      %v1124 = vpop.permute.xlu0 %1123
      %1125 = vrot.lane.b32.xlu0 %v518, 12
      %v1126 = vpop.permute.xlu0 %1125
      %1127 = vrot.lane.b32.xlu0 %v519, 12
      %v1128 = vpop.permute.xlu0 %1127
      %1129 = vrot.lane.b32.xlu0 %v520, 12
      %v1130 = vpop.permute.xlu0 %1129
      %1131 = vrot.lane.b32.xlu0 %v521, 12
      %v1132 = vpop.permute.xlu0 %1131
      %1133 = vrot.lane.b32.xlu0 %v522, 12
      %v1134 = vpop.permute.xlu0 %1133
      %1135 = vrot.lane.b32.xlu0 %v523, 12
      %v1136 = vpop.permute.xlu0 %1135
      %1137 = vrot.lane.b32.xlu0 %v524, 12
      %v1138 = vpop.permute.xlu0 %1137
      %1139 = vrot.lane.b32.xlu0 %v525, 12
      %v1140 = vpop.permute.xlu0 %1139
      %1141 = vrot.lane.b32.xlu0 %v526, 12
      %v1142 = vpop.permute.xlu0 %1141
      %1143 = vrot.lane.b32.xlu0 %v527, 12
      %v1144 = vpop.permute.xlu0 %1143
      %1145 = vrot.lane.b32.xlu0 %v528, 12
      %v1146 = vpop.permute.xlu0 %1145
      %1147 = vrot.lane.b32.xlu0 %v529, 12
      %v1148 = vpop.permute.xlu0 %1147
      %1149 = vrot.lane.b32.xlu0 %v530, 12
      %v1150 = vpop.permute.xlu0 %1149
      %1151 = vrot.lane.b32.xlu0 %v531, 12
      %v1152 = vpop.permute.xlu0 %1151
      %1153 = vrot.lane.b32.xlu0 %v532, 12
      %v1154 = vpop.permute.xlu0 %1153
      %1155 = vrot.lane.b32.xlu0 %v533, 12
      %v1156 = vpop.permute.xlu0 %1155
      %1157 = vrot.lane.b32.xlu0 %v534, 12
      %v1158 = vpop.permute.xlu0 %1157
      %1159 = vrot.lane.b32.xlu0 %v535, 12
      %v1160 = vpop.permute.xlu0 %1159
      %1161 = vrot.lane.b32.xlu0 %v536, 12
      %v1162 = vpop.permute.xlu0 %1161
      %1163 = vrot.lane.b32.xlu0 %v537, 12
      %v1164 = vpop.permute.xlu0 %1163
      %1165 = vrot.lane.b32.xlu0 %v538, 12
      %v1166 = vpop.permute.xlu0 %1165
      %1167 = vrot.lane.b32.xlu0 %v539, 12
      %v1168 = vpop.permute.xlu0 %1167
      %1169 = vrot.lane.b32.xlu0 %v540, 12
      %v1170 = vpop.permute.xlu0 %1169
      %1171 = vrot.lane.b32.xlu0 %v541, 12
      %v1172 = vpop.permute.xlu0 %1171
      %1173 = vrot.lane.b32.xlu0 %v542, 12
      %v1174 = vpop.permute.xlu0 %1173
      %1175 = vrot.lane.b32.xlu0 %v543, 12
      %v1176 = vpop.permute.xlu0 %1175
      %1177 = vrot.lane.b32.xlu0 %v544, 12
      %v1178 = vpop.permute.xlu0 %1177
      %1269 = vrot.lane.b32.xlu0 %v545, 16
      %v1270 = vpop.permute.xlu0 %1269
      %1271 = vrot.lane.b32.xlu0 %v546, 16
      %v1272 = vpop.permute.xlu0 %1271
      %1273 = vrot.lane.b32.xlu0 %v547, 16
      %v1274 = vpop.permute.xlu0 %1273
      %1275 = vrot.lane.b32.xlu0 %v548, 16
      %v1276 = vpop.permute.xlu0 %1275
      %1277 = vrot.lane.b32.xlu0 %v549, 16
      %v1278 = vpop.permute.xlu0 %1277
      %1279 = vrot.lane.b32.xlu0 %v550, 16
      %v1280 = vpop.permute.xlu0 %1279
      %1281 = vrot.lane.b32.xlu0 %v551, 16
      %v1282 = vpop.permute.xlu0 %1281
      %1283 = vrot.lane.b32.xlu0 %v552, 16
      %v1284 = vpop.permute.xlu0 %1283
      %1285 = vrot.lane.b32.xlu0 %v553, 16
      %v1286 = vpop.permute.xlu0 %1285
      %1287 = vrot.lane.b32.xlu0 %v554, 16
      %v1288 = vpop.permute.xlu0 %1287
      %1289 = vrot.lane.b32.xlu0 %v555, 16
      %v1290 = vpop.permute.xlu0 %1289
      %1291 = vrot.lane.b32.xlu0 %v556, 16
      %v1292 = vpop.permute.xlu0 %1291
      %1293 = vrot.lane.b32.xlu0 %v557, 16
      %v1294 = vpop.permute.xlu0 %1293
      %1295 = vrot.lane.b32.xlu0 %v558, 16
      %v1296 = vpop.permute.xlu0 %1295
      %1297 = vrot.lane.b32.xlu0 %v559, 16
      %v1298 = vpop.permute.xlu0 %1297
      %1299 = vrot.lane.b32.xlu0 %v560, 16
      %v1300 = vpop.permute.xlu0 %1299
      %1301 = vrot.lane.b32.xlu0 %v561, 16
      %v1302 = vpop.permute.xlu0 %1301
      %1303 = vrot.lane.b32.xlu0 %v562, 16
      %v1304 = vpop.permute.xlu0 %1303
      %1305 = vrot.lane.b32.xlu0 %v563, 16
      %v1306 = vpop.permute.xlu0 %1305
      %1307 = vrot.lane.b32.xlu0 %v564, 16
      %v1308 = vpop.permute.xlu0 %1307
      %1309 = vrot.lane.b32.xlu0 %v565, 16
      %v1310 = vpop.permute.xlu0 %1309
      %1311 = vrot.lane.b32.xlu0 %v566, 16
      %v1312 = vpop.permute.xlu0 %1311
      %1313 = vrot.lane.b32.xlu0 %v567, 16
      %v1314 = vpop.permute.xlu0 %1313
      %1315 = vrot.lane.b32.xlu0 %v568, 16
      %v1316 = vpop.permute.xlu0 %1315
      %1317 = vrot.lane.b32.xlu0 %v569, 16
      %v1318 = vpop.permute.xlu0 %1317
      %1319 = vrot.lane.b32.xlu0 %v570, 16
      %v1320 = vpop.permute.xlu0 %1319
      %1321 = vrot.lane.b32.xlu0 %v571, 16
      %v1322 = vpop.permute.xlu0 %1321
      %1323 = vrot.lane.b32.xlu0 %v572, 16
      %v1324 = vpop.permute.xlu0 %1323
      %1325 = vrot.lane.b32.xlu0 %v573, 16
      %v1326 = vpop.permute.xlu0 %1325
      %1327 = vrot.lane.b32.xlu0 %v574, 16
      %v1328 = vpop.permute.xlu0 %1327
      %1329 = vrot.lane.b32.xlu0 %v575, 16
      %v1330 = vpop.permute.xlu0 %1329
      %1331 = vrot.lane.b32.xlu0 %v576, 16
      %v1332 = vpop.permute.xlu0 %1331
      %1333 = vrot.lane.b32.xlu0 %v577, 16
      %v1334 = vpop.permute.xlu0 %1333
      %1335 = vrot.lane.b32.xlu0 %v578, 16
      %v1336 = vpop.permute.xlu0 %1335
      %1337 = vrot.lane.b32.xlu0 %v579, 16
      %v1338 = vpop.permute.xlu0 %1337
      %1339 = vrot.lane.b32.xlu0 %v580, 16
      %v1340 = vpop.permute.xlu0 %1339
      %1341 = vrot.lane.b32.xlu0 %v581, 16
      %v1342 = vpop.permute.xlu0 %1341
      %1343 = vrot.lane.b32.xlu0 %v582, 16
      %v1344 = vpop.permute.xlu0 %1343
      %1345 = vrot.lane.b32.xlu0 %v583, 16
      %v1346 = vpop.permute.xlu0 %1345
      %1347 = vrot.lane.b32.xlu0 %v584, 16
      %v1348 = vpop.permute.xlu0 %1347
      %1349 = vrot.lane.b32.xlu0 %v585, 16
      %v1350 = vpop.permute.xlu0 %1349
      %1351 = vrot.lane.b32.xlu0 %v586, 16
      %v1352 = vpop.permute.xlu0 %1351
      %1353 = vrot.lane.b32.xlu0 %v587, 16
      %v1354 = vpop.permute.xlu0 %1353
      %1355 = vrot.lane.b32.xlu0 %v588, 16
      %v1356 = vpop.permute.xlu0 %1355
      %1357 = vrot.lane.b32.xlu0 %v589, 16
      %v1358 = vpop.permute.xlu0 %1357
      %1449 = vrot.lane.b32.xlu0 %v590, 20
      %v1450 = vpop.permute.xlu0 %1449
      %1451 = vrot.lane.b32.xlu0 %v591, 20
      %v1452 = vpop.permute.xlu0 %1451
      %1453 = vrot.lane.b32.xlu0 %v592, 20
      %v1454 = vpop.permute.xlu0 %1453
      %1455 = vrot.lane.b32.xlu0 %v593, 20
      %v1456 = vpop.permute.xlu0 %1455
      %1457 = vrot.lane.b32.xlu0 %v594, 20
      %v1458 = vpop.permute.xlu0 %1457
      %1459 = vrot.lane.b32.xlu0 %v595, 20
      %v1460 = vpop.permute.xlu0 %1459
      %1461 = vrot.lane.b32.xlu0 %v596, 20
      %v1462 = vpop.permute.xlu0 %1461
      %1463 = vrot.lane.b32.xlu0 %v597, 20
      %v1464 = vpop.permute.xlu0 %1463
      %1465 = vrot.lane.b32.xlu0 %v598, 20
      %v1466 = vpop.permute.xlu0 %1465
      %1467 = vrot.lane.b32.xlu0 %v599, 20
      %v1468 = vpop.permute.xlu0 %1467
      %1469 = vrot.lane.b32.xlu0 %v600, 20
      %v1470 = vpop.permute.xlu0 %1469
      %1471 = vrot.lane.b32.xlu0 %v601, 20
      %v1472 = vpop.permute.xlu0 %1471
      %1473 = vrot.lane.b32.xlu0 %v602, 20
      %v1474 = vpop.permute.xlu0 %1473
      %1475 = vrot.lane.b32.xlu0 %v603, 20
      %v1476 = vpop.permute.xlu0 %1475
      %1477 = vrot.lane.b32.xlu0 %v604, 20
      %v1478 = vpop.permute.xlu0 %1477
      %1479 = vrot.lane.b32.xlu0 %v605, 20
      %v1480 = vpop.permute.xlu0 %1479
      %1481 = vrot.lane.b32.xlu0 %v606, 20
      %v1482 = vpop.permute.xlu0 %1481
      %1483 = vrot.lane.b32.xlu0 %v607, 20
      %v1484 = vpop.permute.xlu0 %1483
      %1485 = vrot.lane.b32.xlu0 %v608, 20
      %v1486 = vpop.permute.xlu0 %1485
      %1487 = vrot.lane.b32.xlu0 %v609, 20
      %v1488 = vpop.permute.xlu0 %1487
      %1489 = vrot.lane.b32.xlu0 %v610, 20
      %v1490 = vpop.permute.xlu0 %1489
      %1491 = vrot.lane.b32.xlu0 %v611, 20
      %v1492 = vpop.permute.xlu0 %1491
      %1493 = vrot.lane.b32.xlu0 %v612, 20
      %v1494 = vpop.permute.xlu0 %1493
      %1495 = vrot.lane.b32.xlu0 %v613, 20
      %v1496 = vpop.permute.xlu0 %1495
      %1497 = vrot.lane.b32.xlu0 %v614, 20
      %v1498 = vpop.permute.xlu0 %1497
      %1499 = vrot.lane.b32.xlu0 %v615, 20
      %v1500 = vpop.permute.xlu0 %1499
      %1501 = vrot.lane.b32.xlu0 %v616, 20
      %v1502 = vpop.permute.xlu0 %1501
      %1503 = vrot.lane.b32.xlu0 %v617, 20
      %v1504 = vpop.permute.xlu0 %1503
      %1505 = vrot.lane.b32.xlu0 %v618, 20
      %v1506 = vpop.permute.xlu0 %1505
      %1507 = vrot.lane.b32.xlu0 %v619, 20
      %v1508 = vpop.permute.xlu0 %1507
      %1509 = vrot.lane.b32.xlu0 %v620, 20
      %v1510 = vpop.permute.xlu0 %1509
      %1511 = vrot.lane.b32.xlu0 %v621, 20
      %v1512 = vpop.permute.xlu0 %1511
      %1513 = vrot.lane.b32.xlu0 %v622, 20
      %v1514 = vpop.permute.xlu0 %1513
      %1515 = vrot.lane.b32.xlu0 %v623, 20
      %v1516 = vpop.permute.xlu0 %1515
      %1517 = vrot.lane.b32.xlu0 %v624, 20
      %v1518 = vpop.permute.xlu0 %1517
      %1519 = vrot.lane.b32.xlu0 %v625, 20
      %v1520 = vpop.permute.xlu0 %1519
      %1521 = vrot.lane.b32.xlu0 %v626, 20
      %v1522 = vpop.permute.xlu0 %1521
      %1523 = vrot.lane.b32.xlu0 %v627, 20
      %v1524 = vpop.permute.xlu0 %1523
      %1525 = vrot.lane.b32.xlu0 %v628, 20
      %v1526 = vpop.permute.xlu0 %1525
      %1527 = vrot.lane.b32.xlu0 %v629, 20
      %v1528 = vpop.permute.xlu0 %1527
      %1529 = vrot.lane.b32.xlu0 %v630, 20
      %v1530 = vpop.permute.xlu0 %1529
      %1531 = vrot.lane.b32.xlu0 %v631, 20
      %v1532 = vpop.permute.xlu0 %1531
      %1533 = vrot.lane.b32.xlu0 %v632, 20
      %v1534 = vpop.permute.xlu0 %1533
      %1535 = vrot.lane.b32.xlu0 %v633, 20
      %v1536 = vpop.permute.xlu0 %1535
      %1537 = vrot.lane.b32.xlu0 %v634, 20
      %v1538 = vpop.permute.xlu0 %1537
      %1586 = vrot.lane.b32.xlu0 %v592, 24
      %v1587 = vpop.permute.xlu0 %1586
      %1588 = vrot.lane.b32.xlu0 %v593, 24
      %v1589 = vpop.permute.xlu0 %1588
      %1590 = vrot.lane.b32.xlu0 %v594, 24
      %v1591 = vpop.permute.xlu0 %1590
      %1592 = vrot.lane.b32.xlu0 %v595, 24
      %v1593 = vpop.permute.xlu0 %1592
      %1594 = vrot.lane.b32.xlu0 %v596, 24
      %v1595 = vpop.permute.xlu0 %1594
      %1596 = vrot.lane.b32.xlu0 %v597, 24
      %v1597 = vpop.permute.xlu0 %1596
      %1598 = vrot.lane.b32.xlu0 %v598, 24
      %v1599 = vpop.permute.xlu0 %1598
      %1600 = vrot.lane.b32.xlu0 %v599, 24
      %v1601 = vpop.permute.xlu0 %1600
      %1602 = vrot.lane.b32.xlu0 %v600, 24
      %v1603 = vpop.permute.xlu0 %1602
      %1604 = vrot.lane.b32.xlu0 %v601, 24
      %v1605 = vpop.permute.xlu0 %1604
      %1606 = vrot.lane.b32.xlu0 %v602, 24
      %v1607 = vpop.permute.xlu0 %1606
      %1608 = vrot.lane.b32.xlu0 %v603, 24
      %v1609 = vpop.permute.xlu0 %1608
      %1610 = vrot.lane.b32.xlu0 %v604, 24
      %v1611 = vpop.permute.xlu0 %1610
      %1612 = vrot.lane.b32.xlu0 %v605, 24
      %v1613 = vpop.permute.xlu0 %1612
      %1614 = vrot.lane.b32.xlu0 %v606, 24
      %v1615 = vpop.permute.xlu0 %1614
      %1616 = vrot.lane.b32.xlu0 %v607, 24
      %v1617 = vpop.permute.xlu0 %1616
      %1618 = vrot.lane.b32.xlu0 %v608, 24
      %v1619 = vpop.permute.xlu0 %1618
      %1620 = vrot.lane.b32.xlu0 %v609, 24
      %v1621 = vpop.permute.xlu0 %1620
      %1622 = vrot.lane.b32.xlu0 %v610, 24
      %v1623 = vpop.permute.xlu0 %1622
      %1624 = vrot.lane.b32.xlu0 %v611, 24
      %v1625 = vpop.permute.xlu0 %1624
      %1626 = vrot.lane.b32.xlu0 %v612, 24
      %v1627 = vpop.permute.xlu0 %1626
      %1628 = vrot.lane.b32.xlu0 %v613, 24
      %v1629 = vpop.permute.xlu0 %1628
      %1630 = vrot.lane.b32.xlu0 %v614, 24
      %v1631 = vpop.permute.xlu0 %1630
      %1632 = vrot.lane.b32.xlu0 %v615, 24
      %v1633 = vpop.permute.xlu0 %1632
      %1634 = vrot.lane.b32.xlu0 %v616, 24
      %v1635 = vpop.permute.xlu0 %1634
      %1636 = vrot.lane.b32.xlu0 %v617, 24
      %v1637 = vpop.permute.xlu0 %1636
      %1638 = vrot.lane.b32.xlu0 %v618, 24
      %v1639 = vpop.permute.xlu0 %1638
      %1640 = vrot.lane.b32.xlu0 %v619, 24
      %v1641 = vpop.permute.xlu0 %1640
      %1642 = vrot.lane.b32.xlu0 %v620, 24
      %v1643 = vpop.permute.xlu0 %1642
      %1644 = vrot.lane.b32.xlu0 %v621, 24
      %v1645 = vpop.permute.xlu0 %1644
      %1646 = vrot.lane.b32.xlu0 %v622, 24
      %v1647 = vpop.permute.xlu0 %1646
      %1648 = vrot.lane.b32.xlu0 %v623, 24
      %v1649 = vpop.permute.xlu0 %1648
      %1650 = vrot.lane.b32.xlu0 %v624, 24
      %v1651 = vpop.permute.xlu0 %1650
      %1652 = vrot.lane.b32.xlu0 %v625, 24
      %v1653 = vpop.permute.xlu0 %1652
      %1654 = vrot.lane.b32.xlu0 %v626, 24
      %v1655 = vpop.permute.xlu0 %1654
      %1656 = vrot.lane.b32.xlu0 %v627, 24
      %v1657 = vpop.permute.xlu0 %1656
      %1658 = vrot.lane.b32.xlu0 %v628, 24
      %v1659 = vpop.permute.xlu0 %1658
      %1660 = vrot.lane.b32.xlu0 %v629, 24
      %v1661 = vpop.permute.xlu0 %1660
      %1662 = vrot.lane.b32.xlu0 %v630, 24
      %v1663 = vpop.permute.xlu0 %1662
      %1664 = vrot.lane.b32.xlu0 %v631, 24
      %v1665 = vpop.permute.xlu0 %1664
      %1666 = vrot.lane.b32.xlu0 %v632, 24
      %v1667 = vpop.permute.xlu0 %1666
      %1668 = vrot.lane.b32.xlu0 %v633, 24
      %v1669 = vpop.permute.xlu0 %1668
      %1670 = vrot.lane.b32.xlu0 %v634, 24
      %v1671 = vpop.permute.xlu0 %1670
      %1672 = vrot.lane.b32.xlu0 %v635, 24
      %v1673 = vpop.permute.xlu0 %1672
      %1674 = vrot.lane.b32.xlu0 %v636, 24
      %v1675 = vpop.permute.xlu0 %1674
      %1766 = vrot.lane.b32.xlu0 %v637, 28
      %v1767 = vpop.permute.xlu0 %1766
      %1768 = vrot.lane.b32.xlu0 %v638, 28
      %v1769 = vpop.permute.xlu0 %1768
      %1770 = vrot.lane.b32.xlu0 %v639, 28
      %v1771 = vpop.permute.xlu0 %1770
      %1772 = vrot.lane.b32.xlu0 %v640, 28
      %v1773 = vpop.permute.xlu0 %1772
      %1774 = vrot.lane.b32.xlu0 %v641, 28
      %v1775 = vpop.permute.xlu0 %1774
      %1776 = vrot.lane.b32.xlu0 %v642, 28
      %v1777 = vpop.permute.xlu0 %1776
      %1778 = vrot.lane.b32.xlu0 %v643, 28
      %v1779 = vpop.permute.xlu0 %1778
      %1780 = vrot.lane.b32.xlu0 %v644, 28
      %v1781 = vpop.permute.xlu0 %1780
      %1782 = vrot.lane.b32.xlu0 %v645, 28
      %v1783 = vpop.permute.xlu0 %1782
      %1784 = vrot.lane.b32.xlu0 %v646, 28
      %v1785 = vpop.permute.xlu0 %1784
      %1786 = vrot.lane.b32.xlu0 %v647, 28
      %v1787 = vpop.permute.xlu0 %1786
      %1788 = vrot.lane.b32.xlu0 %v648, 28
      %v1789 = vpop.permute.xlu0 %1788
      %1790 = vrot.lane.b32.xlu0 %v649, 28
      %v1791 = vpop.permute.xlu0 %1790
      %1792 = vrot.lane.b32.xlu0 %v650, 28
      %v1793 = vpop.permute.xlu0 %1792
      %1794 = vrot.lane.b32.xlu0 %v651, 28
      %v1795 = vpop.permute.xlu0 %1794
      %1796 = vrot.lane.b32.xlu0 %v652, 28
      %v1797 = vpop.permute.xlu0 %1796
      %1798 = vrot.lane.b32.xlu0 %v653, 28
      %v1799 = vpop.permute.xlu0 %1798
      %1800 = vrot.lane.b32.xlu0 %v654, 28
      %v1801 = vpop.permute.xlu0 %1800
      %1802 = vrot.lane.b32.xlu0 %v655, 28
      %v1803 = vpop.permute.xlu0 %1802
      %1804 = vrot.lane.b32.xlu0 %v656, 28
      %v1805 = vpop.permute.xlu0 %1804
      %1806 = vrot.lane.b32.xlu0 %v657, 28
      %v1807 = vpop.permute.xlu0 %1806
      %1808 = vrot.lane.b32.xlu0 %v658, 28
      %v1809 = vpop.permute.xlu0 %1808
      %1810 = vrot.lane.b32.xlu0 %v659, 28
      %v1811 = vpop.permute.xlu0 %1810
      %1812 = vrot.lane.b32.xlu0 %v660, 28
      %v1813 = vpop.permute.xlu0 %1812
      %1814 = vrot.lane.b32.xlu0 %v661, 28
      %v1815 = vpop.permute.xlu0 %1814
      %1816 = vrot.lane.b32.xlu0 %v662, 28
      %v1817 = vpop.permute.xlu0 %1816
      %1818 = vrot.lane.b32.xlu0 %v663, 28
      %v1819 = vpop.permute.xlu0 %1818
      %1820 = vrot.lane.b32.xlu0 %v664, 28
      %v1821 = vpop.permute.xlu0 %1820
      %1822 = vrot.lane.b32.xlu0 %v665, 28
      %v1823 = vpop.permute.xlu0 %1822
      %1824 = vrot.lane.b32.xlu0 %v666, 28
      %v1825 = vpop.permute.xlu0 %1824
      %1826 = vrot.lane.b32.xlu0 %v667, 28
      %v1827 = vpop.permute.xlu0 %1826
      %1828 = vrot.lane.b32.xlu0 %v668, 28
      %v1829 = vpop.permute.xlu0 %1828
      %1830 = vrot.lane.b32.xlu0 %v669, 28
      %v1831 = vpop.permute.xlu0 %1830
      %1832 = vrot.lane.b32.xlu0 %v670, 28
      %v1833 = vpop.permute.xlu0 %1832
      %1834 = vrot.lane.b32.xlu0 %v671, 28
      %v1835 = vpop.permute.xlu0 %1834
      %1836 = vrot.lane.b32.xlu0 %v672, 28
      %v1837 = vpop.permute.xlu0 %1836
      %1838 = vrot.lane.b32.xlu0 %v673, 28
      %v1839 = vpop.permute.xlu0 %1838
      %1840 = vrot.lane.b32.xlu0 %v674, 28
      %v1841 = vpop.permute.xlu0 %1840
      %1842 = vrot.lane.b32.xlu0 %v675, 28
      %v1843 = vpop.permute.xlu0 %1842
      %1844 = vrot.lane.b32.xlu0 %v676, 28
      %v1845 = vpop.permute.xlu0 %1844
      %1846 = vrot.lane.b32.xlu0 %v677, 28
      %v1847 = vpop.permute.xlu0 %1846
      %1848 = vrot.lane.b32.xlu0 %v678, 28
      %v1849 = vpop.permute.xlu0 %1848
      %1850 = vrot.lane.b32.xlu0 %v679, 28
      %v1851 = vpop.permute.xlu0 %1850
      %1852 = vrot.lane.b32.xlu0 %v680, 28
      %v1853 = vpop.permute.xlu0 %1852
      %1854 = vrot.lane.b32.xlu0 %v681, 28
      %v1855 = vpop.permute.xlu0 %1854
      %1946 = vrot.lane.b32.xlu0 %v682, 32
      %v1947 = vpop.permute.xlu0 %1946
      %1948 = vrot.lane.b32.xlu0 %v683, 32
      %v1949 = vpop.permute.xlu0 %1948
      %1950 = vrot.lane.b32.xlu0 %v684, 32
      %v1951 = vpop.permute.xlu0 %1950
      %1952 = vrot.lane.b32.xlu0 %v685, 32
      %v1953 = vpop.permute.xlu0 %1952
      %1954 = vrot.lane.b32.xlu0 %v686, 32
      %v1955 = vpop.permute.xlu0 %1954
      %1956 = vrot.lane.b32.xlu0 %v687, 32
      %v1957 = vpop.permute.xlu0 %1956
      %1958 = vrot.lane.b32.xlu0 %v688, 32
      %v1959 = vpop.permute.xlu0 %1958
      %1960 = vrot.lane.b32.xlu0 %v689, 32
      %v1961 = vpop.permute.xlu0 %1960
      %1962 = vrot.lane.b32.xlu0 %v690, 32
      %v1963 = vpop.permute.xlu0 %1962
      %1964 = vrot.lane.b32.xlu0 %v691, 32
      %v1965 = vpop.permute.xlu0 %1964
      %1966 = vrot.lane.b32.xlu0 %v692, 32
      %v1967 = vpop.permute.xlu0 %1966
      %1968 = vrot.lane.b32.xlu0 %v693, 32
      %v1969 = vpop.permute.xlu0 %1968
      %1970 = vrot.lane.b32.xlu0 %v694, 32
      %v1971 = vpop.permute.xlu0 %1970
      %1972 = vrot.lane.b32.xlu0 %v695, 32
      %v1973 = vpop.permute.xlu0 %1972
      %1974 = vrot.lane.b32.xlu0 %v696, 32
      %v1975 = vpop.permute.xlu0 %1974
      %1976 = vrot.lane.b32.xlu0 %v697, 32
      %v1977 = vpop.permute.xlu0 %1976
      %1978 = vrot.lane.b32.xlu0 %v698, 32
      %v1979 = vpop.permute.xlu0 %1978
      %1980 = vrot.lane.b32.xlu0 %v699, 32
      %v1981 = vpop.permute.xlu0 %1980
      %1982 = vrot.lane.b32.xlu0 %v700, 32
      %v1983 = vpop.permute.xlu0 %1982
      %1984 = vrot.lane.b32.xlu0 %v701, 32
      %v1985 = vpop.permute.xlu0 %1984
      %1986 = vrot.lane.b32.xlu0 %v702, 32
      %v1987 = vpop.permute.xlu0 %1986
      %1988 = vrot.lane.b32.xlu0 %v703, 32
      %v1989 = vpop.permute.xlu0 %1988
      %1990 = vrot.lane.b32.xlu0 %v704, 32
      %v1991 = vpop.permute.xlu0 %1990
      %1992 = vrot.lane.b32.xlu0 %v705, 32
      %v1993 = vpop.permute.xlu0 %1992
      %1994 = vrot.lane.b32.xlu0 %v706, 32
      %v1995 = vpop.permute.xlu0 %1994
      %1996 = vrot.lane.b32.xlu0 %v707, 32
      %v1997 = vpop.permute.xlu0 %1996
      %1998 = vrot.lane.b32.xlu0 %v708, 32
      %v1999 = vpop.permute.xlu0 %1998
      %2000 = vrot.lane.b32.xlu0 %v709, 32
      %v2001 = vpop.permute.xlu0 %2000
      %2002 = vrot.lane.b32.xlu0 %v710, 32
      %v2003 = vpop.permute.xlu0 %2002
      %2004 = vrot.lane.b32.xlu0 %v711, 32
      %v2005 = vpop.permute.xlu0 %2004
      %2006 = vrot.lane.b32.xlu0 %v712, 32
      %v2007 = vpop.permute.xlu0 %2006
      %2008 = vrot.lane.b32.xlu0 %v713, 32
      %v2009 = vpop.permute.xlu0 %2008
      %2010 = vrot.lane.b32.xlu0 %v714, 32
      %v2011 = vpop.permute.xlu0 %2010
      %2012 = vrot.lane.b32.xlu0 %v715, 32
      %v2013 = vpop.permute.xlu0 %2012
      %2014 = vrot.lane.b32.xlu0 %v716, 32
      %v2015 = vpop.permute.xlu0 %2014
      %2016 = vrot.lane.b32.xlu0 %v717, 32
      %v2017 = vpop.permute.xlu0 %2016
      %2018 = vrot.lane.b32.xlu0 %v718, 32
      %v2019 = vpop.permute.xlu0 %2018
      %2020 = vrot.lane.b32.xlu0 %v719, 32
      %v2021 = vpop.permute.xlu0 %2020
      %2022 = vrot.lane.b32.xlu0 %v720, 32
      %v2023 = vpop.permute.xlu0 %2022
      %2024 = vrot.lane.b32.xlu0 %v721, 32
      %v2025 = vpop.permute.xlu0 %2024
      %2026 = vrot.lane.b32.xlu0 %v722, 32
      %v2027 = vpop.permute.xlu0 %2026
      %2028 = vrot.lane.b32.xlu0 %v723, 32
      %v2029 = vpop.permute.xlu0 %2028
      %2030 = vrot.lane.b32.xlu0 %v724, 32
      %v2031 = vpop.permute.xlu0 %2030
      %2032 = vrot.lane.b32.xlu0 %v725, 32
      %v2033 = vpop.permute.xlu0 %2032
      %2034 = vrot.lane.b32.xlu0 %v726, 32
      %v2035 = vpop.permute.xlu0 %2034
      %v2081 = vsel %vm347, %v408, %v773
      %v2082 = vsel %vm347, %v409, %v775
      %v2083 = vsel %vm347, %v410, %v777
      %v2084 = vsel %vm347, %v411, %v779
      %v2085 = vsel %vm347, %v412, %v781
      %v2086 = vsel %vm347, %v413, %v783
      %v2087 = vsel %vm347, %v414, %v785
      %v2088 = vsel %vm347, %v415, %v787
      %v2089 = vsel %vm347, %v416, %v789
      %v2090 = vsel %vm347, %v417, %v791
      %v2091 = vsel %vm347, %v418, %v793
      %v2092 = vsel %vm347, %v419, %v795
      %v2093 = vsel %vm347, %v420, %v797
      %v2094 = vsel %vm347, %v421, %v799
      %v2095 = vsel %vm347, %v422, %v801
      %v2096 = vsel %vm347, %v423, %v803
      %v2097 = vsel %vm347, %v424, %v805
      %v2098 = vsel %vm347, %v425, %v807
      %v2099 = vsel %vm347, %v426, %v809
      %v2100 = vsel %vm347, %v427, %v811
      %v2101 = vsel %vm347, %v428, %v813
      %v2102 = vsel %vm347, %v429, %v815
      %v2103 = vsel %vm347, %v430, %v817
      %v2104 = vsel %vm347, %v431, %v819
      %v2105 = vsel %vm347, %v432, %v821
      %v2106 = vsel %vm347, %v433, %v823
      %v2107 = vsel %vm347, %v434, %v825
      %v2108 = vsel %vm347, %v435, %v827
      %v2109 = vsel %vm347, %v436, %v829
      %v2110 = vsel %vm347, %v437, %v831
      %v2111 = vsel %vm347, %v438, %v833
      %v2112 = vsel %vm347, %v439, %v835
      %v2113 = vsel %vm347, %v440, %v837
      %v2114 = vsel %vm347, %v441, %v839
      %v2115 = vsel %vm347, %v442, %v841
      %v2116 = vsel %vm347, %v443, %v843
      %v2117 = vsel %vm347, %v444, %v845
      %v2118 = vsel %vm347, %v445, %v847
      %v2119 = vsel %vm347, %v446, %v849
      %v2120 = vsel %vm347, %v447, %v851
      %v2121 = vsel %vm347, %v448, %v853
      %v2122 = vsel %vm347, %v449, %v855
      %v2123 = vsel %vm347, %v450, %v857
      %v2124 = vsel %vm347, %v451, %v859
      %v2125 = vsel %vm347, %v452, %v861
      %vm2126 = vcmask 64512
      %v2127 = vsel %vm2126, %v2081, %v953
      %v2128 = vsel %vm2126, %v2082, %v955
      %v2129 = vsel %vm2126, %v2083, %v957
      %v2130 = vsel %vm2126, %v2084, %v959
      %v2131 = vsel %vm2126, %v2085, %v961
      %v2132 = vsel %vm2126, %v2086, %v963
      %v2133 = vsel %vm2126, %v2087, %v965
      %v2134 = vsel %vm2126, %v2088, %v967
      %v2135 = vsel %vm2126, %v2089, %v969
      %v2136 = vsel %vm2126, %v2090, %v971
      %v2137 = vsel %vm2126, %v2091, %v973
      %v2138 = vsel %vm2126, %v2092, %v975
      %v2139 = vsel %vm2126, %v2093, %v977
      %v2140 = vsel %vm2126, %v2094, %v979
      %v2141 = vsel %vm2126, %v2095, %v981
      %v2142 = vsel %vm2126, %v2096, %v983
      %v2143 = vsel %vm2126, %v2097, %v985
      %v2144 = vsel %vm2126, %v2098, %v987
      %v2145 = vsel %vm2126, %v2099, %v989
      %v2146 = vsel %vm2126, %v2100, %v991
      %v2147 = vsel %vm2126, %v2101, %v993
      %v2148 = vsel %vm2126, %v2102, %v995
      %v2149 = vsel %vm2126, %v2103, %v997
      %v2150 = vsel %vm2126, %v2104, %v999
      %v2151 = vsel %vm2126, %v2105, %v1001
      %v2152 = vsel %vm2126, %v2106, %v1003
      %v2153 = vsel %vm2126, %v2107, %v1005
      %v2154 = vsel %vm2126, %v2108, %v1007
      %v2155 = vsel %vm2126, %v2109, %v1009
      %v2156 = vsel %vm2126, %v2110, %v1011
      %v2157 = vsel %vm2126, %v2111, %v1013
      %v2158 = vsel %vm2126, %v2112, %v1015
      %v2159 = vsel %vm2126, %v2113, %v1017
      %v2160 = vsel %vm2126, %v2114, %v1019
      %v2161 = vsel %vm2126, %v2115, %v1021
      %v2162 = vsel %vm2126, %v2116, %v1023
      %v2163 = vsel %vm2126, %v2117, %v1025
      %v2164 = vsel %vm2126, %v2118, %v1027
      %v2165 = vsel %vm2126, %v2119, %v1029
      %v2166 = vsel %vm2126, %v2120, %v1031
      %v2167 = vsel %vm2126, %v2121, %v1033
      %v2168 = vsel %vm2126, %v2122, %v1035
      %v2169 = vsel %vm2126, %v2123, %v1037
      %v2170 = vsel %vm2126, %v2124, %v1039
      %v2171 = vsel %vm2126, %v2125, %v1041
      %vm2172 = vcmask 97280
      %v2173 = vsel %vm2172, %v2127, %v1090
      %v2174 = vsel %vm2172, %v2128, %v1092
      %v2175 = vsel %vm2172, %v2129, %v1094
      %v2176 = vsel %vm2172, %v2130, %v1096
      %v2177 = vsel %vm2172, %v2131, %v1098
      %v2178 = vsel %vm2172, %v2132, %v1100
      %v2179 = vsel %vm2172, %v2133, %v1102
      %v2180 = vsel %vm2172, %v2134, %v1104
      %v2181 = vsel %vm2172, %v2135, %v1106
      %v2182 = vsel %vm2172, %v2136, %v1108
      %v2183 = vsel %vm2172, %v2137, %v1110
      %v2184 = vsel %vm2172, %v2138, %v1112
      %v2185 = vsel %vm2172, %v2139, %v1114
      %v2186 = vsel %vm2172, %v2140, %v1116
      %v2187 = vsel %vm2172, %v2141, %v1118
      %v2188 = vsel %vm2172, %v2142, %v1120
      %v2189 = vsel %vm2172, %v2143, %v1122
      %v2190 = vsel %vm2172, %v2144, %v1124
      %v2191 = vsel %vm2172, %v2145, %v1126
      %v2192 = vsel %vm2172, %v2146, %v1128
      %v2193 = vsel %vm2172, %v2147, %v1130
      %v2194 = vsel %vm2172, %v2148, %v1132
      %v2195 = vsel %vm2172, %v2149, %v1134
      %v2196 = vsel %vm2172, %v2150, %v1136
      %v2197 = vsel %vm2172, %v2151, %v1138
      %v2198 = vsel %vm2172, %v2152, %v1140
      %v2199 = vsel %vm2172, %v2153, %v1142
      %v2200 = vsel %vm2172, %v2154, %v1144
      %v2201 = vsel %vm2172, %v2155, %v1146
      %v2202 = vsel %vm2172, %v2156, %v1148
      %v2203 = vsel %vm2172, %v2157, %v1150
      %v2204 = vsel %vm2172, %v2158, %v1152
      %v2205 = vsel %vm2172, %v2159, %v1154
      %v2206 = vsel %vm2172, %v2160, %v1156
      %v2207 = vsel %vm2172, %v2161, %v1158
      %v2208 = vsel %vm2172, %v2162, %v1160
      %v2209 = vsel %vm2172, %v2163, %v1162
      %v2210 = vsel %vm2172, %v2164, %v1164
      %v2211 = vsel %vm2172, %v2165, %v1166
      %v2212 = vsel %vm2172, %v2166, %v1168
      %v2213 = vsel %vm2172, %v2167, %v1170
      %v2214 = vsel %vm2172, %v2168, %v1172
      %v2215 = vsel %vm2172, %v2169, %v1174
      %v2216 = vsel %vm2172, %v2170, %v1176
      %v2217 = vsel %vm2172, %v2171, %v1178
      %vm2218 = vcmask 130048
      %v2219 = vsel %vm2218, %v2173, %v1270
      %v2220 = vsel %vm2218, %v2174, %v1272
      %v2221 = vsel %vm2218, %v2175, %v1274
      %v2222 = vsel %vm2218, %v2176, %v1276
      %v2223 = vsel %vm2218, %v2177, %v1278
      %v2224 = vsel %vm2218, %v2178, %v1280
      %v2225 = vsel %vm2218, %v2179, %v1282
      %v2226 = vsel %vm2218, %v2180, %v1284
      %v2227 = vsel %vm2218, %v2181, %v1286
      %v2228 = vsel %vm2218, %v2182, %v1288
      %v2229 = vsel %vm2218, %v2183, %v1290
      %v2230 = vsel %vm2218, %v2184, %v1292
      %v2231 = vsel %vm2218, %v2185, %v1294
      %v2232 = vsel %vm2218, %v2186, %v1296
      %v2233 = vsel %vm2218, %v2187, %v1298
      %v2234 = vsel %vm2218, %v2188, %v1300
      %v2235 = vsel %vm2218, %v2189, %v1302
      %v2236 = vsel %vm2218, %v2190, %v1304
      %v2237 = vsel %vm2218, %v2191, %v1306
      %v2238 = vsel %vm2218, %v2192, %v1308
      %v2239 = vsel %vm2218, %v2193, %v1310
      %v2240 = vsel %vm2218, %v2194, %v1312
      %v2241 = vsel %vm2218, %v2195, %v1314
      %v2242 = vsel %vm2218, %v2196, %v1316
      %v2243 = vsel %vm2218, %v2197, %v1318
      %v2244 = vsel %vm2218, %v2198, %v1320
      %v2245 = vsel %vm2218, %v2199, %v1322
      %v2246 = vsel %vm2218, %v2200, %v1324
      %v2247 = vsel %vm2218, %v2201, %v1326
      %v2248 = vsel %vm2218, %v2202, %v1328
      %v2249 = vsel %vm2218, %v2203, %v1330
      %v2250 = vsel %vm2218, %v2204, %v1332
      %v2251 = vsel %vm2218, %v2205, %v1334
      %v2252 = vsel %vm2218, %v2206, %v1336
      %v2253 = vsel %vm2218, %v2207, %v1338
      %v2254 = vsel %vm2218, %v2208, %v1340
      %v2255 = vsel %vm2218, %v2209, %v1342
      %v2256 = vsel %vm2218, %v2210, %v1344
      %v2257 = vsel %vm2218, %v2211, %v1346
      %v2258 = vsel %vm2218, %v2212, %v1348
      %v2259 = vsel %vm2218, %v2213, %v1350
      %v2260 = vsel %vm2218, %v2214, %v1352
      %v2261 = vsel %vm2218, %v2215, %v1354
      %v2262 = vsel %vm2218, %v2216, %v1356
      %v2263 = vsel %vm2218, %v2217, %v1358
      %vm2264 = vcmask 162816
      %v2265 = vsel %vm2264, %v2219, %v1450
      %v2266 = vsel %vm2264, %v2220, %v1452
      %v2267 = vsel %vm2264, %v2221, %v1454
      %v2268 = vsel %vm2264, %v2222, %v1456
      %v2269 = vsel %vm2264, %v2223, %v1458
      %v2270 = vsel %vm2264, %v2224, %v1460
      %v2271 = vsel %vm2264, %v2225, %v1462
      %v2272 = vsel %vm2264, %v2226, %v1464
      %v2273 = vsel %vm2264, %v2227, %v1466
      %v2274 = vsel %vm2264, %v2228, %v1468
      %v2275 = vsel %vm2264, %v2229, %v1470
      %v2276 = vsel %vm2264, %v2230, %v1472
      %v2277 = vsel %vm2264, %v2231, %v1474
      %v2278 = vsel %vm2264, %v2232, %v1476
      %v2279 = vsel %vm2264, %v2233, %v1478
      %v2280 = vsel %vm2264, %v2234, %v1480
      %v2281 = vsel %vm2264, %v2235, %v1482
      %v2282 = vsel %vm2264, %v2236, %v1484
      %v2283 = vsel %vm2264, %v2237, %v1486
      %v2284 = vsel %vm2264, %v2238, %v1488
      %v2285 = vsel %vm2264, %v2239, %v1490
      %v2286 = vsel %vm2264, %v2240, %v1492
      %v2287 = vsel %vm2264, %v2241, %v1494
      %v2288 = vsel %vm2264, %v2242, %v1496
      %v2289 = vsel %vm2264, %v2243, %v1498
      %v2290 = vsel %vm2264, %v2244, %v1500
      %v2291 = vsel %vm2264, %v2245, %v1502
      %v2292 = vsel %vm2264, %v2246, %v1504
      %v2293 = vsel %vm2264, %v2247, %v1506
      %v2294 = vsel %vm2264, %v2248, %v1508
      %v2295 = vsel %vm2264, %v2249, %v1510
      %v2296 = vsel %vm2264, %v2250, %v1512
      %v2297 = vsel %vm2264, %v2251, %v1514
      %v2298 = vsel %vm2264, %v2252, %v1516
      %v2299 = vsel %vm2264, %v2253, %v1518
      %v2300 = vsel %vm2264, %v2254, %v1520
      %v2301 = vsel %vm2264, %v2255, %v1522
      %v2302 = vsel %vm2264, %v2256, %v1524
      %v2303 = vsel %vm2264, %v2257, %v1526
      %v2304 = vsel %vm2264, %v2258, %v1528
      %v2305 = vsel %vm2264, %v2259, %v1530
      %v2306 = vsel %vm2264, %v2260, %v1532
      %v2307 = vsel %vm2264, %v2261, %v1534
      %v2308 = vsel %vm2264, %v2262, %v1536
      %v2309 = vsel %vm2264, %v2263, %v1538
      %vm2310 = vcmask 195584
      %v2311 = vsel %vm2310, %v2265, %v1587
      %v2312 = vsel %vm2310, %v2266, %v1589
      %v2313 = vsel %vm2310, %v2267, %v1591
      %v2314 = vsel %vm2310, %v2268, %v1593
      %v2315 = vsel %vm2310, %v2269, %v1595
      %v2316 = vsel %vm2310, %v2270, %v1597
      %v2317 = vsel %vm2310, %v2271, %v1599
      %v2318 = vsel %vm2310, %v2272, %v1601
      %v2319 = vsel %vm2310, %v2273, %v1603
      %v2320 = vsel %vm2310, %v2274, %v1605
      %v2321 = vsel %vm2310, %v2275, %v1607
      %v2322 = vsel %vm2310, %v2276, %v1609
      %v2323 = vsel %vm2310, %v2277, %v1611
      %v2324 = vsel %vm2310, %v2278, %v1613
      %v2325 = vsel %vm2310, %v2279, %v1615
      %v2326 = vsel %vm2310, %v2280, %v1617
      %v2327 = vsel %vm2310, %v2281, %v1619
      %v2328 = vsel %vm2310, %v2282, %v1621
      %v2329 = vsel %vm2310, %v2283, %v1623
      %v2330 = vsel %vm2310, %v2284, %v1625
      %v2331 = vsel %vm2310, %v2285, %v1627
      %v2332 = vsel %vm2310, %v2286, %v1629
      %v2333 = vsel %vm2310, %v2287, %v1631
      %v2334 = vsel %vm2310, %v2288, %v1633
      %v2335 = vsel %vm2310, %v2289, %v1635
      %v2336 = vsel %vm2310, %v2290, %v1637
      %v2337 = vsel %vm2310, %v2291, %v1639
      %v2338 = vsel %vm2310, %v2292, %v1641
      %v2339 = vsel %vm2310, %v2293, %v1643
      %v2340 = vsel %vm2310, %v2294, %v1645
      %v2341 = vsel %vm2310, %v2295, %v1647
      %v2342 = vsel %vm2310, %v2296, %v1649
      %v2343 = vsel %vm2310, %v2297, %v1651
      %v2344 = vsel %vm2310, %v2298, %v1653
      %v2345 = vsel %vm2310, %v2299, %v1655
      %v2346 = vsel %vm2310, %v2300, %v1657
      %v2347 = vsel %vm2310, %v2301, %v1659
      %v2348 = vsel %vm2310, %v2302, %v1661
      %v2349 = vsel %vm2310, %v2303, %v1663
      %v2350 = vsel %vm2310, %v2304, %v1665
      %v2351 = vsel %vm2310, %v2305, %v1667
      %v2352 = vsel %vm2310, %v2306, %v1669
      %v2353 = vsel %vm2310, %v2307, %v1671
      %v2354 = vsel %vm2310, %v2308, %v1673
      %v2355 = vsel %vm2310, %v2309, %v1675
      %vm2356 = vcmask 228352
      %v2357 = vsel %vm2356, %v2311, %v1767
      %v2358 = vsel %vm2356, %v2312, %v1769
      %v2359 = vsel %vm2356, %v2313, %v1771
      %v2360 = vsel %vm2356, %v2314, %v1773
      %v2361 = vsel %vm2356, %v2315, %v1775
      %v2362 = vsel %vm2356, %v2316, %v1777
      %v2363 = vsel %vm2356, %v2317, %v1779
      %v2364 = vsel %vm2356, %v2318, %v1781
      %v2365 = vsel %vm2356, %v2319, %v1783
      %v2366 = vsel %vm2356, %v2320, %v1785
      %v2367 = vsel %vm2356, %v2321, %v1787
      %v2368 = vsel %vm2356, %v2322, %v1789
      %v2369 = vsel %vm2356, %v2323, %v1791
      %v2370 = vsel %vm2356, %v2324, %v1793
      %v2371 = vsel %vm2356, %v2325, %v1795
      %v2372 = vsel %vm2356, %v2326, %v1797
      %v2373 = vsel %vm2356, %v2327, %v1799
      %v2374 = vsel %vm2356, %v2328, %v1801
      %v2375 = vsel %vm2356, %v2329, %v1803
      %v2376 = vsel %vm2356, %v2330, %v1805
      %v2377 = vsel %vm2356, %v2331, %v1807
      %v2378 = vsel %vm2356, %v2332, %v1809
      %v2379 = vsel %vm2356, %v2333, %v1811
      %v2380 = vsel %vm2356, %v2334, %v1813
      %v2381 = vsel %vm2356, %v2335, %v1815
      %v2382 = vsel %vm2356, %v2336, %v1817
      %v2383 = vsel %vm2356, %v2337, %v1819
      %v2384 = vsel %vm2356, %v2338, %v1821
      %v2385 = vsel %vm2356, %v2339, %v1823
      %v2386 = vsel %vm2356, %v2340, %v1825
      %v2387 = vsel %vm2356, %v2341, %v1827
      %v2388 = vsel %vm2356, %v2342, %v1829
      %v2389 = vsel %vm2356, %v2343, %v1831
      %v2390 = vsel %vm2356, %v2344, %v1833
      %v2391 = vsel %vm2356, %v2345, %v1835
      %v2392 = vsel %vm2356, %v2346, %v1837
      %v2393 = vsel %vm2356, %v2347, %v1839
      %v2394 = vsel %vm2356, %v2348, %v1841
      %v2395 = vsel %vm2356, %v2349, %v1843
      %v2396 = vsel %vm2356, %v2350, %v1845
      %v2397 = vsel %vm2356, %v2351, %v1847
      %v2398 = vsel %vm2356, %v2352, %v1849
      %v2399 = vsel %vm2356, %v2353, %v1851
      %v2400 = vsel %vm2356, %v2354, %v1853
      %v2401 = vsel %vm2356, %v2355, %v1855
      %vm2402 = vcmask 261120
      %v2403 = vsel %vm2402, %v2357, %v1947
      %v2404 = vsel %vm2402, %v2358, %v1949
      %v2405 = vsel %vm2402, %v2359, %v1951
      %v2406 = vsel %vm2402, %v2360, %v1953
      %v2407 = vsel %vm2402, %v2361, %v1955
      %v2408 = vsel %vm2402, %v2362, %v1957
      %v2409 = vsel %vm2402, %v2363, %v1959
      %v2410 = vsel %vm2402, %v2364, %v1961
      %v2411 = vsel %vm2402, %v2365, %v1963
      %v2412 = vsel %vm2402, %v2366, %v1965
      %v2413 = vsel %vm2402, %v2367, %v1967
      %v2414 = vsel %vm2402, %v2368, %v1969
      %v2415 = vsel %vm2402, %v2369, %v1971
      %v2416 = vsel %vm2402, %v2370, %v1973
      %v2417 = vsel %vm2402, %v2371, %v1975
      %v2418 = vsel %vm2402, %v2372, %v1977
      %v2419 = vsel %vm2402, %v2373, %v1979
      %v2420 = vsel %vm2402, %v2374, %v1981
      %v2421 = vsel %vm2402, %v2375, %v1983
      %v2422 = vsel %vm2402, %v2376, %v1985
      %v2423 = vsel %vm2402, %v2377, %v1987
      %v2424 = vsel %vm2402, %v2378, %v1989
      %v2425 = vsel %vm2402, %v2379, %v1991
      %v2426 = vsel %vm2402, %v2380, %v1993
      %v2427 = vsel %vm2402, %v2381, %v1995
      %v2428 = vsel %vm2402, %v2382, %v1997
      %v2429 = vsel %vm2402, %v2383, %v1999
      %v2430 = vsel %vm2402, %v2384, %v2001
      %v2431 = vsel %vm2402, %v2385, %v2003
      %v2432 = vsel %vm2402, %v2386, %v2005
      %v2433 = vsel %vm2402, %v2387, %v2007
      %v2434 = vsel %vm2402, %v2388, %v2009
      %v2435 = vsel %vm2402, %v2389, %v2011
      %v2436 = vsel %vm2402, %v2390, %v2013
      %v2437 = vsel %vm2402, %v2391, %v2015
      %v2438 = vsel %vm2402, %v2392, %v2017
      %v2439 = vsel %vm2402, %v2393, %v2019
      %v2440 = vsel %vm2402, %v2394, %v2021
      %v2441 = vsel %vm2402, %v2395, %v2023
      %v2442 = vsel %vm2402, %v2396, %v2025
      %v2443 = vsel %vm2402, %v2397, %v2027
      %v2444 = vsel %vm2402, %v2398, %v2029
      %v2445 = vsel %vm2402, %v2399, %v2031
      %v2446 = vsel %vm2402, %v2400, %v2033
      %v2447 = vsel %vm2402, %v2401, %v2035
      %v2448 = vpack.c.bf16 %v2404, %v2403
      %v2449 = vpack.c.bf16 %v2406, %v2405
      %v2450 = vpack.c.bf16 %v2408, %v2407
      %v2451 = vpack.c.bf16 %v2410, %v2409
      %v2452 = vpack.c.bf16 %v2412, %v2411
      %v2453 = vpack.c.bf16 %v2414, %v2413
      %v2454 = vpack.c.bf16 %v2416, %v2415
      %v2455 = vpack.c.bf16 %v2418, %v2417
      %v2456 = vpack.c.bf16 %v2420, %v2419
      %v2457 = vpack.c.bf16 %v2422, %v2421
      %v2458 = vpack.c.bf16 %v2424, %v2423
      %v2459 = vpack.c.bf16 %v2426, %v2425
      %v2460 = vpack.c.bf16 %v2428, %v2427
      %v2461 = vpack.c.bf16 %v2430, %v2429
      %v2462 = vpack.c.bf16 %v2432, %v2431
      %v2463 = vpack.c.bf16 %v2434, %v2433
      %v2464 = vpack.c.bf16 %v2436, %v2435
      %v2465 = vpack.c.bf16 %v2438, %v2437
      %v2466 = vpack.c.bf16 %v2440, %v2439
      %v2467 = vpack.c.bf16 %v2442, %v2441
      %v2468 = vpack.c.bf16 %v2444, %v2443
      %v2469 = vpack.c.bf16 %v2446, %v2445
      %v2470 = vpack.c.bf16 %v2447, %v2447
      %v2471 = vld [vmem:[%s2] sm:$0xf]
      %v2472 = vld [vmem:[%s2 + $0x4] sm:$0xf]
      %v2473 = vld [vmem:[%s2 + $0x8] sm:$0xf]
      %v2474 = vld [vmem:[%s2 + $0xc] sm:$0xf]
      %v2475 = vld [vmem:[%s2 + $0x10] sm:$0x3]
      %v2481 = vunpack.c.l.b16 %v2471
      %v2482 = vunpack.c.l.b16 %v2472
      %v2483 = vunpack.c.l.b16 %v2473
      %v2484 = vunpack.c.l.b16 %v2474
      %v2485 = vunpack.c.l.b16 %v2475
      %v2486 = vpack.c.b16 %v2482, %v2481
      %v2487 = vpack.c.b16 %v2484, %v2483
      %v2488 = vpack.c.b16 %v2485, %v2485
      %vm2491 = vcmask 293888
      %v2493 = vsel %vm2491, %v2448, 0
      %v2496 = vsel %vm2491, %v2449, 0
      %v2499 = vsel %vm2491, %v2450, 0
      %v2502 = vsel %vm2491, %v2451, 0
      %v2505 = vsel %vm2491, %v2452, 0
      %v2508 = vsel %vm2491, %v2453, 0
      %v2511 = vsel %vm2491, %v2454, 0
      %v2514 = vsel %vm2491, %v2455, 0
      %v2517 = vsel %vm2491, %v2456, 0
      %v2520 = vsel %vm2491, %v2457, 0
      %v2523 = vsel %vm2491, %v2458, 0
      %v2526 = vsel %vm2491, %v2459, 0
      %v2529 = vsel %vm2491, %v2460, 0
      %v2532 = vsel %vm2491, %v2461, 0
      %v2535 = vsel %vm2491, %v2462, 0
      %v2538 = vsel %vm2491, %v2463, 0
      %v2541 = vsel %vm2491, %v2464, 0
      %v2544 = vsel %vm2491, %v2465, 0
      %v2547 = vsel %vm2491, %v2466, 0
      %v2550 = vsel %vm2491, %v2467, 0
      %v2553 = vsel %vm2491, %v2468, 0
      %v2556 = vsel %vm2491, %v2469, 0
      %v2559 = vsel %vm2491, %v2470, 0
      %vm2561 = vcmask 1041408
      %v2563 = vsel %vm2561, %v2488, 0
      %2565 = vmatprep.subr.bf16.mxu0 0
      %2566 = vmatpush1.bf16.msra.mxu0 0
      %2567 = vmatprep.subr.bf16.mxu0 0
      %2568 = vmatpush1.bf16.msra.mxu0 0
      %2569 = vmatprep.subr.bf16.mxu0 0
      %2570 = vmatpush1.bf16.msra.mxu0 0
      %2571 = vmatprep.subr.bf16.mxu0 0
      %2572 = vmatpush1.bf16.msra.mxu0 0
      %2573 = vmatprep.subr.bf16.mxu0 0
      %2574 = vmatpush1.bf16.msra.mxu0 0
      %2575 = vmatprep.subr.bf16.mxu0 0
      %2576 = vmatpush1.bf16.msra.mxu0 %v2563
      %2577 = vmatprep.subr.bf16.mxu0 0
      %2578 = vmatpush1.bf16.msra.mxu0 %v2487
      %2579 = vmatprep.subr.bf16.mxu0 0
      %2580 = vmatpush1.bf16.msra.mxu0 %v2486
      %2581 = vmatprep.subr.bf16.mxu0 0
      %2582 = vmatpush2.bf16.msra.mxu0 0
      %2583 = vmatprep.subr.bf16.mxu0 0
      %2584 = vmatpush2.bf16.msra.mxu0 0
      %2585 = vmatprep.subr.bf16.mxu0 0
      %2586 = vmatpush2.bf16.msra.mxu0 0
      %2587 = vmatprep.subr.bf16.mxu0 0
      %2588 = vmatpush2.bf16.msra.mxu0 0
      %2589 = vmatprep.subr.bf16.mxu0 0
      %2590 = vmatpush2.bf16.msra.mxu0 0
      %2591 = vmatprep.subr.bf16.mxu0 0
      %2592 = vmatpush2.bf16.msra.mxu0 0
      %2593 = vmatprep.subr.bf16.mxu0 0
      %2594 = vmatpush2.bf16.msra.mxu0 0
      %2595 = vmatprep.subr.bf16.mxu0 0
      %2596 = vmatpush2.bf16.msra.mxu0 0
      %2597 = vmatprep.mubr.bf16.mxu0 0
      %2598 = vmatmul.mubr.bf16.gmra.mxu0 %v2493
      %v2599 = vpop.f32.mrf.mxu0
      %v2600 = vadd.f32 0.0, %v2599
      %v2601 = vpop.f32.mrf.mxu0
      %v2602 = vpop.f32.mrf.mxu0
      %v2603 = vadd.f32 0.0, %v2602
      %v2604 = vpop.f32.mrf.mxu0
      %2605 = vmatprep.mubr.bf16.mxu0 0
      %2606 = vmatmul.mubr.bf16.gmra.mxu0 %v2496
      %v2607 = vpop.f32.mrf.mxu0
      %v2608 = vadd.f32 0.0, %v2607
      %v2609 = vpop.f32.mrf.mxu0
      %v2610 = vpop.f32.mrf.mxu0
      %v2611 = vadd.f32 0.0, %v2610
      %v2612 = vpop.f32.mrf.mxu0
      %2613 = vmatprep.mubr.bf16.mxu0 0
      %2614 = vmatmul.mubr.bf16.gmra.mxu0 %v2499
      %v2615 = vpop.f32.mrf.mxu0
      %v2616 = vadd.f32 0.0, %v2615
      %v2617 = vpop.f32.mrf.mxu0
      %v2618 = vpop.f32.mrf.mxu0
      %v2619 = vadd.f32 0.0, %v2618
      %v2620 = vpop.f32.mrf.mxu0
      %2621 = vmatprep.mubr.bf16.mxu0 0
      %2622 = vmatmul.mubr.bf16.gmra.mxu0 %v2502
      %v2623 = vpop.f32.mrf.mxu0
      %v2624 = vadd.f32 0.0, %v2623
      %v2625 = vpop.f32.mrf.mxu0
      %v2626 = vpop.f32.mrf.mxu0
      %v2627 = vadd.f32 0.0, %v2626
      %v2628 = vpop.f32.mrf.mxu0
      %2629 = vmatprep.mubr.bf16.mxu0 0
      %2630 = vmatmul.mubr.bf16.gmra.mxu0 %v2505
      %v2631 = vpop.f32.mrf.mxu0
      %v2632 = vadd.f32 0.0, %v2631
      %v2633 = vpop.f32.mrf.mxu0
      %v2634 = vpop.f32.mrf.mxu0
      %v2635 = vadd.f32 0.0, %v2634
      %v2636 = vpop.f32.mrf.mxu0
      %2637 = vmatprep.mubr.bf16.mxu0 0
      %2638 = vmatmul.mubr.bf16.gmra.mxu0 %v2508
      %v2639 = vpop.f32.mrf.mxu0
      %v2640 = vadd.f32 0.0, %v2639
      %v2641 = vpop.f32.mrf.mxu0
      %v2642 = vpop.f32.mrf.mxu0
      %v2643 = vadd.f32 0.0, %v2642
      %v2644 = vpop.f32.mrf.mxu0
      %2645 = vmatprep.mubr.bf16.mxu0 0
      %2646 = vmatmul.mubr.bf16.gmra.mxu0 %v2511
      %v2647 = vpop.f32.mrf.mxu0
      %v2648 = vadd.f32 0.0, %v2647
      %v2649 = vpop.f32.mrf.mxu0
      %v2650 = vpop.f32.mrf.mxu0
      %v2651 = vadd.f32 0.0, %v2650
      %v2652 = vpop.f32.mrf.mxu0
      %2653 = vmatprep.mubr.bf16.mxu0 0
      %2654 = vmatmul.mubr.bf16.gmra.mxu0 %v2514
      %v2655 = vpop.f32.mrf.mxu0
      %v2656 = vadd.f32 0.0, %v2655
      %v2657 = vpop.f32.mrf.mxu0
      %v2658 = vpop.f32.mrf.mxu0
      %v2659 = vadd.f32 0.0, %v2658
      %v2660 = vpop.f32.mrf.mxu0
      %2661 = vmatprep.mubr.bf16.mxu0 0
      %2662 = vmatmul.mubr.bf16.gmra.mxu0 %v2517
      %v2663 = vpop.f32.mrf.mxu0
      %v2664 = vadd.f32 0.0, %v2663
      %v2665 = vpop.f32.mrf.mxu0
      %v2666 = vpop.f32.mrf.mxu0
      %v2667 = vadd.f32 0.0, %v2666
      %v2668 = vpop.f32.mrf.mxu0
      %2669 = vmatprep.mubr.bf16.mxu0 0
      %2670 = vmatmul.mubr.bf16.gmra.mxu0 %v2520
      %v2671 = vpop.f32.mrf.mxu0
      %v2672 = vadd.f32 0.0, %v2671
      %v2673 = vpop.f32.mrf.mxu0
      %v2674 = vpop.f32.mrf.mxu0
      %v2675 = vadd.f32 0.0, %v2674
      %v2676 = vpop.f32.mrf.mxu0
      %2677 = vmatprep.mubr.bf16.mxu0 0
      %2678 = vmatmul.mubr.bf16.gmra.mxu0 %v2523
      %v2679 = vpop.f32.mrf.mxu0
      %v2680 = vadd.f32 0.0, %v2679
      %v2681 = vpop.f32.mrf.mxu0
      %v2682 = vpop.f32.mrf.mxu0
      %v2683 = vadd.f32 0.0, %v2682
      %v2684 = vpop.f32.mrf.mxu0
      %2685 = vmatprep.mubr.bf16.mxu0 0
      %2686 = vmatmul.mubr.bf16.gmra.mxu0 %v2526
      %v2687 = vpop.f32.mrf.mxu0
      %v2688 = vadd.f32 0.0, %v2687
      %v2689 = vpop.f32.mrf.mxu0
      %v2690 = vpop.f32.mrf.mxu0
      %v2691 = vadd.f32 0.0, %v2690
      %v2692 = vpop.f32.mrf.mxu0
      %2693 = vmatprep.mubr.bf16.mxu0 0
      %2694 = vmatmul.mubr.bf16.gmra.mxu0 %v2529
      %v2695 = vpop.f32.mrf.mxu0
      %v2696 = vadd.f32 0.0, %v2695
      %v2697 = vpop.f32.mrf.mxu0
      %v2698 = vpop.f32.mrf.mxu0
      %v2699 = vadd.f32 0.0, %v2698
      %v2700 = vpop.f32.mrf.mxu0
      %2701 = vmatprep.mubr.bf16.mxu0 0
      %2702 = vmatmul.mubr.bf16.gmra.mxu0 %v2532
      %v2703 = vpop.f32.mrf.mxu0
      %v2704 = vadd.f32 0.0, %v2703
      %v2705 = vpop.f32.mrf.mxu0
      %v2706 = vpop.f32.mrf.mxu0
      %v2707 = vadd.f32 0.0, %v2706
      %v2708 = vpop.f32.mrf.mxu0
      %2709 = vmatprep.mubr.bf16.mxu0 0
      %2710 = vmatmul.mubr.bf16.gmra.mxu0 %v2535
      %v2711 = vpop.f32.mrf.mxu0
      %v2712 = vadd.f32 0.0, %v2711
      %v2713 = vpop.f32.mrf.mxu0
      %v2714 = vpop.f32.mrf.mxu0
      %v2715 = vadd.f32 0.0, %v2714
      %v2716 = vpop.f32.mrf.mxu0
      %2717 = vmatprep.mubr.bf16.mxu0 0
      %2718 = vmatmul.mubr.bf16.gmra.mxu0 %v2538
      %v2719 = vpop.f32.mrf.mxu0
      %v2720 = vadd.f32 0.0, %v2719
      %v2721 = vpop.f32.mrf.mxu0
      %v2722 = vpop.f32.mrf.mxu0
      %v2723 = vadd.f32 0.0, %v2722
      %v2724 = vpop.f32.mrf.mxu0
      %2725 = vmatprep.mubr.bf16.mxu0 0
      %2726 = vmatmul.mubr.bf16.gmra.mxu0 %v2541
      %v2727 = vpop.f32.mrf.mxu0
      %v2728 = vadd.f32 0.0, %v2727
      %v2729 = vpop.f32.mrf.mxu0
      %v2730 = vpop.f32.mrf.mxu0
      %v2731 = vadd.f32 0.0, %v2730
      %v2732 = vpop.f32.mrf.mxu0
      %2733 = vmatprep.mubr.bf16.mxu0 0
      %2734 = vmatmul.mubr.bf16.gmra.mxu0 %v2544
      %v2735 = vpop.f32.mrf.mxu0
      %v2736 = vadd.f32 0.0, %v2735
      %v2737 = vpop.f32.mrf.mxu0
      %v2738 = vpop.f32.mrf.mxu0
      %v2739 = vadd.f32 0.0, %v2738
      %v2740 = vpop.f32.mrf.mxu0
      %2741 = vmatprep.mubr.bf16.mxu0 0
      %2742 = vmatmul.mubr.bf16.gmra.mxu0 %v2547
      %v2743 = vpop.f32.mrf.mxu0
      %v2744 = vadd.f32 0.0, %v2743
      %v2745 = vpop.f32.mrf.mxu0
      %v2746 = vpop.f32.mrf.mxu0
      %v2747 = vadd.f32 0.0, %v2746
      %v2748 = vpop.f32.mrf.mxu0
      %2749 = vmatprep.mubr.bf16.mxu0 0
      %2750 = vmatmul.mubr.bf16.gmra.mxu0 %v2550
      %v2751 = vpop.f32.mrf.mxu0
      %v2752 = vadd.f32 0.0, %v2751
      %v2753 = vpop.f32.mrf.mxu0
      %v2754 = vpop.f32.mrf.mxu0
      %v2755 = vadd.f32 0.0, %v2754
      %v2756 = vpop.f32.mrf.mxu0
      %2757 = vmatprep.mubr.bf16.mxu0 0
      %2758 = vmatmul.mubr.bf16.gmra.mxu0 %v2553
      %v2759 = vpop.f32.mrf.mxu0
      %v2760 = vadd.f32 0.0, %v2759
      %v2761 = vpop.f32.mrf.mxu0
      %v2762 = vpop.f32.mrf.mxu0
      %v2763 = vadd.f32 0.0, %v2762
      %v2764 = vpop.f32.mrf.mxu0
      %2765 = vmatprep.mubr.bf16.mxu0 0
      %2766 = vmatmul.mubr.bf16.gmra.mxu0 %v2556
      %v2767 = vpop.f32.mrf.mxu0
      %v2768 = vadd.f32 0.0, %v2767
      %v2769 = vpop.f32.mrf.mxu0
      %v2770 = vpop.f32.mrf.mxu0
      %v2771 = vadd.f32 0.0, %v2770
      %v2772 = vpop.f32.mrf.mxu0
      %2773 = vmatprep.mubr.bf16.mxu0 0
      %2774 = vmatmul.mubr.bf16.gmra.mxu0 %v2559
      %v2775 = vpop.f32.mrf.mxu0
      %v2776 = vadd.f32 0.0, %v2775
      %v2777 = vpop.f32.mrf.mxu0
      %v2778 = vpop.f32.mrf.mxu0
      %v2779 = vpop.f32.mrf.mxu0
      %2780 = vdwg.mxu0
      %v2781 = vld [vmem:[%s250] sm:$0xff]
      %v2782 = vld [vmem:[%s250 + $0x8] sm:$0xff]
      %v2783 = vld [vmem:[%s250 + $0x10] sm:$0xff]
      %v2784 = vld [vmem:[%s250 + $0x18] sm:$0xff]
      %v2785 = vld [vmem:[%s250 + $0x20] sm:$0xff]
      %v2786 = vld [vmem:[%s250 + $0x28] sm:$0xff]
      %v2787 = vld [vmem:[%s250 + $0x30] sm:$0xff]
      %v2788 = vld [vmem:[%s250 + $0x38] sm:$0xff]
      %v2789 = vld [vmem:[%s250 + $0x40] sm:$0xff]
      %v2790 = vld [vmem:[%s250 + $0x48] sm:$0xff]
      %v2791 = vld [vmem:[%s250 + $0x50] sm:$0xff]
      %v2792 = vld [vmem:[%s250 + $0x58] sm:$0xff]
      %v2793 = vld [vmem:[%s250 + $0x60] sm:$0xff]
      %v2794 = vld [vmem:[%s250 + $0x68] sm:$0xff]
      %v2795 = vld [vmem:[%s250 + $0x70] sm:$0xff]
      %v2796 = vld [vmem:[%s250 + $0x78] sm:$0xff]
      %v2797 = vld [vmem:[%s250 + $0x80] sm:$0xff]
      %v2798 = vld [vmem:[%s250 + $0x88] sm:$0xff]
      %v2799 = vld [vmem:[%s250 + $0x90] sm:$0xff]
      %v2800 = vld [vmem:[%s250 + $0x98] sm:$0xff]
      %v2801 = vld [vmem:[%s250 + $0xa0] sm:$0xff]
      %v2802 = vld [vmem:[%s250 + $0xa8] sm:$0xff]
      %v2803 = vld [vmem:[%s250 + $0xb0] sm:$0xff]
      %v2804 = vld [vmem:[%s250 + $0xb8] sm:$0xff]
      %v2805 = vld [vmem:[%s250 + $0xc0] sm:$0xff]
      %v2806 = vld [vmem:[%s250 + $0xc8] sm:$0xff]
      %v2807 = vld [vmem:[%s250 + $0xd0] sm:$0xff]
      %v2808 = vld [vmem:[%s250 + $0xd8] sm:$0xff]
      %v2809 = vld [vmem:[%s250 + $0xe0] sm:$0xff]
      %v2810 = vld [vmem:[%s250 + $0xe8] sm:$0xff]
      %v2811 = vld [vmem:[%s250 + $0xf0] sm:$0xff]
      %v2812 = vld [vmem:[%s250 + $0xf8] sm:$0xff]
      %v2813 = vld [vmem:[%s250 + $0x100] sm:$0xff]
      %v2814 = vld [vmem:[%s250 + $0x108] sm:$0xff]
      %v2815 = vld [vmem:[%s250 + $0x110] sm:$0xff]
      %v2816 = vld [vmem:[%s250 + $0x118] sm:$0xff]
      %v2817 = vld [vmem:[%s250 + $0x120] sm:$0xff]
      %v2818 = vld [vmem:[%s250 + $0x128] sm:$0xff]
      %v2819 = vld [vmem:[%s250 + $0x130] sm:$0xff]
      %v2820 = vld [vmem:[%s250 + $0x138] sm:$0xff]
      %v2821 = vld [vmem:[%s250 + $0x140] sm:$0xff]
      %v2822 = vld [vmem:[%s250 + $0x148] sm:$0xff]
      %v2823 = vld [vmem:[%s250 + $0x150] sm:$0xff]
      %v2824 = vld [vmem:[%s250 + $0x158] sm:$0xff]
      %v2825 = vld [vmem:[%s250 + $0x160] sm:$0xff]
      %2827 = vset.pattern.permute.xlu0 0
      %2828 = vperm.xlu0 %2827, %v2781
      %v2829 = vpop.permute.xlu0 %2828
      %2832 = vset.pattern.permute.xlu0 0
      %2833 = vperm.xlu0 %2832, %v2782
      %v2834 = vpop.permute.xlu0 %2833
      %2837 = vset.pattern.permute.xlu0 0
      %2838 = vperm.xlu0 %2837, %v2783
      %v2839 = vpop.permute.xlu0 %2838
      %2842 = vset.pattern.permute.xlu0 0
      %2843 = vperm.xlu0 %2842, %v2784
      %v2844 = vpop.permute.xlu0 %2843
      %2847 = vset.pattern.permute.xlu0 0
      %2848 = vperm.xlu0 %2847, %v2785
      %v2849 = vpop.permute.xlu0 %2848
      %2852 = vset.pattern.permute.xlu0 0
      %2853 = vperm.xlu0 %2852, %v2786
      %v2854 = vpop.permute.xlu0 %2853
      %2857 = vset.pattern.permute.xlu0 0
      %2858 = vperm.xlu0 %2857, %v2787
      %v2859 = vpop.permute.xlu0 %2858
      %2862 = vset.pattern.permute.xlu0 0
      %2863 = vperm.xlu0 %2862, %v2788
      %v2864 = vpop.permute.xlu0 %2863
      %2867 = vset.pattern.permute.xlu0 0
      %2868 = vperm.xlu0 %2867, %v2789
      %v2869 = vpop.permute.xlu0 %2868
      %2872 = vset.pattern.permute.xlu0 0
      %2873 = vperm.xlu0 %2872, %v2790
      %v2874 = vpop.permute.xlu0 %2873
      %2877 = vset.pattern.permute.xlu0 0
      %2878 = vperm.xlu0 %2877, %v2791
      %v2879 = vpop.permute.xlu0 %2878
      %2882 = vset.pattern.permute.xlu0 0
      %2883 = vperm.xlu0 %2882, %v2792
      %v2884 = vpop.permute.xlu0 %2883
      %2887 = vset.pattern.permute.xlu0 0
      %2888 = vperm.xlu0 %2887, %v2793
      %v2889 = vpop.permute.xlu0 %2888
      %2892 = vset.pattern.permute.xlu0 0
      %2893 = vperm.xlu0 %2892, %v2794
      %v2894 = vpop.permute.xlu0 %2893
      %2897 = vset.pattern.permute.xlu0 0
      %2898 = vperm.xlu0 %2897, %v2795
      %v2899 = vpop.permute.xlu0 %2898
      %2902 = vset.pattern.permute.xlu0 0
      %2903 = vperm.xlu0 %2902, %v2796
      %v2904 = vpop.permute.xlu0 %2903
      %2907 = vset.pattern.permute.xlu0 0
      %2908 = vperm.xlu0 %2907, %v2797
      %v2909 = vpop.permute.xlu0 %2908
      %2912 = vset.pattern.permute.xlu0 0
      %2913 = vperm.xlu0 %2912, %v2798
      %v2914 = vpop.permute.xlu0 %2913
      %2917 = vset.pattern.permute.xlu0 0
      %2918 = vperm.xlu0 %2917, %v2799
      %v2919 = vpop.permute.xlu0 %2918
      %2922 = vset.pattern.permute.xlu0 0
      %2923 = vperm.xlu0 %2922, %v2800
      %v2924 = vpop.permute.xlu0 %2923
      %2927 = vset.pattern.permute.xlu0 0
      %2928 = vperm.xlu0 %2927, %v2801
      %v2929 = vpop.permute.xlu0 %2928
      %2932 = vset.pattern.permute.xlu0 0
      %2933 = vperm.xlu0 %2932, %v2802
      %v2934 = vpop.permute.xlu0 %2933
      %2937 = vset.pattern.permute.xlu0 0
      %2938 = vperm.xlu0 %2937, %v2803
      %v2939 = vpop.permute.xlu0 %2938
      %2942 = vset.pattern.permute.xlu0 0
      %2943 = vperm.xlu0 %2942, %v2804
      %v2944 = vpop.permute.xlu0 %2943
      %2947 = vset.pattern.permute.xlu0 0
      %2948 = vperm.xlu0 %2947, %v2805
      %v2949 = vpop.permute.xlu0 %2948
      %2952 = vset.pattern.permute.xlu0 0
      %2953 = vperm.xlu0 %2952, %v2806
      %v2954 = vpop.permute.xlu0 %2953
      %2957 = vset.pattern.permute.xlu0 0
      %2958 = vperm.xlu0 %2957, %v2807
      %v2959 = vpop.permute.xlu0 %2958
      %2962 = vset.pattern.permute.xlu0 0
      %2963 = vperm.xlu0 %2962, %v2808
      %v2964 = vpop.permute.xlu0 %2963
      %2967 = vset.pattern.permute.xlu0 0
      %2968 = vperm.xlu0 %2967, %v2809
      %v2969 = vpop.permute.xlu0 %2968
      %2972 = vset.pattern.permute.xlu0 0
      %2973 = vperm.xlu0 %2972, %v2810
      %v2974 = vpop.permute.xlu0 %2973
      %2977 = vset.pattern.permute.xlu0 0
      %2978 = vperm.xlu0 %2977, %v2811
      %v2979 = vpop.permute.xlu0 %2978
      %2982 = vset.pattern.permute.xlu0 0
      %2983 = vperm.xlu0 %2982, %v2812
      %v2984 = vpop.permute.xlu0 %2983
      %2987 = vset.pattern.permute.xlu0 0
      %2988 = vperm.xlu0 %2987, %v2813
      %v2989 = vpop.permute.xlu0 %2988
      %2992 = vset.pattern.permute.xlu0 0
      %2993 = vperm.xlu0 %2992, %v2814
      %v2994 = vpop.permute.xlu0 %2993
      %2997 = vset.pattern.permute.xlu0 0
      %2998 = vperm.xlu0 %2997, %v2815
      %v2999 = vpop.permute.xlu0 %2998
      %3002 = vset.pattern.permute.xlu0 0
      %3003 = vperm.xlu0 %3002, %v2816
      %v3004 = vpop.permute.xlu0 %3003
      %3007 = vset.pattern.permute.xlu0 0
      %3008 = vperm.xlu0 %3007, %v2817
      %v3009 = vpop.permute.xlu0 %3008
      %3012 = vset.pattern.permute.xlu0 0
      %3013 = vperm.xlu0 %3012, %v2818
      %v3014 = vpop.permute.xlu0 %3013
      %3017 = vset.pattern.permute.xlu0 0
      %3018 = vperm.xlu0 %3017, %v2819
      %v3019 = vpop.permute.xlu0 %3018
      %3022 = vset.pattern.permute.xlu0 0
      %3023 = vperm.xlu0 %3022, %v2820
      %v3024 = vpop.permute.xlu0 %3023
      %3027 = vset.pattern.permute.xlu0 0
      %3028 = vperm.xlu0 %3027, %v2821
      %v3029 = vpop.permute.xlu0 %3028
      %3032 = vset.pattern.permute.xlu0 0
      %3033 = vperm.xlu0 %3032, %v2822
      %v3034 = vpop.permute.xlu0 %3033
      %3037 = vset.pattern.permute.xlu0 0
      %3038 = vperm.xlu0 %3037, %v2823
      %v3039 = vpop.permute.xlu0 %3038
      %3042 = vset.pattern.permute.xlu0 0
      %3043 = vperm.xlu0 %3042, %v2824
      %v3044 = vpop.permute.xlu0 %3043
      %3047 = vset.pattern.permute.xlu0 0
      %3048 = vperm.xlu0 %3047, %v2825
      %v3049 = vpop.permute.xlu0 %3048
      %v3051 = vmul.f32 %v2600, %v2829
      %v3052 = vmul.f32 %v2603, %v2834
      %v3053 = vmul.f32 %v2608, %v2839
      %v3054 = vmul.f32 %v2611, %v2844
      %v3055 = vmul.f32 %v2616, %v2849
      %v3056 = vmul.f32 %v2619, %v2854
      %v3057 = vmul.f32 %v2624, %v2859
      %v3058 = vmul.f32 %v2627, %v2864
      %v3059 = vmul.f32 %v2632, %v2869
      %v3060 = vmul.f32 %v2635, %v2874
      %v3061 = vmul.f32 %v2640, %v2879
      %v3062 = vmul.f32 %v2643, %v2884
      %v3063 = vmul.f32 %v2648, %v2889
      %v3064 = vmul.f32 %v2651, %v2894
      %v3065 = vmul.f32 %v2656, %v2899
      %v3066 = vmul.f32 %v2659, %v2904
      %v3067 = vmul.f32 %v2664, %v2909
      %v3068 = vmul.f32 %v2667, %v2914
      %v3069 = vmul.f32 %v2672, %v2919
      %v3070 = vmul.f32 %v2675, %v2924
      %v3071 = vmul.f32 %v2680, %v2929
      %v3072 = vmul.f32 %v2683, %v2934
      %v3073 = vmul.f32 %v2688, %v2939
      %v3074 = vmul.f32 %v2691, %v2944
      %v3075 = vmul.f32 %v2696, %v2949
      %v3076 = vmul.f32 %v2699, %v2954
      %v3077 = vmul.f32 %v2704, %v2959
      %v3078 = vmul.f32 %v2707, %v2964
      %v3079 = vmul.f32 %v2712, %v2969
      %v3080 = vmul.f32 %v2715, %v2974
      %v3081 = vmul.f32 %v2720, %v2979
      %v3082 = vmul.f32 %v2723, %v2984
      %v3083 = vmul.f32 %v2728, %v2989
      %v3084 = vmul.f32 %v2731, %v2994
      %v3085 = vmul.f32 %v2736, %v2999
      %v3086 = vmul.f32 %v2739, %v3004
      %v3087 = vmul.f32 %v2744, %v3009
      %v3088 = vmul.f32 %v2747, %v3014
      %v3089 = vmul.f32 %v2752, %v3019
      %v3090 = vmul.f32 %v2755, %v3024
      %v3091 = vmul.f32 %v2760, %v3029
      %v3092 = vmul.f32 %v2763, %v3034
      %v3093 = vmul.f32 %v2768, %v3039
      %v3094 = vmul.f32 %v2771, %v3044
      %v3095 = vmul.f32 %v2776, %v3049
      %v3096 = vadd.f32 %v3051, %v3052
      %v3097 = vadd.f32 %v3096, %v3053
      %v3098 = vadd.f32 %v3097, %v3054
      %v3099 = vadd.f32 %v3098, %v3055
      %v3100 = vadd.f32 %v3099, %v3056
      %v3101 = vadd.f32 %v3100, %v3057
      %v3102 = vadd.f32 %v3101, %v3058
      %v3103 = vadd.f32 %v3102, %v3059
      %v3104 = vadd.f32 %v3103, %v3060
      %v3105 = vadd.f32 %v3104, %v3061
      %v3106 = vadd.f32 %v3105, %v3062
      %v3107 = vadd.f32 %v3106, %v3063
      %v3108 = vadd.f32 %v3107, %v3064
      %v3109 = vadd.f32 %v3108, %v3065
      %v3110 = vadd.f32 %v3109, %v3066
      %v3111 = vadd.f32 %v3110, %v3067
      %v3112 = vadd.f32 %v3111, %v3068
      %v3113 = vadd.f32 %v3112, %v3069
      %v3114 = vadd.f32 %v3113, %v3070
      %v3115 = vadd.f32 %v3114, %v3071
      %v3116 = vadd.f32 %v3115, %v3072
      %v3117 = vadd.f32 %v3116, %v3073
      %v3118 = vadd.f32 %v3117, %v3074
      %v3119 = vadd.f32 %v3118, %v3075
      %v3120 = vadd.f32 %v3119, %v3076
      %v3121 = vadd.f32 %v3120, %v3077
      %v3122 = vadd.f32 %v3121, %v3078
      %v3123 = vadd.f32 %v3122, %v3079
      %v3124 = vadd.f32 %v3123, %v3080
      %v3125 = vadd.f32 %v3124, %v3081
      %v3126 = vadd.f32 %v3125, %v3082
      %v3127 = vadd.f32 %v3126, %v3083
      %v3128 = vadd.f32 %v3127, %v3084
      %v3129 = vadd.f32 %v3128, %v3085
      %v3130 = vadd.f32 %v3129, %v3086
      %v3131 = vadd.f32 %v3130, %v3087
      %v3132 = vadd.f32 %v3131, %v3088
      %v3133 = vadd.f32 %v3132, %v3089
      %v3134 = vadd.f32 %v3133, %v3090
      %v3135 = vadd.f32 %v3134, %v3091
      %v3136 = vadd.f32 %v3135, %v3092
      %v3137 = vadd.f32 %v3136, %v3093
      %v3138 = vadd.f32 %v3137, %v3094
      %v3139 = vadd.f32 %v3138, %v3095
      %v3140 = vrot.slane %v3139, 4
      %v3141 = vadd.f32 %v3139, %v3140
      %v3142 = vrot.slane %v3141, 2
      %v3143 = vadd.f32 %v3141, %v3142
      %v3144 = vrot.slane %v3143, 1
      %v3145 = vadd.f32 %v3143, %v3144
      %v3146 = vmul.f32 %v3051, %v2600
      %v3147 = vmul.f32 %v3052, %v2603
      %v3148 = vmul.f32 %v3053, %v2608
      %v3149 = vmul.f32 %v3054, %v2611
      %v3150 = vmul.f32 %v3055, %v2616
      %v3151 = vmul.f32 %v3056, %v2619
      %v3152 = vmul.f32 %v3057, %v2624
      %v3153 = vmul.f32 %v3058, %v2627
      %v3154 = vmul.f32 %v3059, %v2632
      %v3155 = vmul.f32 %v3060, %v2635
      %v3156 = vmul.f32 %v3061, %v2640
      %v3157 = vmul.f32 %v3062, %v2643
      %v3158 = vmul.f32 %v3063, %v2648
      %v3159 = vmul.f32 %v3064, %v2651
      %v3160 = vmul.f32 %v3065, %v2656
      %v3161 = vmul.f32 %v3066, %v2659
      %v3162 = vmul.f32 %v3067, %v2664
      %v3163 = vmul.f32 %v3068, %v2667
      %v3164 = vmul.f32 %v3069, %v2672
      %v3165 = vmul.f32 %v3070, %v2675
      %v3166 = vmul.f32 %v3071, %v2680
      %v3167 = vmul.f32 %v3072, %v2683
      %v3168 = vmul.f32 %v3073, %v2688
      %v3169 = vmul.f32 %v3074, %v2691
      %v3170 = vmul.f32 %v3075, %v2696
      %v3171 = vmul.f32 %v3076, %v2699
      %v3172 = vmul.f32 %v3077, %v2704
      %v3173 = vmul.f32 %v3078, %v2707
      %v3174 = vmul.f32 %v3079, %v2712
      %v3175 = vmul.f32 %v3080, %v2715
      %v3176 = vmul.f32 %v3081, %v2720
      %v3177 = vmul.f32 %v3082, %v2723
      %v3178 = vmul.f32 %v3083, %v2728
      %v3179 = vmul.f32 %v3084, %v2731
      %v3180 = vmul.f32 %v3085, %v2736
      %v3181 = vmul.f32 %v3086, %v2739
      %v3182 = vmul.f32 %v3087, %v2744
      %v3183 = vmul.f32 %v3088, %v2747
      %v3184 = vmul.f32 %v3089, %v2752
      %v3185 = vmul.f32 %v3090, %v2755
      %v3186 = vmul.f32 %v3091, %v2760
      %v3187 = vmul.f32 %v3092, %v2763
      %v3188 = vmul.f32 %v3093, %v2768
      %v3189 = vmul.f32 %v3094, %v2771
      %v3190 = vmul.f32 %v3095, %v2776
      %v3191 = vadd.f32 %v3146, %v3147
      %v3192 = vadd.f32 %v3191, %v3148
      %v3193 = vadd.f32 %v3192, %v3149
      %v3194 = vadd.f32 %v3193, %v3150
      %v3195 = vadd.f32 %v3194, %v3151
      %v3196 = vadd.f32 %v3195, %v3152
      %v3197 = vadd.f32 %v3196, %v3153
      %v3198 = vadd.f32 %v3197, %v3154
      %v3199 = vadd.f32 %v3198, %v3155
      %v3200 = vadd.f32 %v3199, %v3156
      %v3201 = vadd.f32 %v3200, %v3157
      %v3202 = vadd.f32 %v3201, %v3158
      %v3203 = vadd.f32 %v3202, %v3159
      %v3204 = vadd.f32 %v3203, %v3160
      %v3205 = vadd.f32 %v3204, %v3161
      %v3206 = vadd.f32 %v3205, %v3162
      %v3207 = vadd.f32 %v3206, %v3163
      %v3208 = vadd.f32 %v3207, %v3164
      %v3209 = vadd.f32 %v3208, %v3165
      %v3210 = vadd.f32 %v3209, %v3166
      %v3211 = vadd.f32 %v3210, %v3167
      %v3212 = vadd.f32 %v3211, %v3168
      %v3213 = vadd.f32 %v3212, %v3169
      %v3214 = vadd.f32 %v3213, %v3170
      %v3215 = vadd.f32 %v3214, %v3171
      %v3216 = vadd.f32 %v3215, %v3172
      %v3217 = vadd.f32 %v3216, %v3173
      %v3218 = vadd.f32 %v3217, %v3174
      %v3219 = vadd.f32 %v3218, %v3175
      %v3220 = vadd.f32 %v3219, %v3176
      %v3221 = vadd.f32 %v3220, %v3177
      %v3222 = vadd.f32 %v3221, %v3178
      %v3223 = vadd.f32 %v3222, %v3179
      %v3224 = vadd.f32 %v3223, %v3180
      %v3225 = vadd.f32 %v3224, %v3181
      %v3226 = vadd.f32 %v3225, %v3182
      %v3227 = vadd.f32 %v3226, %v3183
      %v3228 = vadd.f32 %v3227, %v3184
      %v3229 = vadd.f32 %v3228, %v3185
      %v3230 = vadd.f32 %v3229, %v3186
      %v3231 = vadd.f32 %v3230, %v3187
      %v3232 = vadd.f32 %v3231, %v3188
      %v3233 = vadd.f32 %v3232, %v3189
      %v3234 = vadd.f32 %v3233, %v3190
      %v3235 = vrot.slane %v3234, 4
      %v3236 = vadd.f32 %v3234, %v3235
      %v3237 = vrot.slane %v3236, 2
      %v3238 = vadd.f32 %v3236, %v3237
      %v3239 = vrot.slane %v3238, 1
      %v3240 = vadd.f32 %v3238, %v3239
      %vm3241 = vcmask 1040384
      %v3242 = vsel %vm3241, %v3145, %v3240
      %3243 = vst [vmem:[%s255] sm:$0x3] %v3242
      %p3244 = scmp.lt.s32.totalorder %s15, 1
      %s3245 = scalar_select %p3244, %s15, 1
      %s3246 = smul.addr %s3245, 2
      %s3247 = scalar_lea.vmem %s4, %s3246
      // Predicated region
      $region37: #{conv_block_forward.2} parent=35 // pred_check
        %p3248 = pneg %p136
      $region38: #{conv_block_forward.2} parent=35 // pred_check_branch
        %3250 = sbr.rel (%p3248) target = $region40
      $region39: #{conv_block_forward.2} parent=35 // pred_region
        _
      $region40: #{conv_block_forward.2} parent=35 // pred_fallthru
        _
    $region36: #{conv_block_forward.2} parent=5 // pred_fallthru
      _
    %p3251 = scmp.le.s32.totalorder 2, %s10
    // Predicated region
    $region41: #{conv_block_forward.2} parent=5 // pred_check
      %p3252 = pneg %p3251
    $region42: #{conv_block_forward.2} parent=5 // pred_check_branch
      %3254 = sbr.rel (%p3252) target = $region44
    $region43: #{conv_block_forward.2} parent=5 // pred_region
      %s3255 = ssub.s32 %s10, 2
      // Predicated region
      $region45: #{conv_block_forward.2} parent=43 // pred_check
        %p3256 = pneg %p142
      $region46: #{conv_block_forward.2} parent=43 // pred_check_branch
        %3258 = sbr.rel (%p3256) target = $region48
      $region47: #{conv_block_forward.2} parent=43 // pred_region
        %p3259 = scmp.lt.s32.totalorder %s16, 1
        %s3260 = scalar_select %p3259, %s16, 1
        %s3261 = smul.addr %s3260, 2
        %s3262 = scalar_lea.vmem %s4, %s3261
      $region48: #{conv_block_forward.2} parent=43 // pred_fallthru
        _
    $region44: #{conv_block_forward.2} parent=5 // pred_fallthru
      _
  $region6: #{conv_block_forward.2} parent=0 // loop_footer
    %s14 = sadd.s32 1, %s10
  $region7: #{conv_block_forward.2} parent=0 // loop_footer_branch
    %9 = sbr.rel target = $region3
  $region8: #{conv_block_forward.2} parent=0 // loop_exit
    _

</llo_original>
